<compile_context>
chip_gen: v6e
topology: v6e:2x2x1
jax: 0.10.0
libtpu: 0.0.40
codegen_flags: <defaults>
</compile_context>

<pallas_src>
import functools

import jax
import jax.numpy as jnp
from jax import lax
from jax.experimental import pallas as pl
from jax.experimental.pallas import tpu as pltpu

BN_EPS = 1e-5

# Set to jnp.bfloat16 on v6e/v7x for peak MXU throughput at realistic sizes (the f32
# accumulator, bias, sigmoid and pooling math stay in f32 either way).  Left at f32
# here so the strict 1e-4 correctness check against the f32 reference holds.
MXU_DTYPE = jnp.float32


def _mxu_dot(a, b):
    return jnp.dot(a.astype(MXU_DTYPE), b.astype(MXU_DTYPE),
                   preferred_element_type=jnp.float32)


# -----------------------------------------------------------------------------------
# Fused Conv1d (+ folded BN) + Sigmoid + optional MaxPool1d(2), on register values
# -----------------------------------------------------------------------------------
def _fused_conv_bn_act_pool(x, w_ref, b_ref, *, k, act, pool):
    """x: (Cin, L) f32 value (channels on sublanes, length on lanes).
    w_ref: (K, Cout, Cin) folded weight.  b_ref: (Cout, 1) folded bias.
    Returns (Cout, L//2 if pool else L) f32 value."""
    l = x.shape[1]
    pad = (k - 1) // 2

    # 0/1 shift matrices realize the "same" zero-padding exactly (no pad scratch,
    # no unaligned stores).  src/dst are length indices.
    src = lax.broadcasted_iota(jnp.int32, (l, l), 0)
    dst = lax.broadcasted_iota(jnp.int32, (l, l), 1)

    acc = None
    for j in range(k):                          # K is small and static
        d = j - pad
        z = _mxu_dot(w_ref[j], x)               # (Cout, L)  tap contribution, unshifted
        if d != 0:
            # (z @ R_d)[co, i] = z[co, i + d], zero when i + d is out of range.
            shift = (src == dst + d).astype(jnp.float32)
            z = _mxu_dot(z, shift)
        acc = z if acc is None else acc + z

    y = acc + b_ref[...].astype(jnp.float32)    # bias + folded BN shift (broadcast on L)
    if act:
        # Sigmoid: exp on the EUP + reciprocal (exact) instead of a VPU divide.
        y = pl.reciprocal(1.0 + jnp.exp(-y), approx=False)

    if pool:
        # MaxPool1d(2) over the lane (length) axis via two exact 0/1 selection matmuls.
        half = l // 2
        psrc = lax.broadcasted_iota(jnp.int32, (l, half), 0)
        pdst = lax.broadcasted_iota(jnp.int32, (l, half), 1)
        even = _mxu_dot(y, (psrc == 2 * pdst).astype(jnp.float32))
        odd = _mxu_dot(y, (psrc == 2 * pdst + 1).astype(jnp.float32))
        y = jnp.maximum(even, odd)
    return y


def _encoder_kernel(x_ref, *refs, metas):
    """Whole ConvEncoder forward for one batch element, resident in VMEM."""
    o_ref = refs[-1]
    param_refs = refs[:-1]
    x = x_ref[...].astype(jnp.float32)          # (Cin, L)
    p = 0
    for (k, act, pool) in metas:
        x = _fused_conv_bn_act_pool(x, param_refs[p], param_refs[p + 1],
                                    k=k, act=act, pool=pool)
        p += 2
    o_ref[...] = x.astype(o_ref.dtype)


def conv_encoder_forward(x_bcl, packed_layers):
    """x_bcl: (B, C_in, L) PyTorch layout -> (B, C_out, L_out).  One pallas_call."""
    batch, c_in, length = x_bcl.shape

    metas, params = [], []
    in_specs = [pl.BlockSpec((None, c_in, length), lambda b: (b, 0, 0))]
    c_cur, l_cur = c_in, length
    for layer in packed_layers:
        w, bias = layer["w"], layer["b"]         # (K, Cout, Cin), (Cout, 1)
        assert w.shape[2] == c_cur
        if layer["pool"]:
            assert l_cur % 2 == 0, "MaxPool1d(2) needs an even length"
        metas.append((layer["k"], layer["act"], layer["pool"]))
        params += [w, bias]
        in_specs += [pl.BlockSpec(w.shape, lambda b: (0, 0, 0)),
                     pl.BlockSpec(bias.shape, lambda b: (0, 0))]
        c_cur = w.shape[1]
        l_cur = l_cur // 2 if layer["pool"] else l_cur

    kernel = functools.partial(_encoder_kernel, metas=tuple(metas))
    return pl.pallas_call(
        kernel,
        out_shape=jax.ShapeDtypeStruct((batch, c_cur, l_cur), x_bcl.dtype),
        grid=(batch,),
        in_specs=in_specs,
        out_specs=pl.BlockSpec((None, c_cur, l_cur), lambda b: (b, 0, 0)),
        compiler_params=pltpu.CompilerParams(
            dimension_semantics=("parallel",),   # v7x: one TensorCore per batch element
        ),
    )(x_bcl, *params)


# -----------------------------------------------------------------------------------
# Parameter construction (mirrors NConv / Down / ConvEncoder) and BN folding
# -----------------------------------------------------------------------------------
def _init_conv1d(key, c_in, c_out, k):
    kw, kb = jax.random.split(key)
    bound = 1.0 / ((c_in * k) ** 0.5)
    w = jax.random.uniform(kw, (c_out, c_in, k), minval=-bound, maxval=bound,
                           dtype=jnp.float32)
    b = jax.random.uniform(kb, (c_out,), minval=-bound, maxval=bound,
                           dtype=jnp.float32)
    return w, b


def _init_bn(key, c):
    k1, k2, k3, k4 = jax.random.split(key, 4)
    gamma = jax.random.uniform(k1, (c,), minval=0.5, maxval=1.5, dtype=jnp.float32)
    beta = 0.1 * jax.random.normal(k2, (c,), dtype=jnp.float32)
    mean = 0.1 * jax.random.normal(k3, (c,), dtype=jnp.float32)
    var = jax.random.uniform(k4, (c,), minval=0.5, maxval=1.5, dtype=jnp.float32)
    return gamma, beta, mean, var


def make_nconv(key, n_convs, in_channels, out_channels, kernel_size,
               normalize_last=True):
    """Mirrors NConv.__init__; returns (key, list of per-conv-layer param dicts)."""
    if isinstance(out_channels, int):
        out_channels = [out_channels] * n_convs
    if isinstance(kernel_size, int):
        kernel_size = [kernel_size] * n_convs
    layers = []
    for stage in range(n_convs):
        key, kc, kb = jax.random.split(key, 3)
        c_in = in_channels if stage == 0 else out_channels[stage - 1]
        w, b = _init_conv1d(kc, c_in, out_channels[stage], kernel_size[stage])
        has_bn_act = (stage < n_convs - 1) or normalize_last
        bn = _init_bn(kb, out_channels[stage]) if has_bn_act else None
        layers.append(dict(w=w, b=b, bn=bn, act=has_bn_act, pool=False))
    return key, layers


def pack_layer(layer):
    """Fold eval-mode BN into the conv and re-layout the weight to (K, Cout, Cin).
    Done once at parameter-prep time, outside the per-call hot path."""
    w, b = layer["w"], layer["b"]                # (Cout, Cin, K), (Cout,)
    if layer["bn"] is not None:
        gamma, beta, mean, var = layer["bn"]
        s = gamma / jnp.sqrt(var + BN_EPS)
        w = w * s[:, None, None]
        b = (b - mean) * s + beta
    w_koi = jnp.transpose(w, (2, 0, 1))          # (K, Cout, Cin)
    return dict(w=w_koi, b=b.reshape(-1, 1), k=int(w.shape[-1]),
                act=layer["act"], pool=layer["pool"])


# -----------------------------------------------------------------------------------
# Pure-JAX reference (mirrors the PyTorch ConvEncoder forward with eval-mode BN)
# -----------------------------------------------------------------------------------
def reference_forward(x, layers):
    for layer in layers:
        w, b = layer["w"], layer["b"]
        k = w.shape[-1]
        pad = (k - 1) // 2
        x = jax.lax.conv_general_dilated(
            x, w, window_strides=(1,), padding=[(pad, pad)],
            dimension_numbers=("NCH", "OIH", "NCH"))
        x = x + b[None, :, None]
        if layer["bn"] is not None:
            gamma, beta, mean, var = layer["bn"]
            x = ((x - mean[None, :, None]) / jnp.sqrt(var + BN_EPS)[None, :, None]
                 * gamma[None, :, None] + beta[None, :, None])
        if layer["act"]:
            x = jax.nn.sigmoid(x)
        if layer["pool"]:
            bsz, c, l = x.shape
            x = x.reshape(bsz, c, l // 2, 2).max(axis=-1)
    return x


if __name__ == "__main__":
    # Small shapes consistent with the module: x (batch=2, in_channels=4, length=16)
    batch, in_channels, length = 2, 4, 16
    down_blocks_config = [
        dict(n_convs=2, in_channels=4, out_channels=8, kernel_size=3),
        dict(n_convs=2, in_channels=8, out_channels=16, kernel_size=3),
    ]
    out_conv_config = dict(n_convs=1, in_channels=16, out_channels=8, kernel_size=3,
                           normalize_last=True)

    key = jax.random.PRNGKey(0)
    key, kx = jax.random.split(key)
    x = jax.random.normal(kx, (batch, in_channels, length), dtype=jnp.float32)

    # Build module parameters (PyTorch layouts); Down = NConv then MaxPool1d(2).
    layers = []
    for cfg in down_blocks_config:
        key, nl = make_nconv(key, cfg["n_convs"], cfg["in_channels"],
                             cfg["out_channels"], cfg["kernel_size"])
        nl[-1]["pool"] = True
        layers.extend(nl)
    if out_conv_config is not None:
        key, nl = make_nconv(key, out_conv_config["n_convs"],
                             out_conv_config["in_channels"],
                             out_conv_config["out_channels"],
                             out_conv_config["kernel_size"],
                             normalize_last=out_conv_config["normalize_last"])
        layers.extend(nl)

    # One-time parameter prep: fold BN, re-layout weights for the fused kernel.
    packed = [pack_layer(l) for l in layers]

    out = conv_encoder_forward(x, packed)
    out = jax.block_until_ready(out)

    ref = reference_forward(x, layers)
    assert out.shape == ref.shape == (batch, 8, length // 4), (out.shape, ref.shape)
    max_err = float(jnp.max(jnp.abs(out - ref)))
    assert jnp.allclose(out, ref, atol=1e-4, rtol=1e-4), f"max_err={max_err}"

    print("KERNEL_OK")
</pallas_src>

<mosaic_0001>
module attributes {stable_mosaic.version = 11 : i64} {
  func.func @_encoder_kernel(%arg0: i32, %arg1: memref<1x4x16xf32, #tpu.memory_space<vmem>>, %arg2: memref<3x8x4xf32, #tpu.memory_space<vmem>>, %arg3: memref<8x1xf32, #tpu.memory_space<vmem>>, %arg4: memref<3x8x8xf32, #tpu.memory_space<vmem>>, %arg5: memref<8x1xf32, #tpu.memory_space<vmem>>, %arg6: memref<3x16x8xf32, #tpu.memory_space<vmem>>, %arg7: memref<16x1xf32, #tpu.memory_space<vmem>>, %arg8: memref<3x16x16xf32, #tpu.memory_space<vmem>>, %arg9: memref<16x1xf32, #tpu.memory_space<vmem>>, %arg10: memref<3x8x16xf32, #tpu.memory_space<vmem>>, %arg11: memref<8x1xf32, #tpu.memory_space<vmem>>, %arg12: memref<1x8x4xf32, #tpu.memory_space<vmem>>) attributes {dimension_semantics = [#tpu.dimension_semantics<parallel>], iteration_bounds = array<i64: 2>, scalar_prefetch = 0 : i64, scratch_operands = 0 : i64, tpu.core_type = #tpu.core_type<tc>, window_params = [{transform_indices = @transform_0, window_bounds = array<i64: 1, 4, 16>}, {pipeline_mode = #tpu.pipeline_mode<synchronous>, transform_indices = @transform_1, window_bounds = array<i64: 3, 8, 4>}, {pipeline_mode = #tpu.pipeline_mode<synchronous>, transform_indices = @transform_2, window_bounds = array<i64: 8, 1>}, {pipeline_mode = #tpu.pipeline_mode<synchronous>, transform_indices = @transform_3, window_bounds = array<i64: 3, 8, 8>}, {pipeline_mode = #tpu.pipeline_mode<synchronous>, transform_indices = @transform_4, window_bounds = array<i64: 8, 1>}, {pipeline_mode = #tpu.pipeline_mode<synchronous>, transform_indices = @transform_5, window_bounds = array<i64: 3, 16, 8>}, {pipeline_mode = #tpu.pipeline_mode<synchronous>, transform_indices = @transform_6, window_bounds = array<i64: 16, 1>}, {pipeline_mode = #tpu.pipeline_mode<synchronous>, transform_indices = @transform_7, window_bounds = array<i64: 3, 16, 16>}, {pipeline_mode = #tpu.pipeline_mode<synchronous>, transform_indices = @transform_8, window_bounds = array<i64: 16, 1>}, {pipeline_mode = #tpu.pipeline_mode<synchronous>, transform_indices = @transform_9, window_bounds = array<i64: 3, 8, 16>}, {pipeline_mode = #tpu.pipeline_mode<synchronous>, transform_indices = @transform_10, window_bounds = array<i64: 8, 1>}, {transform_indices = @transform_11, window_bounds = array<i64: 1, 8, 4>}]} {
    %c0 = arith.constant 0 : index
    %c0_0 = arith.constant 0 : index
    %c0_1 = arith.constant 0 : index
    %0 = vector.load %arg1[%c0, %c0_0, %c0_1] : memref<1x4x16xf32, #tpu.memory_space<vmem>>, vector<1x4x16xf32>
    %1 = vector.shape_cast %0 : vector<1x4x16xf32> to vector<4x16xf32>
    %2 = tpu.iota {dimensions = array<i32: 0>} : vector<16x16xi32>
    %3 = tpu.iota {dimensions = array<i32: 1>} : vector<16x16xi32>
    %c0_2 = arith.constant 0 : index
    %c0_3 = arith.constant 0 : index
    %c0_4 = arith.constant 0 : index
    %4 = vector.load %arg2[%c0_2, %c0_3, %c0_4] : memref<3x8x4xf32, #tpu.memory_space<vmem>>, vector<1x8x4xf32>
    %5 = vector.shape_cast %4 : vector<1x8x4xf32> to vector<8x4xf32>
    %cst = arith.constant dense<0.000000e+00> : vector<8x16xf32>
    %6 = tpu.matmul %5, %1, %cst {dimension_numbers = #tpu.dot_dimension_numbers<[1], [0], [0], [1], [0, 0, 1, 1], [], []>} : vector<8x4xf32>, vector<4x16xf32>, vector<8x16xf32> -> vector<8x16xf32>
    %c-1_i32 = arith.constant -1 : i32
    %7 = vector.broadcast %c-1_i32 : i32 to vector<16x16xi32>
    %8 = arith.addi %3, %7 : vector<16x16xi32>
    %9 = arith.cmpi eq, %2, %8 : vector<16x16xi32>
    %10 = arith.extui %9 : vector<16x16xi1> to vector<16x16xi32>
    %11 = arith.sitofp %10 : vector<16x16xi32> to vector<16x16xf32>
    %cst_5 = arith.constant dense<0.000000e+00> : vector<8x16xf32>
    %12 = tpu.matmul %6, %11, %cst_5 {dimension_numbers = #tpu.dot_dimension_numbers<[1], [0], [0], [1], [0, 0, 1, 1], [], []>} : vector<8x16xf32>, vector<16x16xf32>, vector<8x16xf32> -> vector<8x16xf32>
    %c1 = arith.constant 1 : index
    %c0_6 = arith.constant 0 : index
    %c0_7 = arith.constant 0 : index
    %13 = vector.load %arg2[%c1, %c0_6, %c0_7] : memref<3x8x4xf32, #tpu.memory_space<vmem>>, vector<1x8x4xf32>
    %14 = vector.shape_cast %13 : vector<1x8x4xf32> to vector<8x4xf32>
    %cst_8 = arith.constant dense<0.000000e+00> : vector<8x16xf32>
    %15 = tpu.matmul %14, %1, %cst_8 {dimension_numbers = #tpu.dot_dimension_numbers<[1], [0], [0], [1], [0, 0, 1, 1], [], []>} : vector<8x4xf32>, vector<4x16xf32>, vector<8x16xf32> -> vector<8x16xf32>
    %16 = arith.addf %12, %15 : vector<8x16xf32>
    %c2 = arith.constant 2 : index
    %c0_9 = arith.constant 0 : index
    %c0_10 = arith.constant 0 : index
    %17 = vector.load %arg2[%c2, %c0_9, %c0_10] : memref<3x8x4xf32, #tpu.memory_space<vmem>>, vector<1x8x4xf32>
    %18 = vector.shape_cast %17 : vector<1x8x4xf32> to vector<8x4xf32>
    %cst_11 = arith.constant dense<0.000000e+00> : vector<8x16xf32>
    %19 = tpu.matmul %18, %1, %cst_11 {dimension_numbers = #tpu.dot_dimension_numbers<[1], [0], [0], [1], [0, 0, 1, 1], [], []>} : vector<8x4xf32>, vector<4x16xf32>, vector<8x16xf32> -> vector<8x16xf32>
    %c1_i32 = arith.constant 1 : i32
    %20 = vector.broadcast %c1_i32 : i32 to vector<16x16xi32>
    %21 = arith.addi %3, %20 : vector<16x16xi32>
    %22 = arith.cmpi eq, %2, %21 : vector<16x16xi32>
    %23 = arith.extui %22 : vector<16x16xi1> to vector<16x16xi32>
    %24 = arith.sitofp %23 : vector<16x16xi32> to vector<16x16xf32>
    %cst_12 = arith.constant dense<0.000000e+00> : vector<8x16xf32>
    %25 = tpu.matmul %19, %24, %cst_12 {dimension_numbers = #tpu.dot_dimension_numbers<[1], [0], [0], [1], [0, 0, 1, 1], [], []>} : vector<8x16xf32>, vector<16x16xf32>, vector<8x16xf32> -> vector<8x16xf32>
    %26 = arith.addf %16, %25 : vector<8x16xf32>
    %c0_13 = arith.constant 0 : index
    %c0_14 = arith.constant 0 : index
    %27 = vector.load %arg3[%c0_13, %c0_14] : memref<8x1xf32, #tpu.memory_space<vmem>>, vector<8x1xf32>
    %28 = vector.broadcast %27 : vector<8x1xf32> to vector<8x16xf32>
    %29 = arith.addf %26, %28 : vector<8x16xf32>
    %cst_15 = arith.constant 0.000000e+00 : f32
    %30 = vector.broadcast %cst_15 : f32 to vector<8x16xf32>
    %31 = arith.subf %30, %29 : vector<8x16xf32>
    %32 = math.exp %31 : vector<8x16xf32>
    %cst_16 = arith.constant 1.000000e+00 : f32
    %33 = vector.broadcast %cst_16 : f32 to vector<8x16xf32>
    %34 = arith.addf %33, %32 : vector<8x16xf32>
    %35 = tpu.reciprocal %34 : vector<8x16xf32> -> vector<8x16xf32>
    %36 = tpu.iota {dimensions = array<i32: 0>} : vector<16x16xi32>
    %37 = tpu.iota {dimensions = array<i32: 1>} : vector<16x16xi32>
    %c0_17 = arith.constant 0 : index
    %c0_18 = arith.constant 0 : index
    %c0_19 = arith.constant 0 : index
    %38 = vector.load %arg4[%c0_17, %c0_18, %c0_19] : memref<3x8x8xf32, #tpu.memory_space<vmem>>, vector<1x8x8xf32>
    %39 = vector.shape_cast %38 : vector<1x8x8xf32> to vector<8x8xf32>
    %cst_20 = arith.constant dense<0.000000e+00> : vector<8x16xf32>
    %40 = tpu.matmul %39, %35, %cst_20 {dimension_numbers = #tpu.dot_dimension_numbers<[1], [0], [0], [1], [0, 0, 1, 1], [], []>} : vector<8x8xf32>, vector<8x16xf32>, vector<8x16xf32> -> vector<8x16xf32>
    %c-1_i32_21 = arith.constant -1 : i32
    %41 = vector.broadcast %c-1_i32_21 : i32 to vector<16x16xi32>
    %42 = arith.addi %37, %41 : vector<16x16xi32>
    %43 = arith.cmpi eq, %36, %42 : vector<16x16xi32>
    %44 = arith.extui %43 : vector<16x16xi1> to vector<16x16xi32>
    %45 = arith.sitofp %44 : vector<16x16xi32> to vector<16x16xf32>
    %cst_22 = arith.constant dense<0.000000e+00> : vector<8x16xf32>
    %46 = tpu.matmul %40, %45, %cst_22 {dimension_numbers = #tpu.dot_dimension_numbers<[1], [0], [0], [1], [0, 0, 1, 1], [], []>} : vector<8x16xf32>, vector<16x16xf32>, vector<8x16xf32> -> vector<8x16xf32>
    %c1_23 = arith.constant 1 : index
    %c0_24 = arith.constant 0 : index
    %c0_25 = arith.constant 0 : index
    %47 = vector.load %arg4[%c1_23, %c0_24, %c0_25] : memref<3x8x8xf32, #tpu.memory_space<vmem>>, vector<1x8x8xf32>
    %48 = vector.shape_cast %47 : vector<1x8x8xf32> to vector<8x8xf32>
    %cst_26 = arith.constant dense<0.000000e+00> : vector<8x16xf32>
    %49 = tpu.matmul %48, %35, %cst_26 {dimension_numbers = #tpu.dot_dimension_numbers<[1], [0], [0], [1], [0, 0, 1, 1], [], []>} : vector<8x8xf32>, vector<8x16xf32>, vector<8x16xf32> -> vector<8x16xf32>
    %50 = arith.addf %46, %49 : vector<8x16xf32>
    %c2_27 = arith.constant 2 : index
    %c0_28 = arith.constant 0 : index
    %c0_29 = arith.constant 0 : index
    %51 = vector.load %arg4[%c2_27, %c0_28, %c0_29] : memref<3x8x8xf32, #tpu.memory_space<vmem>>, vector<1x8x8xf32>
    %52 = vector.shape_cast %51 : vector<1x8x8xf32> to vector<8x8xf32>
    %cst_30 = arith.constant dense<0.000000e+00> : vector<8x16xf32>
    %53 = tpu.matmul %52, %35, %cst_30 {dimension_numbers = #tpu.dot_dimension_numbers<[1], [0], [0], [1], [0, 0, 1, 1], [], []>} : vector<8x8xf32>, vector<8x16xf32>, vector<8x16xf32> -> vector<8x16xf32>
    %c1_i32_31 = arith.constant 1 : i32
    %54 = vector.broadcast %c1_i32_31 : i32 to vector<16x16xi32>
    %55 = arith.addi %37, %54 : vector<16x16xi32>
    %56 = arith.cmpi eq, %36, %55 : vector<16x16xi32>
    %57 = arith.extui %56 : vector<16x16xi1> to vector<16x16xi32>
    %58 = arith.sitofp %57 : vector<16x16xi32> to vector<16x16xf32>
    %cst_32 = arith.constant dense<0.000000e+00> : vector<8x16xf32>
    %59 = tpu.matmul %53, %58, %cst_32 {dimension_numbers = #tpu.dot_dimension_numbers<[1], [0], [0], [1], [0, 0, 1, 1], [], []>} : vector<8x16xf32>, vector<16x16xf32>, vector<8x16xf32> -> vector<8x16xf32>
    %60 = arith.addf %50, %59 : vector<8x16xf32>
    %c0_33 = arith.constant 0 : index
    %c0_34 = arith.constant 0 : index
    %61 = vector.load %arg5[%c0_33, %c0_34] : memref<8x1xf32, #tpu.memory_space<vmem>>, vector<8x1xf32>
    %62 = vector.broadcast %61 : vector<8x1xf32> to vector<8x16xf32>
    %63 = arith.addf %60, %62 : vector<8x16xf32>
    %cst_35 = arith.constant 0.000000e+00 : f32
    %64 = vector.broadcast %cst_35 : f32 to vector<8x16xf32>
    %65 = arith.subf %64, %63 : vector<8x16xf32>
    %66 = math.exp %65 : vector<8x16xf32>
    %cst_36 = arith.constant 1.000000e+00 : f32
    %67 = vector.broadcast %cst_36 : f32 to vector<8x16xf32>
    %68 = arith.addf %67, %66 : vector<8x16xf32>
    %69 = tpu.reciprocal %68 : vector<8x16xf32> -> vector<8x16xf32>
    %70 = tpu.iota {dimensions = array<i32: 0>} : vector<16x8xi32>
    %71 = tpu.iota {dimensions = array<i32: 1>} : vector<16x8xi32>
    %c2_i32 = arith.constant 2 : i32
    %72 = vector.broadcast %c2_i32 : i32 to vector<16x8xi32>
    %73 = arith.muli %72, %71 : vector<16x8xi32>
    %74 = arith.cmpi eq, %70, %73 : vector<16x8xi32>
    %75 = arith.extui %74 : vector<16x8xi1> to vector<16x8xi32>
    %76 = arith.sitofp %75 : vector<16x8xi32> to vector<16x8xf32>
    %cst_37 = arith.constant dense<0.000000e+00> : vector<8x8xf32>
    %77 = tpu.matmul %69, %76, %cst_37 {dimension_numbers = #tpu.dot_dimension_numbers<[1], [0], [0], [1], [0, 0, 1, 1], [], []>} : vector<8x16xf32>, vector<16x8xf32>, vector<8x8xf32> -> vector<8x8xf32>
    %c2_i32_38 = arith.constant 2 : i32
    %78 = vector.broadcast %c2_i32_38 : i32 to vector<16x8xi32>
    %79 = arith.muli %78, %71 : vector<16x8xi32>
    %c1_i32_39 = arith.constant 1 : i32
    %80 = vector.broadcast %c1_i32_39 : i32 to vector<16x8xi32>
    %81 = arith.addi %79, %80 : vector<16x8xi32>
    %82 = arith.cmpi eq, %70, %81 : vector<16x8xi32>
    %83 = arith.extui %82 : vector<16x8xi1> to vector<16x8xi32>
    %84 = arith.sitofp %83 : vector<16x8xi32> to vector<16x8xf32>
    %cst_40 = arith.constant dense<0.000000e+00> : vector<8x8xf32>
    %85 = tpu.matmul %69, %84, %cst_40 {dimension_numbers = #tpu.dot_dimension_numbers<[1], [0], [0], [1], [0, 0, 1, 1], [], []>} : vector<8x16xf32>, vector<16x8xf32>, vector<8x8xf32> -> vector<8x8xf32>
    %86 = arith.maximumf %77, %85 : vector<8x8xf32>
    %87 = tpu.iota {dimensions = array<i32: 0>} : vector<8x8xi32>
    %88 = tpu.iota {dimensions = array<i32: 1>} : vector<8x8xi32>
    %c0_41 = arith.constant 0 : index
    %c0_42 = arith.constant 0 : index
    %c0_43 = arith.constant 0 : index
    %89 = vector.load %arg6[%c0_41, %c0_42, %c0_43] : memref<3x16x8xf32, #tpu.memory_space<vmem>>, vector<1x16x8xf32>
    %90 = vector.shape_cast %89 : vector<1x16x8xf32> to vector<16x8xf32>
    %cst_44 = arith.constant dense<0.000000e+00> : vector<16x8xf32>
    %91 = tpu.matmul %90, %86, %cst_44 {dimension_numbers = #tpu.dot_dimension_numbers<[1], [0], [0], [1], [0, 0, 1, 1], [], []>} : vector<16x8xf32>, vector<8x8xf32>, vector<16x8xf32> -> vector<16x8xf32>
    %c-1_i32_45 = arith.constant -1 : i32
    %92 = vector.broadcast %c-1_i32_45 : i32 to vector<8x8xi32>
    %93 = arith.addi %88, %92 : vector<8x8xi32>
    %94 = arith.cmpi eq, %87, %93 : vector<8x8xi32>
    %95 = arith.extui %94 : vector<8x8xi1> to vector<8x8xi32>
    %96 = arith.sitofp %95 : vector<8x8xi32> to vector<8x8xf32>
    %cst_46 = arith.constant dense<0.000000e+00> : vector<16x8xf32>
    %97 = tpu.matmul %91, %96, %cst_46 {dimension_numbers = #tpu.dot_dimension_numbers<[1], [0], [0], [1], [0, 0, 1, 1], [], []>} : vector<16x8xf32>, vector<8x8xf32>, vector<16x8xf32> -> vector<16x8xf32>
    %c1_47 = arith.constant 1 : index
    %c0_48 = arith.constant 0 : index
    %c0_49 = arith.constant 0 : index
    %98 = vector.load %arg6[%c1_47, %c0_48, %c0_49] : memref<3x16x8xf32, #tpu.memory_space<vmem>>, vector<1x16x8xf32>
    %99 = vector.shape_cast %98 : vector<1x16x8xf32> to vector<16x8xf32>
    %cst_50 = arith.constant dense<0.000000e+00> : vector<16x8xf32>
    %100 = tpu.matmul %99, %86, %cst_50 {dimension_numbers = #tpu.dot_dimension_numbers<[1], [0], [0], [1], [0, 0, 1, 1], [], []>} : vector<16x8xf32>, vector<8x8xf32>, vector<16x8xf32> -> vector<16x8xf32>
    %101 = arith.addf %97, %100 : vector<16x8xf32>
    %c2_51 = arith.constant 2 : index
    %c0_52 = arith.constant 0 : index
    %c0_53 = arith.constant 0 : index
    %102 = vector.load %arg6[%c2_51, %c0_52, %c0_53] : memref<3x16x8xf32, #tpu.memory_space<vmem>>, vector<1x16x8xf32>
    %103 = vector.shape_cast %102 : vector<1x16x8xf32> to vector<16x8xf32>
    %cst_54 = arith.constant dense<0.000000e+00> : vector<16x8xf32>
    %104 = tpu.matmul %103, %86, %cst_54 {dimension_numbers = #tpu.dot_dimension_numbers<[1], [0], [0], [1], [0, 0, 1, 1], [], []>} : vector<16x8xf32>, vector<8x8xf32>, vector<16x8xf32> -> vector<16x8xf32>
    %c1_i32_55 = arith.constant 1 : i32
    %105 = vector.broadcast %c1_i32_55 : i32 to vector<8x8xi32>
    %106 = arith.addi %88, %105 : vector<8x8xi32>
    %107 = arith.cmpi eq, %87, %106 : vector<8x8xi32>
    %108 = arith.extui %107 : vector<8x8xi1> to vector<8x8xi32>
    %109 = arith.sitofp %108 : vector<8x8xi32> to vector<8x8xf32>
    %cst_56 = arith.constant dense<0.000000e+00> : vector<16x8xf32>
    %110 = tpu.matmul %104, %109, %cst_56 {dimension_numbers = #tpu.dot_dimension_numbers<[1], [0], [0], [1], [0, 0, 1, 1], [], []>} : vector<16x8xf32>, vector<8x8xf32>, vector<16x8xf32> -> vector<16x8xf32>
    %111 = arith.addf %101, %110 : vector<16x8xf32>
    %c0_57 = arith.constant 0 : index
    %c0_58 = arith.constant 0 : index
    %112 = vector.load %arg7[%c0_57, %c0_58] : memref<16x1xf32, #tpu.memory_space<vmem>>, vector<16x1xf32>
    %113 = vector.broadcast %112 : vector<16x1xf32> to vector<16x8xf32>
    %114 = arith.addf %111, %113 : vector<16x8xf32>
    %cst_59 = arith.constant 0.000000e+00 : f32
    %115 = vector.broadcast %cst_59 : f32 to vector<16x8xf32>
    %116 = arith.subf %115, %114 : vector<16x8xf32>
    %117 = math.exp %116 : vector<16x8xf32>
    %cst_60 = arith.constant 1.000000e+00 : f32
    %118 = vector.broadcast %cst_60 : f32 to vector<16x8xf32>
    %119 = arith.addf %118, %117 : vector<16x8xf32>
    %120 = tpu.reciprocal %119 : vector<16x8xf32> -> vector<16x8xf32>
    %121 = tpu.iota {dimensions = array<i32: 0>} : vector<8x8xi32>
    %122 = tpu.iota {dimensions = array<i32: 1>} : vector<8x8xi32>
    %c0_61 = arith.constant 0 : index
    %c0_62 = arith.constant 0 : index
    %c0_63 = arith.constant 0 : index
    %123 = vector.load %arg8[%c0_61, %c0_62, %c0_63] : memref<3x16x16xf32, #tpu.memory_space<vmem>>, vector<1x16x16xf32>
    %124 = vector.shape_cast %123 : vector<1x16x16xf32> to vector<16x16xf32>
    %cst_64 = arith.constant dense<0.000000e+00> : vector<16x8xf32>
    %125 = tpu.matmul %124, %120, %cst_64 {dimension_numbers = #tpu.dot_dimension_numbers<[1], [0], [0], [1], [0, 0, 1, 1], [], []>} : vector<16x16xf32>, vector<16x8xf32>, vector<16x8xf32> -> vector<16x8xf32>
    %c-1_i32_65 = arith.constant -1 : i32
    %126 = vector.broadcast %c-1_i32_65 : i32 to vector<8x8xi32>
    %127 = arith.addi %122, %126 : vector<8x8xi32>
    %128 = arith.cmpi eq, %121, %127 : vector<8x8xi32>
    %129 = arith.extui %128 : vector<8x8xi1> to vector<8x8xi32>
    %130 = arith.sitofp %129 : vector<8x8xi32> to vector<8x8xf32>
    %cst_66 = arith.constant dense<0.000000e+00> : vector<16x8xf32>
    %131 = tpu.matmul %125, %130, %cst_66 {dimension_numbers = #tpu.dot_dimension_numbers<[1], [0], [0], [1], [0, 0, 1, 1], [], []>} : vector<16x8xf32>, vector<8x8xf32>, vector<16x8xf32> -> vector<16x8xf32>
    %c1_67 = arith.constant 1 : index
    %c0_68 = arith.constant 0 : index
    %c0_69 = arith.constant 0 : index
    %132 = vector.load %arg8[%c1_67, %c0_68, %c0_69] : memref<3x16x16xf32, #tpu.memory_space<vmem>>, vector<1x16x16xf32>
    %133 = vector.shape_cast %132 : vector<1x16x16xf32> to vector<16x16xf32>
    %cst_70 = arith.constant dense<0.000000e+00> : vector<16x8xf32>
    %134 = tpu.matmul %133, %120, %cst_70 {dimension_numbers = #tpu.dot_dimension_numbers<[1], [0], [0], [1], [0, 0, 1, 1], [], []>} : vector<16x16xf32>, vector<16x8xf32>, vector<16x8xf32> -> vector<16x8xf32>
    %135 = arith.addf %131, %134 : vector<16x8xf32>
    %c2_71 = arith.constant 2 : index
    %c0_72 = arith.constant 0 : index
    %c0_73 = arith.constant 0 : index
    %136 = vector.load %arg8[%c2_71, %c0_72, %c0_73] : memref<3x16x16xf32, #tpu.memory_space<vmem>>, vector<1x16x16xf32>
    %137 = vector.shape_cast %136 : vector<1x16x16xf32> to vector<16x16xf32>
    %cst_74 = arith.constant dense<0.000000e+00> : vector<16x8xf32>
    %138 = tpu.matmul %137, %120, %cst_74 {dimension_numbers = #tpu.dot_dimension_numbers<[1], [0], [0], [1], [0, 0, 1, 1], [], []>} : vector<16x16xf32>, vector<16x8xf32>, vector<16x8xf32> -> vector<16x8xf32>
    %c1_i32_75 = arith.constant 1 : i32
    %139 = vector.broadcast %c1_i32_75 : i32 to vector<8x8xi32>
    %140 = arith.addi %122, %139 : vector<8x8xi32>
    %141 = arith.cmpi eq, %121, %140 : vector<8x8xi32>
    %142 = arith.extui %141 : vector<8x8xi1> to vector<8x8xi32>
    %143 = arith.sitofp %142 : vector<8x8xi32> to vector<8x8xf32>
    %cst_76 = arith.constant dense<0.000000e+00> : vector<16x8xf32>
    %144 = tpu.matmul %138, %143, %cst_76 {dimension_numbers = #tpu.dot_dimension_numbers<[1], [0], [0], [1], [0, 0, 1, 1], [], []>} : vector<16x8xf32>, vector<8x8xf32>, vector<16x8xf32> -> vector<16x8xf32>
    %145 = arith.addf %135, %144 : vector<16x8xf32>
    %c0_77 = arith.constant 0 : index
    %c0_78 = arith.constant 0 : index
    %146 = vector.load %arg9[%c0_77, %c0_78] : memref<16x1xf32, #tpu.memory_space<vmem>>, vector<16x1xf32>
    %147 = vector.broadcast %146 : vector<16x1xf32> to vector<16x8xf32>
    %148 = arith.addf %145, %147 : vector<16x8xf32>
    %cst_79 = arith.constant 0.000000e+00 : f32
    %149 = vector.broadcast %cst_79 : f32 to vector<16x8xf32>
    %150 = arith.subf %149, %148 : vector<16x8xf32>
    %151 = math.exp %150 : vector<16x8xf32>
    %cst_80 = arith.constant 1.000000e+00 : f32
    %152 = vector.broadcast %cst_80 : f32 to vector<16x8xf32>
    %153 = arith.addf %152, %151 : vector<16x8xf32>
    %154 = tpu.reciprocal %153 : vector<16x8xf32> -> vector<16x8xf32>
    %155 = tpu.iota {dimensions = array<i32: 0>} : vector<8x4xi32>
    %156 = tpu.iota {dimensions = array<i32: 1>} : vector<8x4xi32>
    %c2_i32_81 = arith.constant 2 : i32
    %157 = vector.broadcast %c2_i32_81 : i32 to vector<8x4xi32>
    %158 = arith.muli %157, %156 : vector<8x4xi32>
    %159 = arith.cmpi eq, %155, %158 : vector<8x4xi32>
    %160 = arith.extui %159 : vector<8x4xi1> to vector<8x4xi32>
    %161 = arith.sitofp %160 : vector<8x4xi32> to vector<8x4xf32>
    %cst_82 = arith.constant dense<0.000000e+00> : vector<16x4xf32>
    %162 = tpu.matmul %154, %161, %cst_82 {dimension_numbers = #tpu.dot_dimension_numbers<[1], [0], [0], [1], [0, 0, 1, 1], [], []>} : vector<16x8xf32>, vector<8x4xf32>, vector<16x4xf32> -> vector<16x4xf32>
    %c2_i32_83 = arith.constant 2 : i32
    %163 = vector.broadcast %c2_i32_83 : i32 to vector<8x4xi32>
    %164 = arith.muli %163, %156 : vector<8x4xi32>
    %c1_i32_84 = arith.constant 1 : i32
    %165 = vector.broadcast %c1_i32_84 : i32 to vector<8x4xi32>
    %166 = arith.addi %164, %165 : vector<8x4xi32>
    %167 = arith.cmpi eq, %155, %166 : vector<8x4xi32>
    %168 = arith.extui %167 : vector<8x4xi1> to vector<8x4xi32>
    %169 = arith.sitofp %168 : vector<8x4xi32> to vector<8x4xf32>
    %cst_85 = arith.constant dense<0.000000e+00> : vector<16x4xf32>
    %170 = tpu.matmul %154, %169, %cst_85 {dimension_numbers = #tpu.dot_dimension_numbers<[1], [0], [0], [1], [0, 0, 1, 1], [], []>} : vector<16x8xf32>, vector<8x4xf32>, vector<16x4xf32> -> vector<16x4xf32>
    %171 = arith.maximumf %162, %170 : vector<16x4xf32>
    %172 = tpu.iota {dimensions = array<i32: 0>} : vector<4x4xi32>
    %173 = tpu.iota {dimensions = array<i32: 1>} : vector<4x4xi32>
    %c0_86 = arith.constant 0 : index
    %c0_87 = arith.constant 0 : index
    %c0_88 = arith.constant 0 : index
    %174 = vector.load %arg10[%c0_86, %c0_87, %c0_88] : memref<3x8x16xf32, #tpu.memory_space<vmem>>, vector<1x8x16xf32>
    %175 = vector.shape_cast %174 : vector<1x8x16xf32> to vector<8x16xf32>
    %cst_89 = arith.constant dense<0.000000e+00> : vector<8x4xf32>
    %176 = tpu.matmul %175, %171, %cst_89 {dimension_numbers = #tpu.dot_dimension_numbers<[1], [0], [0], [1], [0, 0, 1, 1], [], []>} : vector<8x16xf32>, vector<16x4xf32>, vector<8x4xf32> -> vector<8x4xf32>
    %c-1_i32_90 = arith.constant -1 : i32
    %177 = vector.broadcast %c-1_i32_90 : i32 to vector<4x4xi32>
    %178 = arith.addi %173, %177 : vector<4x4xi32>
    %179 = arith.cmpi eq, %172, %178 : vector<4x4xi32>
    %180 = arith.extui %179 : vector<4x4xi1> to vector<4x4xi32>
    %181 = arith.sitofp %180 : vector<4x4xi32> to vector<4x4xf32>
    %cst_91 = arith.constant dense<0.000000e+00> : vector<8x4xf32>
    %182 = tpu.matmul %176, %181, %cst_91 {dimension_numbers = #tpu.dot_dimension_numbers<[1], [0], [0], [1], [0, 0, 1, 1], [], []>} : vector<8x4xf32>, vector<4x4xf32>, vector<8x4xf32> -> vector<8x4xf32>
    %c1_92 = arith.constant 1 : index
    %c0_93 = arith.constant 0 : index
    %c0_94 = arith.constant 0 : index
    %183 = vector.load %arg10[%c1_92, %c0_93, %c0_94] : memref<3x8x16xf32, #tpu.memory_space<vmem>>, vector<1x8x16xf32>
    %184 = vector.shape_cast %183 : vector<1x8x16xf32> to vector<8x16xf32>
    %cst_95 = arith.constant dense<0.000000e+00> : vector<8x4xf32>
    %185 = tpu.matmul %184, %171, %cst_95 {dimension_numbers = #tpu.dot_dimension_numbers<[1], [0], [0], [1], [0, 0, 1, 1], [], []>} : vector<8x16xf32>, vector<16x4xf32>, vector<8x4xf32> -> vector<8x4xf32>
    %186 = arith.addf %182, %185 : vector<8x4xf32>
    %c2_96 = arith.constant 2 : index
    %c0_97 = arith.constant 0 : index
    %c0_98 = arith.constant 0 : index
    %187 = vector.load %arg10[%c2_96, %c0_97, %c0_98] : memref<3x8x16xf32, #tpu.memory_space<vmem>>, vector<1x8x16xf32>
    %188 = vector.shape_cast %187 : vector<1x8x16xf32> to vector<8x16xf32>
    %cst_99 = arith.constant dense<0.000000e+00> : vector<8x4xf32>
    %189 = tpu.matmul %188, %171, %cst_99 {dimension_numbers = #tpu.dot_dimension_numbers<[1], [0], [0], [1], [0, 0, 1, 1], [], []>} : vector<8x16xf32>, vector<16x4xf32>, vector<8x4xf32> -> vector<8x4xf32>
    %c1_i32_100 = arith.constant 1 : i32
    %190 = vector.broadcast %c1_i32_100 : i32 to vector<4x4xi32>
    %191 = arith.addi %173, %190 : vector<4x4xi32>
    %192 = arith.cmpi eq, %172, %191 : vector<4x4xi32>
    %193 = arith.extui %192 : vector<4x4xi1> to vector<4x4xi32>
    %194 = arith.sitofp %193 : vector<4x4xi32> to vector<4x4xf32>
    %cst_101 = arith.constant dense<0.000000e+00> : vector<8x4xf32>
    %195 = tpu.matmul %189, %194, %cst_101 {dimension_numbers = #tpu.dot_dimension_numbers<[1], [0], [0], [1], [0, 0, 1, 1], [], []>} : vector<8x4xf32>, vector<4x4xf32>, vector<8x4xf32> -> vector<8x4xf32>
    %196 = arith.addf %186, %195 : vector<8x4xf32>
    %c0_102 = arith.constant 0 : index
    %c0_103 = arith.constant 0 : index
    %197 = vector.load %arg11[%c0_102, %c0_103] : memref<8x1xf32, #tpu.memory_space<vmem>>, vector<8x1xf32>
    %198 = vector.broadcast %197 : vector<8x1xf32> to vector<8x4xf32>
    %199 = arith.addf %196, %198 : vector<8x4xf32>
    %cst_104 = arith.constant 0.000000e+00 : f32
    %200 = vector.broadcast %cst_104 : f32 to vector<8x4xf32>
    %201 = arith.subf %200, %199 : vector<8x4xf32>
    %202 = math.exp %201 : vector<8x4xf32>
    %cst_105 = arith.constant 1.000000e+00 : f32
    %203 = vector.broadcast %cst_105 : f32 to vector<8x4xf32>
    %204 = arith.addf %203, %202 : vector<8x4xf32>
    %205 = tpu.reciprocal %204 : vector<8x4xf32> -> vector<8x4xf32>
    %c0_106 = arith.constant 0 : index
    %c0_107 = arith.constant 0 : index
    %c0_108 = arith.constant 0 : index
    %206 = vector.load %arg12[%c0_106, %c0_107, %c0_108] : memref<1x8x4xf32, #tpu.memory_space<vmem>>, vector<1x8x4xf32>
    %207 = vector.shape_cast %206 : vector<1x8x4xf32> to vector<8x4xf32>
    %208 = vector.shape_cast %205 : vector<8x4xf32> to vector<1x8x4xf32>
    tpu.vector_store %arg12[%c0_106, %c0_107, %c0_108], %208 {strides = array<i32>} : memref<1x8x4xf32, #tpu.memory_space<vmem>>, vector<1x8x4xf32>,
    return
  }
  func.func @transform_0(%arg0: i32) -> (i32, i32, i32) {
    %c0_i32 = arith.constant 0 : i32
    %c0_i32_0 = arith.constant 0 : i32
    %c0_i32_1 = arith.constant 0 : i32
    return %arg0, %c0_i32, %c0_i32_0 : i32, i32, i32
  }
  func.func @transform_1(%arg0: i32) -> (i32, i32, i32) {
    %c0_i32 = arith.constant 0 : i32
    %c0_i32_0 = arith.constant 0 : i32
    %c0_i32_1 = arith.constant 0 : i32
    %c0_i32_2 = arith.constant 0 : i32
    return %c0_i32, %c0_i32_0, %c0_i32_1 : i32, i32, i32
  }
  func.func @transform_2(%arg0: i32) -> (i32, i32) {
    %c0_i32 = arith.constant 0 : i32
    %c0_i32_0 = arith.constant 0 : i32
    %c0_i32_1 = arith.constant 0 : i32
    return %c0_i32, %c0_i32_0 : i32, i32
  }
  func.func @transform_3(%arg0: i32) -> (i32, i32, i32) {
    %c0_i32 = arith.constant 0 : i32
    %c0_i32_0 = arith.constant 0 : i32
    %c0_i32_1 = arith.constant 0 : i32
    %c0_i32_2 = arith.constant 0 : i32
    return %c0_i32, %c0_i32_0, %c0_i32_1 : i32, i32, i32
  }
  func.func @transform_4(%arg0: i32) -> (i32, i32) {
    %c0_i32 = arith.constant 0 : i32
    %c0_i32_0 = arith.constant 0 : i32
    %c0_i32_1 = arith.constant 0 : i32
    return %c0_i32, %c0_i32_0 : i32, i32
  }
  func.func @transform_5(%arg0: i32) -> (i32, i32, i32) {
    %c0_i32 = arith.constant 0 : i32
    %c0_i32_0 = arith.constant 0 : i32
    %c0_i32_1 = arith.constant 0 : i32
    %c0_i32_2 = arith.constant 0 : i32
    return %c0_i32, %c0_i32_0, %c0_i32_1 : i32, i32, i32
  }
  func.func @transform_6(%arg0: i32) -> (i32, i32) {
    %c0_i32 = arith.constant 0 : i32
    %c0_i32_0 = arith.constant 0 : i32
    %c0_i32_1 = arith.constant 0 : i32
    return %c0_i32, %c0_i32_0 : i32, i32
  }
  func.func @transform_7(%arg0: i32) -> (i32, i32, i32) {
    %c0_i32 = arith.constant 0 : i32
    %c0_i32_0 = arith.constant 0 : i32
    %c0_i32_1 = arith.constant 0 : i32
    %c0_i32_2 = arith.constant 0 : i32
    return %c0_i32, %c0_i32_0, %c0_i32_1 : i32, i32, i32
  }
  func.func @transform_8(%arg0: i32) -> (i32, i32) {
    %c0_i32 = arith.constant 0 : i32
    %c0_i32_0 = arith.constant 0 : i32
    %c0_i32_1 = arith.constant 0 : i32
    return %c0_i32, %c0_i32_0 : i32, i32
  }
  func.func @transform_9(%arg0: i32) -> (i32, i32, i32) {
    %c0_i32 = arith.constant 0 : i32
    %c0_i32_0 = arith.constant 0 : i32
    %c0_i32_1 = arith.constant 0 : i32
    %c0_i32_2 = arith.constant 0 : i32
    return %c0_i32, %c0_i32_0, %c0_i32_1 : i32, i32, i32
  }
  func.func @transform_10(%arg0: i32) -> (i32, i32) {
    %c0_i32 = arith.constant 0 : i32
    %c0_i32_0 = arith.constant 0 : i32
    %c0_i32_1 = arith.constant 0 : i32
    return %c0_i32, %c0_i32_0 : i32, i32
  }
  func.func @transform_11(%arg0: i32) -> (i32, i32, i32) {
    %c0_i32 = arith.constant 0 : i32
    %c0_i32_0 = arith.constant 0 : i32
    %c0_i32_1 = arith.constant 0 : i32
    return %arg0, %c0_i32, %c0_i32_0 : i32, i32, i32
  }
}

</mosaic_0001>

<llo_original>
// kernel: tpu_custom_call.1
$region0: #{tpu_custom_call.1}
  #allocation0 [shape = 'u32[]', space=smem, size = 0x4, offset = 0x4, fixed_abs, tag = 'smem constant byte address 0x4 - core index']
  #allocation1 [shape = 'u32[144,128]{1,0:T(1,128)}', space=vmem, size = 0x12000, scoped, tag = 'internal scratch']
  %s0 = inlined_call_operand.vmem [shape: f32[2,4,16], index: 0, kind: input, shape index: {}]
  %s1 = inlined_call_operand.vmem [shape: f32[3,8,4], index: 1, kind: input, shape index: {}]
  %s2 = inlined_call_operand.vmem [shape: f32[8,1], index: 2, kind: input, shape index: {}]
  %s3 = inlined_call_operand.vmem [shape: f32[3,8,8], index: 3, kind: input, shape index: {}]
  %s4 = inlined_call_operand.vmem [shape: f32[8,1], index: 4, kind: input, shape index: {}]
  %s5 = inlined_call_operand.vmem [shape: f32[3,16,8], index: 5, kind: input, shape index: {}]
  %s6 = inlined_call_operand.vmem [shape: f32[16,1], index: 6, kind: input, shape index: {}]
  %s7 = inlined_call_operand.vmem [shape: f32[3,16,16], index: 7, kind: input, shape index: {}]
  %s8 = inlined_call_operand.vmem [shape: f32[16,1], index: 8, kind: input, shape index: {}]
  %s9 = inlined_call_operand.vmem [shape: f32[3,8,16], index: 9, kind: input, shape index: {}]
  %s10 = inlined_call_operand.vmem [shape: f32[8,1], index: 10, kind: input, shape index: {}]
  %s11 = inlined_call_operand.vmem [shape: f32[2,8,4], index: 11, kind: output, shape index: {}]
  %s12 = sld [smem:[#allocation0]]
  $region77: #{tpu_custom_call.1} parent=0
    _
  %s14 = ssub.s32 1, %s12
  %s15 = scalar_select 0, %s14, %s12
  loop: start=0, step=1, limit=4
  $region2: #{tpu_custom_call.1} parent=0 // loop_pre_header
    _
  $region3: #{tpu_custom_call.1} parent=0 // loop_header
    %s17 = sphi 0, %s21
    %p18 = scmp.ge.s32.totalorder %s17, 4
    %s27 = sphi 0, %s29
    %s30 = sphi 0, %s27
    %s31 = sphi 0, %s30
    %s47 = sphi 0, %s31
    %s51 = sphi 0, %s51
    %s53 = sphi 0, %s51
    %s54 = sphi 0, %s53
    %s68 = sphi 0, %s54
    %s72 = sphi 0, %s72
    %s74 = sphi 0, %s72
    %s75 = sphi 0, %s74
    %s89 = sphi 0, %s75
    %s93 = sphi 0, %s93
    %s95 = sphi 0, %s93
    %s96 = sphi 0, %s95
    %s110 = sphi 0, %s96
    %s114 = sphi 0, %s114
    %s116 = sphi 0, %s114
    %s117 = sphi 0, %s116
    %s131 = sphi 0, %s117
    %s135 = sphi 0, %s135
    %s137 = sphi 0, %s135
    %s138 = sphi 0, %s137
    %s152 = sphi 0, %s138
    %s156 = sphi 0, %s156
    %s158 = sphi 0, %s156
    %s159 = sphi 0, %s158
    %s173 = sphi 0, %s159
    %s177 = sphi 0, %s177
    %s179 = sphi 0, %s177
    %s180 = sphi 0, %s179
    %s194 = sphi 0, %s180
    %s198 = sphi 0, %s198
    %s200 = sphi 0, %s198
    %s201 = sphi 0, %s200
    %s215 = sphi 0, %s201
    %s219 = sphi 0, %s219
    %s221 = sphi 0, %s219
    %s222 = sphi 0, %s221
    %s236 = sphi 0, %s222
    %s240 = sphi 0, %s240
    %s242 = sphi 0, %s240
    %s243 = sphi 0, %s242
    %s257 = sphi 0, %s243
    %s263 = sphi 0, %s265
    %s266 = sphi 0, %s263
    %s267 = sphi 0, %s266
    %s283 = sphi 0, %s267
  $region4: #{tpu_custom_call.1} parent=0 // loop_header_branch
    %20 = sbr.rel (%p18) target = $region8
  $region5: #{tpu_custom_call.1} parent=0 // loop_body
    %s22 = ssub.s32 %s17, 1
    %s23 = ssub.s32 %s17, 2
    %s24 = sadd.s32 %s17, 1
    %s25 = ssub.s32 %s17, %s24
    %p26 = scmp.eq.s32.totalorder %s25, 0
    %s28 = sadd.s32 %s27, 1
    %s29 = scalar_select %p26, %s27, %s28
    %p32 = pneg %p26
    %p33 = scmp.eq.s32.totalorder %s17, 1
    %p34 = por %p32, %p33
    %p35 = scmp.ne.s32.totalorder %s27, %s30
    %p36 = scmp.eq.s32.totalorder %s17, 0
    %p37 = por %p35, %p36
    %p38 = scmp.ne.s32.totalorder %s27, %s30
    %p39 = scmp.eq.s32.totalorder %s22, 1
    %p40 = por %p38, %p39
    %p41 = scmp.ne.s32.totalorder %s30, %s31
    %p42 = scmp.eq.s32.totalorder %s22, 0
    %p43 = por %p41, %p42
    %p44 = scmp.ne.s32.totalorder %s30, %s31
    %p45 = scmp.eq.s32.totalorder %s23, 1
    %p46 = por %p44, %p45
    %p48 = scmp.ne.s32.totalorder %s31, %s47
    %p49 = scmp.eq.s32.totalorder %s23, 0
    %p50 = por %p48, %p49
    %s52 = sadd.s32 %s51, 1
    %p55 = scmp.eq.s32.totalorder %s17, 1
    %p56 = scmp.ne.s32.totalorder %s51, %s53
    %p57 = scmp.eq.s32.totalorder %s17, 0
    %p58 = por %p56, %p57
    %p59 = scmp.ne.s32.totalorder %s51, %s53
    %p60 = scmp.eq.s32.totalorder %s22, 1
    %p61 = por %p59, %p60
    %p62 = scmp.ne.s32.totalorder %s53, %s54
    %p63 = scmp.eq.s32.totalorder %s22, 0
    %p64 = por %p62, %p63
    %p65 = scmp.ne.s32.totalorder %s53, %s54
    %p66 = scmp.eq.s32.totalorder %s23, 1
    %p67 = por %p65, %p66
    %p69 = scmp.ne.s32.totalorder %s54, %s68
    %p70 = scmp.eq.s32.totalorder %s23, 0
    %p71 = por %p69, %p70
    %s73 = sadd.s32 %s72, 1
    %p76 = scmp.eq.s32.totalorder %s17, 1
    %p77 = scmp.ne.s32.totalorder %s72, %s74
    %p78 = scmp.eq.s32.totalorder %s17, 0
    %p79 = por %p77, %p78
    %p80 = scmp.ne.s32.totalorder %s72, %s74
    %p81 = scmp.eq.s32.totalorder %s22, 1
    %p82 = por %p80, %p81
    %p83 = scmp.ne.s32.totalorder %s74, %s75
    %p84 = scmp.eq.s32.totalorder %s22, 0
    %p85 = por %p83, %p84
    %p86 = scmp.ne.s32.totalorder %s74, %s75
    %p87 = scmp.eq.s32.totalorder %s23, 1
    %p88 = por %p86, %p87
    %p90 = scmp.ne.s32.totalorder %s75, %s89
    %p91 = scmp.eq.s32.totalorder %s23, 0
    %p92 = por %p90, %p91
    %s94 = sadd.s32 %s93, 1
    %p97 = scmp.eq.s32.totalorder %s17, 1
    %p98 = scmp.ne.s32.totalorder %s93, %s95
    %p99 = scmp.eq.s32.totalorder %s17, 0
    %p100 = por %p98, %p99
    %p101 = scmp.ne.s32.totalorder %s93, %s95
    %p102 = scmp.eq.s32.totalorder %s22, 1
    %p103 = por %p101, %p102
    %p104 = scmp.ne.s32.totalorder %s95, %s96
    %p105 = scmp.eq.s32.totalorder %s22, 0
    %p106 = por %p104, %p105
    %p107 = scmp.ne.s32.totalorder %s95, %s96
    %p108 = scmp.eq.s32.totalorder %s23, 1
    %p109 = por %p107, %p108
    %p111 = scmp.ne.s32.totalorder %s96, %s110
    %p112 = scmp.eq.s32.totalorder %s23, 0
    %p113 = por %p111, %p112
    %s115 = sadd.s32 %s114, 1
    %p118 = scmp.eq.s32.totalorder %s17, 1
    %p119 = scmp.ne.s32.totalorder %s114, %s116
    %p120 = scmp.eq.s32.totalorder %s17, 0
    %p121 = por %p119, %p120
    %p122 = scmp.ne.s32.totalorder %s114, %s116
    %p123 = scmp.eq.s32.totalorder %s22, 1
    %p124 = por %p122, %p123
    %p125 = scmp.ne.s32.totalorder %s116, %s117
    %p126 = scmp.eq.s32.totalorder %s22, 0
    %p127 = por %p125, %p126
    %p128 = scmp.ne.s32.totalorder %s116, %s117
    %p129 = scmp.eq.s32.totalorder %s23, 1
    %p130 = por %p128, %p129
    %p132 = scmp.ne.s32.totalorder %s117, %s131
    %p133 = scmp.eq.s32.totalorder %s23, 0
    %p134 = por %p132, %p133
    %s136 = sadd.s32 %s135, 1
    %p139 = scmp.eq.s32.totalorder %s17, 1
    %p140 = scmp.ne.s32.totalorder %s135, %s137
    %p141 = scmp.eq.s32.totalorder %s17, 0
    %p142 = por %p140, %p141
    %p143 = scmp.ne.s32.totalorder %s135, %s137
    %p144 = scmp.eq.s32.totalorder %s22, 1
    %p145 = por %p143, %p144
    %p146 = scmp.ne.s32.totalorder %s137, %s138
    %p147 = scmp.eq.s32.totalorder %s22, 0
    %p148 = por %p146, %p147
    %p149 = scmp.ne.s32.totalorder %s137, %s138
    %p150 = scmp.eq.s32.totalorder %s23, 1
    %p151 = por %p149, %p150
    %p153 = scmp.ne.s32.totalorder %s138, %s152
    %p154 = scmp.eq.s32.totalorder %s23, 0
    %p155 = por %p153, %p154
    %s157 = sadd.s32 %s156, 1
    %p160 = scmp.eq.s32.totalorder %s17, 1
    %p161 = scmp.ne.s32.totalorder %s156, %s158
    %p162 = scmp.eq.s32.totalorder %s17, 0
    %p163 = por %p161, %p162
    %p164 = scmp.ne.s32.totalorder %s156, %s158
    %p165 = scmp.eq.s32.totalorder %s22, 1
    %p166 = por %p164, %p165
    %p167 = scmp.ne.s32.totalorder %s158, %s159
    %p168 = scmp.eq.s32.totalorder %s22, 0
    %p169 = por %p167, %p168
    %p170 = scmp.ne.s32.totalorder %s158, %s159
    %p171 = scmp.eq.s32.totalorder %s23, 1
    %p172 = por %p170, %p171
    %p174 = scmp.ne.s32.totalorder %s159, %s173
    %p175 = scmp.eq.s32.totalorder %s23, 0
    %p176 = por %p174, %p175
    %s178 = sadd.s32 %s177, 1
    %p181 = scmp.eq.s32.totalorder %s17, 1
    %p182 = scmp.ne.s32.totalorder %s177, %s179
    %p183 = scmp.eq.s32.totalorder %s17, 0
    %p184 = por %p182, %p183
    %p185 = scmp.ne.s32.totalorder %s177, %s179
    %p186 = scmp.eq.s32.totalorder %s22, 1
    %p187 = por %p185, %p186
    %p188 = scmp.ne.s32.totalorder %s179, %s180
    %p189 = scmp.eq.s32.totalorder %s22, 0
    %p190 = por %p188, %p189
    %p191 = scmp.ne.s32.totalorder %s179, %s180
    %p192 = scmp.eq.s32.totalorder %s23, 1
    %p193 = por %p191, %p192
    %p195 = scmp.ne.s32.totalorder %s180, %s194
    %p196 = scmp.eq.s32.totalorder %s23, 0
    %p197 = por %p195, %p196
    %s199 = sadd.s32 %s198, 1
    %p202 = scmp.eq.s32.totalorder %s17, 1
    %p203 = scmp.ne.s32.totalorder %s198, %s200
    %p204 = scmp.eq.s32.totalorder %s17, 0
    %p205 = por %p203, %p204
    %p206 = scmp.ne.s32.totalorder %s198, %s200
    %p207 = scmp.eq.s32.totalorder %s22, 1
    %p208 = por %p206, %p207
    %p209 = scmp.ne.s32.totalorder %s200, %s201
    %p210 = scmp.eq.s32.totalorder %s22, 0
    %p211 = por %p209, %p210
    %p212 = scmp.ne.s32.totalorder %s200, %s201
    %p213 = scmp.eq.s32.totalorder %s23, 1
    %p214 = por %p212, %p213
    %p216 = scmp.ne.s32.totalorder %s201, %s215
    %p217 = scmp.eq.s32.totalorder %s23, 0
    %p218 = por %p216, %p217
    %s220 = sadd.s32 %s219, 1
    %p223 = scmp.eq.s32.totalorder %s17, 1
    %p224 = scmp.ne.s32.totalorder %s219, %s221
    %p225 = scmp.eq.s32.totalorder %s17, 0
    %p226 = por %p224, %p225
    %p227 = scmp.ne.s32.totalorder %s219, %s221
    %p228 = scmp.eq.s32.totalorder %s22, 1
    %p229 = por %p227, %p228
    %p230 = scmp.ne.s32.totalorder %s221, %s222
    %p231 = scmp.eq.s32.totalorder %s22, 0
    %p232 = por %p230, %p231
    %p233 = scmp.ne.s32.totalorder %s221, %s222
    %p234 = scmp.eq.s32.totalorder %s23, 1
    %p235 = por %p233, %p234
    %p237 = scmp.ne.s32.totalorder %s222, %s236
    %p238 = scmp.eq.s32.totalorder %s23, 0
    %p239 = por %p237, %p238
    %s241 = sadd.s32 %s240, 1
    %p244 = scmp.eq.s32.totalorder %s17, 1
    %p245 = scmp.ne.s32.totalorder %s240, %s242
    %p246 = scmp.eq.s32.totalorder %s17, 0
    %p247 = por %p245, %p246
    %p248 = scmp.ne.s32.totalorder %s240, %s242
    %p249 = scmp.eq.s32.totalorder %s22, 1
    %p250 = por %p248, %p249
    %p251 = scmp.ne.s32.totalorder %s242, %s243
    %p252 = scmp.eq.s32.totalorder %s22, 0
    %p253 = por %p251, %p252
    %p254 = scmp.ne.s32.totalorder %s242, %s243
    %p255 = scmp.eq.s32.totalorder %s23, 1
    %p256 = por %p254, %p255
    %p258 = scmp.ne.s32.totalorder %s243, %s257
    %p259 = scmp.eq.s32.totalorder %s23, 0
    %p260 = por %p258, %p259
    %s261 = ssub.s32 %s17, %s24
    %p262 = scmp.eq.s32.totalorder %s261, 0
    %s264 = sadd.s32 %s263, 1
    %s265 = scalar_select %p262, %s263, %s264
    %p268 = pneg %p262
    %p269 = scmp.eq.s32.totalorder %s17, 1
    %p270 = por %p268, %p269
    %p271 = scmp.ne.s32.totalorder %s263, %s266
    %p272 = scmp.eq.s32.totalorder %s17, 0
    %p273 = por %p271, %p272
    %p274 = scmp.ne.s32.totalorder %s263, %s266
    %p275 = scmp.eq.s32.totalorder %s22, 1
    %p276 = por %p274, %p275
    %p277 = scmp.ne.s32.totalorder %s266, %s267
    %p278 = scmp.eq.s32.totalorder %s22, 0
    %p279 = por %p277, %p278
    %p280 = scmp.ne.s32.totalorder %s266, %s267
    %p281 = scmp.eq.s32.totalorder %s23, 1
    %p282 = por %p280, %p281
    %p284 = scmp.ne.s32.totalorder %s267, %s283
    %p285 = scmp.eq.s32.totalorder %s23, 0
    %p286 = por %p284, %p285
    %p287 = scmp.le.s32.totalorder 1, %s17
    %p288 = scmp.lt.s32.totalorder %s17, 3
    %p289 = pnand %p287, %p288
    %p290 = pneg %p289
    // Predicated region
    $region9: #{tpu_custom_call.1} parent=5 // pred_check
      _
    $region10: #{tpu_custom_call.1} parent=5 // pred_check_branch
      %292 = sbr.rel (%p289) target = $region12
    $region11: #{tpu_custom_call.1} parent=5 // pred_region
      %s293 = ssub.s32 %s17, 1
      // Predicated region
      $region13: #{tpu_custom_call.1} parent=11 // pred_check
        %p294 = pneg %p64
      $region14: #{tpu_custom_call.1} parent=11 // pred_check_branch
        %296 = sbr.rel (%p294) target = $region16
      $region15: #{tpu_custom_call.1} parent=11 // pred_region
        _
      $region16: #{tpu_custom_call.1} parent=11 // pred_fallthru
        _
      // Predicated region
      $region17: #{tpu_custom_call.1} parent=11 // pred_check
        %p297 = pneg %p85
      $region18: #{tpu_custom_call.1} parent=11 // pred_check_branch
        %299 = sbr.rel (%p297) target = $region20
      $region19: #{tpu_custom_call.1} parent=11 // pred_region
        _
      $region20: #{tpu_custom_call.1} parent=11 // pred_fallthru
        _
      // Predicated region
      $region21: #{tpu_custom_call.1} parent=11 // pred_check
        %p300 = pneg %p106
      $region22: #{tpu_custom_call.1} parent=11 // pred_check_branch
        %302 = sbr.rel (%p300) target = $region24
      $region23: #{tpu_custom_call.1} parent=11 // pred_region
        _
      $region24: #{tpu_custom_call.1} parent=11 // pred_fallthru
        _
      // Predicated region
      $region25: #{tpu_custom_call.1} parent=11 // pred_check
        %p303 = pneg %p127
      $region26: #{tpu_custom_call.1} parent=11 // pred_check_branch
        %305 = sbr.rel (%p303) target = $region28
      $region27: #{tpu_custom_call.1} parent=11 // pred_region
        _
      $region28: #{tpu_custom_call.1} parent=11 // pred_fallthru
        _
      // Predicated region
      $region29: #{tpu_custom_call.1} parent=11 // pred_check
        %p306 = pneg %p148
      $region30: #{tpu_custom_call.1} parent=11 // pred_check_branch
        %308 = sbr.rel (%p306) target = $region32
      $region31: #{tpu_custom_call.1} parent=11 // pred_region
        _
      $region32: #{tpu_custom_call.1} parent=11 // pred_fallthru
        _
      // Predicated region
      $region33: #{tpu_custom_call.1} parent=11 // pred_check
        %p309 = pneg %p169
      $region34: #{tpu_custom_call.1} parent=11 // pred_check_branch
        %311 = sbr.rel (%p309) target = $region36
      $region35: #{tpu_custom_call.1} parent=11 // pred_region
        _
      $region36: #{tpu_custom_call.1} parent=11 // pred_fallthru
        _
      // Predicated region
      $region37: #{tpu_custom_call.1} parent=11 // pred_check
        %p312 = pneg %p190
      $region38: #{tpu_custom_call.1} parent=11 // pred_check_branch
        %314 = sbr.rel (%p312) target = $region40
      $region39: #{tpu_custom_call.1} parent=11 // pred_region
        _
      $region40: #{tpu_custom_call.1} parent=11 // pred_fallthru
        _
      // Predicated region
      $region41: #{tpu_custom_call.1} parent=11 // pred_check
        %p315 = pneg %p211
      $region42: #{tpu_custom_call.1} parent=11 // pred_check_branch
        %317 = sbr.rel (%p315) target = $region44
      $region43: #{tpu_custom_call.1} parent=11 // pred_region
        _
      $region44: #{tpu_custom_call.1} parent=11 // pred_fallthru
        _
      // Predicated region
      $region45: #{tpu_custom_call.1} parent=11 // pred_check
        %p318 = pneg %p232
      $region46: #{tpu_custom_call.1} parent=11 // pred_check_branch
        %320 = sbr.rel (%p318) target = $region48
      $region47: #{tpu_custom_call.1} parent=11 // pred_region
        _
      $region48: #{tpu_custom_call.1} parent=11 // pred_fallthru
        _
      // Predicated region
      $region49: #{tpu_custom_call.1} parent=11 // pred_check
        %p321 = pneg %p253
      $region50: #{tpu_custom_call.1} parent=11 // pred_check_branch
        %323 = sbr.rel (%p321) target = $region52
      $region51: #{tpu_custom_call.1} parent=11 // pred_region
        _
      $region52: #{tpu_custom_call.1} parent=11 // pred_fallthru
        _
    $region12: #{tpu_custom_call.1} parent=5 // pred_fallthru
      _
    %p324 = scmp.lt.s32.totalorder %s17, 2
    // Predicated region
    $region53: #{tpu_custom_call.1} parent=5 // pred_check
      %p325 = pneg %p324
    $region54: #{tpu_custom_call.1} parent=5 // pred_check_branch
      %327 = sbr.rel (%p325) target = $region56
    $region55: #{tpu_custom_call.1} parent=5 // pred_region
      // Predicated region
      $region57: #{tpu_custom_call.1} parent=55 // pred_check
        %p328 = pneg %p37
      $region58: #{tpu_custom_call.1} parent=55 // pred_check_branch
        %330 = sbr.rel (%p328) target = $region60
      $region59: #{tpu_custom_call.1} parent=55 // pred_region
        %p331 = scmp.lt.s32.totalorder %s17, 1
        %s332 = scalar_select %p331, %s17, 1
        %s333 = smul.addr %s332, 4
        %s334 = scalar_lea.vmem %s0, %s333
      $region60: #{tpu_custom_call.1} parent=55 // pred_fallthru
        _
    $region56: #{tpu_custom_call.1} parent=5 // pred_fallthru
      _
    %p335 = scmp.le.s32.totalorder 1, %s17
    %p336 = scmp.lt.s32.totalorder %s17, 3
    %p337 = pnand %p335, %p336
    %p338 = pneg %p337
    // Predicated region
    $region61: #{tpu_custom_call.1} parent=5 // pred_check
      _
    $region62: #{tpu_custom_call.1} parent=5 // pred_check_branch
      %340 = sbr.rel (%p337) target = $region64
    $region63: #{tpu_custom_call.1} parent=5 // pred_region
      %s341 = ssub.s32 %s17, 1
      %p342 = scmp.lt.s32.totalorder %s22, 1
      %s343 = scalar_select %p342, %s22, 1
      %s344 = smul.addr %s343, 4
      %s345 = scalar_lea.vmem %s0, %s344
      %p346 = pneg %p43
      %p347 = pneg %p40
      %p348 = pneg %p64
      %p349 = pneg %p61
      %p350 = pneg %p85
      %p351 = pneg %p82
      %p352 = pneg %p106
      %p353 = pneg %p103
      %p354 = pneg %p127
      %p355 = pneg %p124
      %p356 = pneg %p148
      %p357 = pneg %p145
      %p358 = pneg %p169
      %p359 = pneg %p166
      %p360 = pneg %p190
      %p361 = pneg %p187
      %p362 = pneg %p211
      %p363 = pneg %p208
      %p364 = pneg %p232
      %p365 = pneg %p229
      %p366 = pneg %p253
      %p367 = pneg %p250
      %p368 = pneg %p279
      %p369 = pneg %p276
      %p370 = scmp.lt.s32.totalorder %s22, 1
      %s371 = scalar_select %p370, %s22, 1
      %s372 = smul.addr %s371, 8
      %s373 = scalar_lea.vmem %s11, %s372
      %p374 = scmp.lt.s32.totalorder %s22, 1
      %s375 = scalar_select %p374, %s22, 1
      %s376 = smul.addr %s375, 4
      %s377 = scalar_lea.vmem %s0, %s376
      %p378 = scmp.lt.s32.totalorder %s22, 1
      %s379 = scalar_select %p378, %s22, 1
      %s380 = smul.addr %s379, 8
      %s381 = scalar_lea.vmem %s11, %s380
      %v382 = vld [vmem:[%s377] sm:$0xf]
      %v383 = vlaneseq
      %v384 = vshrl.u32 %v383, 7
      %v385 = vadd.s32 %v384, 8
      %v386 = vlaneseq
      %v387 = vand.u32 %v386, 127
      %v388 = vld [vmem:[%s1] sm:$0xff]
      %vm389 = vcmask 31744
      %v391 = vsel %vm389, %v388, 0
      %vm393 = vcmask 1043456
      %v395 = vsel %vm393, %v382, 0
      %397 = vmatprep.subr.mxu0 0.0
      %398 = vmatpush1.msra.mxu0 0.0
      %399 = vmatprep.subr.mxu0 0.0
      %400 = vmatpush1.msra.mxu0 0.0
      %401 = vmatprep.subr.mxu0 0.0
      %402 = vmatpush1.msra.mxu0 0.0
      %403 = vmatprep.subr.mxu0 0.0
      %404 = vmatpush1.msra.mxu0 0.0
      %405 = vmatprep.subr.mxu0 0.0
      %406 = vmatpush1.msra.mxu0 0.0
      %407 = vmatprep.subr.mxu0 0.0
      %408 = vmatpush1.msra.mxu0 0.0
      %409 = vmatprep.subr.mxu0 0.0
      %410 = vmatpush1.msra.mxu0 0.0
      %411 = vmatprep.subr.mxu0 0.0
      %412 = vmatpush1.msra.mxu0 0.0
      %413 = vmatprep.subr.mxu0 0.0
      %414 = vmatpush1.msra.mxu0 0.0
      %415 = vmatprep.subr.mxu0 0.0
      %416 = vmatpush1.msra.mxu0 0.0
      %417 = vmatprep.subr.mxu0 0.0
      %418 = vmatpush1.msra.mxu0 0.0
      %419 = vmatprep.subr.mxu0 0.0
      %420 = vmatpush1.msra.mxu0 0.0
      %421 = vmatprep.subr.mxu0 0.0
      %422 = vmatpush1.msra.mxu0 0.0
      %423 = vmatprep.subr.mxu0 0.0
      %424 = vmatpush1.msra.mxu0 0.0
      %425 = vmatprep.subr.mxu0 0.0
      %426 = vmatpush1.msra.mxu0 0.0
      %427 = vmatprep.subr.mxu0 0.0
      %428 = vmatpush1.msra.mxu0 %v395
      %429 = vmatprep.subr.mxu0 0.0
      %430 = vmatpush2.msra.mxu0 0.0
      %431 = vmatprep.subr.mxu0 0.0
      %432 = vmatpush2.msra.mxu0 0.0
      %433 = vmatprep.subr.mxu0 0.0
      %434 = vmatpush2.msra.mxu0 0.0
      %435 = vmatprep.subr.mxu0 0.0
      %436 = vmatpush2.msra.mxu0 0.0
      %437 = vmatprep.subr.mxu0 0.0
      %438 = vmatpush2.msra.mxu0 0.0
      %439 = vmatprep.subr.mxu0 0.0
      %440 = vmatpush2.msra.mxu0 0.0
      %441 = vmatprep.subr.mxu0 0.0
      %442 = vmatpush2.msra.mxu0 0.0
      %443 = vmatprep.subr.mxu0 0.0
      %444 = vmatpush2.msra.mxu0 0.0
      %445 = vmatprep.subr.mxu0 0.0
      %446 = vmatpush2.msra.mxu0 0.0
      %447 = vmatprep.subr.mxu0 0.0
      %448 = vmatpush2.msra.mxu0 0.0
      %449 = vmatprep.subr.mxu0 0.0
      %450 = vmatpush2.msra.mxu0 0.0
      %451 = vmatprep.subr.mxu0 0.0
      %452 = vmatpush2.msra.mxu0 0.0
      %453 = vmatprep.subr.mxu0 0.0
      %454 = vmatpush2.msra.mxu0 0.0
      %455 = vmatprep.subr.mxu0 0.0
      %456 = vmatpush2.msra.mxu0 0.0
      %457 = vmatprep.subr.mxu0 0.0
      %458 = vmatpush2.msra.mxu0 0.0
      %459 = vmatprep.subr.mxu0 0.0
      %460 = vmatpush2.msra.mxu0 0.0
      %461 = vmatprep.mubr.f32.mxu0 0.0
      %462 = vmatmul.mubr.f32.gmra.mxu0 %v391
      %v463 = vpop.f32.mrf.mxu0
      %v464 = vadd.f32 0.0, %v463
      %v465 = vpop.f32.mrf.mxu0
      %466 = vdwg.mxu0
      %v467 = vadd.s32 %v387, 4294967295
      %vm468 = vcmp.eq.s32.totalorder %v384, %v467
      %vm469 = vcmp.eq.s32.totalorder %v385, %v467
      %v470 = vsel %vm468, 1, 0
      %v471 = vsel %vm469, 1, 0
      %v472 = vcvt.s32.f32 %v470
      %v473 = vcvt.s32.f32 %v471
      %s474 = scalar_lea.vmem %s1, 8
      %v475 = vld [vmem:[%s474] sm:$0xff]
      %v477 = vsel %vm389, %v475, 0
      %479 = vmatprep.subr.mxu0 0.0
      %480 = vmatpush1.msra.mxu0 0.0
      %481 = vmatprep.subr.mxu0 0.0
      %482 = vmatpush1.msra.mxu0 0.0
      %483 = vmatprep.subr.mxu0 0.0
      %484 = vmatpush1.msra.mxu0 0.0
      %485 = vmatprep.subr.mxu0 0.0
      %486 = vmatpush1.msra.mxu0 0.0
      %487 = vmatprep.subr.mxu0 0.0
      %488 = vmatpush1.msra.mxu0 0.0
      %489 = vmatprep.subr.mxu0 0.0
      %490 = vmatpush1.msra.mxu0 0.0
      %491 = vmatprep.subr.mxu0 0.0
      %492 = vmatpush1.msra.mxu0 0.0
      %493 = vmatprep.subr.mxu0 0.0
      %494 = vmatpush1.msra.mxu0 0.0
      %495 = vmatprep.subr.mxu0 0.0
      %496 = vmatpush1.msra.mxu0 0.0
      %497 = vmatprep.subr.mxu0 0.0
      %498 = vmatpush1.msra.mxu0 0.0
      %499 = vmatprep.subr.mxu0 0.0
      %500 = vmatpush1.msra.mxu0 0.0
      %501 = vmatprep.subr.mxu0 0.0
      %502 = vmatpush1.msra.mxu0 0.0
      %503 = vmatprep.subr.mxu0 0.0
      %504 = vmatpush1.msra.mxu0 0.0
      %505 = vmatprep.subr.mxu0 0.0
      %506 = vmatpush1.msra.mxu0 0.0
      %507 = vmatprep.subr.mxu0 0.0
      %508 = vmatpush1.msra.mxu0 0.0
      %509 = vmatprep.subr.mxu0 0.0
      %510 = vmatpush1.msra.mxu0 %v395
      %511 = vmatprep.subr.mxu0 0.0
      %512 = vmatpush2.msra.mxu0 0.0
      %513 = vmatprep.subr.mxu0 0.0
      %514 = vmatpush2.msra.mxu0 0.0
      %515 = vmatprep.subr.mxu0 0.0
      %516 = vmatpush2.msra.mxu0 0.0
      %517 = vmatprep.subr.mxu0 0.0
      %518 = vmatpush2.msra.mxu0 0.0
      %519 = vmatprep.subr.mxu0 0.0
      %520 = vmatpush2.msra.mxu0 0.0
      %521 = vmatprep.subr.mxu0 0.0
      %522 = vmatpush2.msra.mxu0 0.0
      %523 = vmatprep.subr.mxu0 0.0
      %524 = vmatpush2.msra.mxu0 0.0
      %525 = vmatprep.subr.mxu0 0.0
      %526 = vmatpush2.msra.mxu0 0.0
      %527 = vmatprep.subr.mxu0 0.0
      %528 = vmatpush2.msra.mxu0 0.0
      %529 = vmatprep.subr.mxu0 0.0
      %530 = vmatpush2.msra.mxu0 0.0
      %531 = vmatprep.subr.mxu0 0.0
      %532 = vmatpush2.msra.mxu0 0.0
      %533 = vmatprep.subr.mxu0 0.0
      %534 = vmatpush2.msra.mxu0 0.0
      %535 = vmatprep.subr.mxu0 0.0
      %536 = vmatpush2.msra.mxu0 0.0
      %537 = vmatprep.subr.mxu0 0.0
      %538 = vmatpush2.msra.mxu0 0.0
      %539 = vmatprep.subr.mxu0 0.0
      %540 = vmatpush2.msra.mxu0 0.0
      %541 = vmatprep.subr.mxu0 0.0
      %542 = vmatpush2.msra.mxu0 0.0
      %543 = vmatprep.mubr.f32.mxu0 0.0
      %544 = vmatmul.mubr.f32.gmra.mxu0 %v477
      %v545 = vpop.f32.mrf.mxu0
      %v546 = vadd.f32 0.0, %v545
      %v547 = vpop.f32.mrf.mxu0
      %548 = vdwg.mxu0
      %vm549 = vcmask 130048
      %v551 = vsel %vm549, %v464, 0
      %553 = vmatprep.subr.mxu0 0.0
      %554 = vmatpush1.msra.mxu0 0.0
      %555 = vmatprep.subr.mxu0 0.0
      %556 = vmatpush1.msra.mxu0 0.0
      %557 = vmatprep.subr.mxu0 0.0
      %558 = vmatpush1.msra.mxu0 0.0
      %559 = vmatprep.subr.mxu0 0.0
      %560 = vmatpush1.msra.mxu0 0.0
      %561 = vmatprep.subr.mxu0 0.0
      %562 = vmatpush1.msra.mxu0 0.0
      %563 = vmatprep.subr.mxu0 0.0
      %564 = vmatpush1.msra.mxu0 0.0
      %565 = vmatprep.subr.mxu0 0.0
      %566 = vmatpush1.msra.mxu0 0.0
      %567 = vmatprep.subr.mxu0 0.0
      %568 = vmatpush1.msra.mxu0 0.0
      %569 = vmatprep.subr.mxu0 0.0
      %570 = vmatpush1.msra.mxu0 0.0
      %571 = vmatprep.subr.mxu0 0.0
      %572 = vmatpush1.msra.mxu0 0.0
      %573 = vmatprep.subr.mxu0 0.0
      %574 = vmatpush1.msra.mxu0 0.0
      %575 = vmatprep.subr.mxu0 0.0
      %576 = vmatpush1.msra.mxu0 0.0
      %577 = vmatprep.subr.mxu0 0.0
      %578 = vmatpush1.msra.mxu0 0.0
      %579 = vmatprep.subr.mxu0 0.0
      %580 = vmatpush1.msra.mxu0 0.0
      %581 = vmatprep.subr.mxu0 0.0
      %582 = vmatpush1.msra.mxu0 %v473
      %583 = vmatprep.subr.mxu0 0.0
      %584 = vmatpush1.msra.mxu0 %v472
      %585 = vmatprep.subr.mxu0 0.0
      %586 = vmatpush2.msra.mxu0 0.0
      %587 = vmatprep.subr.mxu0 0.0
      %588 = vmatpush2.msra.mxu0 0.0
      %589 = vmatprep.subr.mxu0 0.0
      %590 = vmatpush2.msra.mxu0 0.0
      %591 = vmatprep.subr.mxu0 0.0
      %592 = vmatpush2.msra.mxu0 0.0
      %593 = vmatprep.subr.mxu0 0.0
      %594 = vmatpush2.msra.mxu0 0.0
      %595 = vmatprep.subr.mxu0 0.0
      %596 = vmatpush2.msra.mxu0 0.0
      %597 = vmatprep.subr.mxu0 0.0
      %598 = vmatpush2.msra.mxu0 0.0
      %599 = vmatprep.subr.mxu0 0.0
      %600 = vmatpush2.msra.mxu0 0.0
      %601 = vmatprep.subr.mxu0 0.0
      %602 = vmatpush2.msra.mxu0 0.0
      %603 = vmatprep.subr.mxu0 0.0
      %604 = vmatpush2.msra.mxu0 0.0
      %605 = vmatprep.subr.mxu0 0.0
      %606 = vmatpush2.msra.mxu0 0.0
      %607 = vmatprep.subr.mxu0 0.0
      %608 = vmatpush2.msra.mxu0 0.0
      %609 = vmatprep.subr.mxu0 0.0
      %610 = vmatpush2.msra.mxu0 0.0
      %611 = vmatprep.subr.mxu0 0.0
      %612 = vmatpush2.msra.mxu0 0.0
      %613 = vmatprep.subr.mxu0 0.0
      %614 = vmatpush2.msra.mxu0 0.0
      %615 = vmatprep.subr.mxu0 0.0
      %616 = vmatpush2.msra.mxu0 0.0
      %617 = vmatprep.mubr.f32.mxu0 0.0
      %618 = vmatmul.mubr.f32.gmra.mxu0 %v551
      %v619 = vpop.f32.mrf.mxu0
      %v620 = vadd.f32 %v546, %v619
      %v621 = vpop.f32.mrf.mxu0
      %622 = vdwg.mxu0
      %s623 = scalar_lea.vmem %s1, 16
      %v624 = vld [vmem:[%s623] sm:$0xff]
      %v626 = vsel %vm389, %v624, 0
      %628 = vmatprep.subr.mxu0 0.0
      %629 = vmatpush1.msra.mxu0 0.0
      %630 = vmatprep.subr.mxu0 0.0
      %631 = vmatpush1.msra.mxu0 0.0
      %632 = vmatprep.subr.mxu0 0.0
      %633 = vmatpush1.msra.mxu0 0.0
      %634 = vmatprep.subr.mxu0 0.0
      %635 = vmatpush1.msra.mxu0 0.0
      %636 = vmatprep.subr.mxu0 0.0
      %637 = vmatpush1.msra.mxu0 0.0
      %638 = vmatprep.subr.mxu0 0.0
      %639 = vmatpush1.msra.mxu0 0.0
      %640 = vmatprep.subr.mxu0 0.0
      %641 = vmatpush1.msra.mxu0 0.0
      %642 = vmatprep.subr.mxu0 0.0
      %643 = vmatpush1.msra.mxu0 0.0
      %644 = vmatprep.subr.mxu0 0.0
      %645 = vmatpush1.msra.mxu0 0.0
      %646 = vmatprep.subr.mxu0 0.0
      %647 = vmatpush1.msra.mxu0 0.0
      %648 = vmatprep.subr.mxu0 0.0
      %649 = vmatpush1.msra.mxu0 0.0
      %650 = vmatprep.subr.mxu0 0.0
      %651 = vmatpush1.msra.mxu0 0.0
      %652 = vmatprep.subr.mxu0 0.0
      %653 = vmatpush1.msra.mxu0 0.0
      %654 = vmatprep.subr.mxu0 0.0
      %655 = vmatpush1.msra.mxu0 0.0
      %656 = vmatprep.subr.mxu0 0.0
      %657 = vmatpush1.msra.mxu0 0.0
      %658 = vmatprep.subr.mxu0 0.0
      %659 = vmatpush1.msra.mxu0 %v395
      %660 = vmatprep.subr.mxu0 0.0
      %661 = vmatpush2.msra.mxu0 0.0
      %662 = vmatprep.subr.mxu0 0.0
      %663 = vmatpush2.msra.mxu0 0.0
      %664 = vmatprep.subr.mxu0 0.0
      %665 = vmatpush2.msra.mxu0 0.0
      %666 = vmatprep.subr.mxu0 0.0
      %667 = vmatpush2.msra.mxu0 0.0
      %668 = vmatprep.subr.mxu0 0.0
      %669 = vmatpush2.msra.mxu0 0.0
      %670 = vmatprep.subr.mxu0 0.0
      %671 = vmatpush2.msra.mxu0 0.0
      %672 = vmatprep.subr.mxu0 0.0
      %673 = vmatpush2.msra.mxu0 0.0
      %674 = vmatprep.subr.mxu0 0.0
      %675 = vmatpush2.msra.mxu0 0.0
      %676 = vmatprep.subr.mxu0 0.0
      %677 = vmatpush2.msra.mxu0 0.0
      %678 = vmatprep.subr.mxu0 0.0
      %679 = vmatpush2.msra.mxu0 0.0
      %680 = vmatprep.subr.mxu0 0.0
      %681 = vmatpush2.msra.mxu0 0.0
      %682 = vmatprep.subr.mxu0 0.0
      %683 = vmatpush2.msra.mxu0 0.0
      %684 = vmatprep.subr.mxu0 0.0
      %685 = vmatpush2.msra.mxu0 0.0
      %686 = vmatprep.subr.mxu0 0.0
      %687 = vmatpush2.msra.mxu0 0.0
      %688 = vmatprep.subr.mxu0 0.0
      %689 = vmatpush2.msra.mxu0 0.0
      %690 = vmatprep.subr.mxu0 0.0
      %691 = vmatpush2.msra.mxu0 0.0
      %692 = vmatprep.mubr.f32.mxu0 0.0
      %693 = vmatmul.mubr.f32.gmra.mxu0 %v626
      %v694 = vpop.f32.mrf.mxu0
      %v695 = vadd.f32 0.0, %v694
      %v696 = vpop.f32.mrf.mxu0
      %697 = vdwg.mxu0
      %v698 = vadd.s32 %v387, 1
      %vm699 = vcmp.eq.s32.totalorder %v384, %v698
      %vm700 = vcmp.eq.s32.totalorder %v385, %v698
      %v701 = vsel %vm699, 1, 0
      %v702 = vsel %vm700, 1, 0
      %v703 = vcvt.s32.f32 %v701
      %v704 = vcvt.s32.f32 %v702
      %v706 = vsel %vm549, %v695, 0
      %708 = vmatprep.subr.mxu0 0.0
      %709 = vmatpush1.msra.mxu0 0.0
      %710 = vmatprep.subr.mxu0 0.0
      %711 = vmatpush1.msra.mxu0 0.0
      %712 = vmatprep.subr.mxu0 0.0
      %713 = vmatpush1.msra.mxu0 0.0
      %714 = vmatprep.subr.mxu0 0.0
      %715 = vmatpush1.msra.mxu0 0.0
      %716 = vmatprep.subr.mxu0 0.0
      %717 = vmatpush1.msra.mxu0 0.0
      %718 = vmatprep.subr.mxu0 0.0
      %719 = vmatpush1.msra.mxu0 0.0
      %720 = vmatprep.subr.mxu0 0.0
      %721 = vmatpush1.msra.mxu0 0.0
      %722 = vmatprep.subr.mxu0 0.0
      %723 = vmatpush1.msra.mxu0 0.0
      %724 = vmatprep.subr.mxu0 0.0
      %725 = vmatpush1.msra.mxu0 0.0
      %726 = vmatprep.subr.mxu0 0.0
      %727 = vmatpush1.msra.mxu0 0.0
      %728 = vmatprep.subr.mxu0 0.0
      %729 = vmatpush1.msra.mxu0 0.0
      %730 = vmatprep.subr.mxu0 0.0
      %731 = vmatpush1.msra.mxu0 0.0
      %732 = vmatprep.subr.mxu0 0.0
      %733 = vmatpush1.msra.mxu0 0.0
      %734 = vmatprep.subr.mxu0 0.0
      %735 = vmatpush1.msra.mxu0 0.0
      %736 = vmatprep.subr.mxu0 0.0
      %737 = vmatpush1.msra.mxu0 %v704
      %738 = vmatprep.subr.mxu0 0.0
      %739 = vmatpush1.msra.mxu0 %v703
      %740 = vmatprep.subr.mxu0 0.0
      %741 = vmatpush2.msra.mxu0 0.0
      %742 = vmatprep.subr.mxu0 0.0
      %743 = vmatpush2.msra.mxu0 0.0
      %744 = vmatprep.subr.mxu0 0.0
      %745 = vmatpush2.msra.mxu0 0.0
      %746 = vmatprep.subr.mxu0 0.0
      %747 = vmatpush2.msra.mxu0 0.0
      %748 = vmatprep.subr.mxu0 0.0
      %749 = vmatpush2.msra.mxu0 0.0
      %750 = vmatprep.subr.mxu0 0.0
      %751 = vmatpush2.msra.mxu0 0.0
      %752 = vmatprep.subr.mxu0 0.0
      %753 = vmatpush2.msra.mxu0 0.0
      %754 = vmatprep.subr.mxu0 0.0
      %755 = vmatpush2.msra.mxu0 0.0
      %756 = vmatprep.subr.mxu0 0.0
      %757 = vmatpush2.msra.mxu0 0.0
      %758 = vmatprep.subr.mxu0 0.0
      %759 = vmatpush2.msra.mxu0 0.0
      %760 = vmatprep.subr.mxu0 0.0
      %761 = vmatpush2.msra.mxu0 0.0
      %762 = vmatprep.subr.mxu0 0.0
      %763 = vmatpush2.msra.mxu0 0.0
      %764 = vmatprep.subr.mxu0 0.0
      %765 = vmatpush2.msra.mxu0 0.0
      %766 = vmatprep.subr.mxu0 0.0
      %767 = vmatpush2.msra.mxu0 0.0
      %768 = vmatprep.subr.mxu0 0.0
      %769 = vmatpush2.msra.mxu0 0.0
      %770 = vmatprep.subr.mxu0 0.0
      %771 = vmatpush2.msra.mxu0 0.0
      %772 = vmatprep.mubr.f32.mxu0 0.0
      %773 = vmatmul.mubr.f32.gmra.mxu0 %v706
      %v774 = vpop.f32.mrf.mxu0
      %v775 = vadd.f32 0.0, %v774
      %v776 = vpop.f32.mrf.mxu0
      %777 = vdwg.mxu0
      %v778 = vadd.f32 %v620, %v775
      %v779 = vld [vmem:[%s2] sm:$0xff]
      %781 = vset.pattern.permute.xlu0 0
      %782 = vperm.xlu0 %781, %v779
      %v783 = vpop.permute.xlu0 %782
      %v785 = vadd.f32 %v778, %v783
      %v786 = vsub.f32 0.0, %v785
      %v787 = vmul.f32 %v786, 1.442695
      %v788 = vpow.pop %v787
      %v789 = vadd.f32 %v788, 1.0
      %v790 = vrcp.pop %v789
      %v791 = vld [vmem:[%s3] sm:$0xff]
      %vm792 = vcmask 64512
      %v794 = vsel %vm792, %v791, 0
      %796 = vmatprep.subr.mxu0 0.0
      %797 = vmatpush1.msra.mxu0 0.0
      %798 = vmatprep.subr.mxu0 0.0
      %799 = vmatpush1.msra.mxu0 0.0
      %800 = vmatprep.subr.mxu0 0.0
      %801 = vmatpush1.msra.mxu0 0.0
      %802 = vmatprep.subr.mxu0 0.0
      %803 = vmatpush1.msra.mxu0 0.0
      %804 = vmatprep.subr.mxu0 0.0
      %805 = vmatpush1.msra.mxu0 0.0
      %806 = vmatprep.subr.mxu0 0.0
      %807 = vmatpush1.msra.mxu0 0.0
      %808 = vmatprep.subr.mxu0 0.0
      %809 = vmatpush1.msra.mxu0 0.0
      %810 = vmatprep.subr.mxu0 0.0
      %811 = vmatpush1.msra.mxu0 0.0
      %812 = vmatprep.subr.mxu0 0.0
      %813 = vmatpush1.msra.mxu0 0.0
      %814 = vmatprep.subr.mxu0 0.0
      %815 = vmatpush1.msra.mxu0 0.0
      %816 = vmatprep.subr.mxu0 0.0
      %817 = vmatpush1.msra.mxu0 0.0
      %818 = vmatprep.subr.mxu0 0.0
      %819 = vmatpush1.msra.mxu0 0.0
      %820 = vmatprep.subr.mxu0 0.0
      %821 = vmatpush1.msra.mxu0 0.0
      %822 = vmatprep.subr.mxu0 0.0
      %823 = vmatpush1.msra.mxu0 0.0
      %824 = vmatprep.subr.mxu0 0.0
      %825 = vmatpush1.msra.mxu0 0.0
      %826 = vmatprep.subr.mxu0 0.0
      %827 = vmatpush1.msra.mxu0 %v790
      %828 = vmatprep.subr.mxu0 0.0
      %829 = vmatpush2.msra.mxu0 0.0
      %830 = vmatprep.subr.mxu0 0.0
      %831 = vmatpush2.msra.mxu0 0.0
      %832 = vmatprep.subr.mxu0 0.0
      %833 = vmatpush2.msra.mxu0 0.0
      %834 = vmatprep.subr.mxu0 0.0
      %835 = vmatpush2.msra.mxu0 0.0
      %836 = vmatprep.subr.mxu0 0.0
      %837 = vmatpush2.msra.mxu0 0.0
      %838 = vmatprep.subr.mxu0 0.0
      %839 = vmatpush2.msra.mxu0 0.0
      %840 = vmatprep.subr.mxu0 0.0
      %841 = vmatpush2.msra.mxu0 0.0
      %842 = vmatprep.subr.mxu0 0.0
      %843 = vmatpush2.msra.mxu0 0.0
      %844 = vmatprep.subr.mxu0 0.0
      %845 = vmatpush2.msra.mxu0 0.0
      %846 = vmatprep.subr.mxu0 0.0
      %847 = vmatpush2.msra.mxu0 0.0
      %848 = vmatprep.subr.mxu0 0.0
      %849 = vmatpush2.msra.mxu0 0.0
      %850 = vmatprep.subr.mxu0 0.0
      %851 = vmatpush2.msra.mxu0 0.0
      %852 = vmatprep.subr.mxu0 0.0
      %853 = vmatpush2.msra.mxu0 0.0
      %854 = vmatprep.subr.mxu0 0.0
      %855 = vmatpush2.msra.mxu0 0.0
      %856 = vmatprep.subr.mxu0 0.0
      %857 = vmatpush2.msra.mxu0 0.0
      %858 = vmatprep.subr.mxu0 0.0
      %859 = vmatpush2.msra.mxu0 0.0
      %860 = vmatprep.mubr.f32.mxu0 0.0
      %861 = vmatmul.mubr.f32.gmra.mxu0 %v794
      %v862 = vpop.f32.mrf.mxu0
      %v863 = vadd.f32 0.0, %v862
      %v864 = vpop.f32.mrf.mxu0
      %865 = vdwg.mxu0
      %s866 = scalar_lea.vmem %s3, 8
      %v867 = vld [vmem:[%s866] sm:$0xff]
      %v869 = vsel %vm792, %v867, 0
      %871 = vmatprep.subr.mxu0 0.0
      %872 = vmatpush1.msra.mxu0 0.0
      %873 = vmatprep.subr.mxu0 0.0
      %874 = vmatpush1.msra.mxu0 0.0
      %875 = vmatprep.subr.mxu0 0.0
      %876 = vmatpush1.msra.mxu0 0.0
      %877 = vmatprep.subr.mxu0 0.0
      %878 = vmatpush1.msra.mxu0 0.0
      %879 = vmatprep.subr.mxu0 0.0
      %880 = vmatpush1.msra.mxu0 0.0
      %881 = vmatprep.subr.mxu0 0.0
      %882 = vmatpush1.msra.mxu0 0.0
      %883 = vmatprep.subr.mxu0 0.0
      %884 = vmatpush1.msra.mxu0 0.0
      %885 = vmatprep.subr.mxu0 0.0
      %886 = vmatpush1.msra.mxu0 0.0
      %887 = vmatprep.subr.mxu0 0.0
      %888 = vmatpush1.msra.mxu0 0.0
      %889 = vmatprep.subr.mxu0 0.0
      %890 = vmatpush1.msra.mxu0 0.0
      %891 = vmatprep.subr.mxu0 0.0
      %892 = vmatpush1.msra.mxu0 0.0
      %893 = vmatprep.subr.mxu0 0.0
      %894 = vmatpush1.msra.mxu0 0.0
      %895 = vmatprep.subr.mxu0 0.0
      %896 = vmatpush1.msra.mxu0 0.0
      %897 = vmatprep.subr.mxu0 0.0
      %898 = vmatpush1.msra.mxu0 0.0
      %899 = vmatprep.subr.mxu0 0.0
      %900 = vmatpush1.msra.mxu0 0.0
      %901 = vmatprep.subr.mxu0 0.0
      %902 = vmatpush1.msra.mxu0 %v790
      %903 = vmatprep.subr.mxu0 0.0
      %904 = vmatpush2.msra.mxu0 0.0
      %905 = vmatprep.subr.mxu0 0.0
      %906 = vmatpush2.msra.mxu0 0.0
      %907 = vmatprep.subr.mxu0 0.0
      %908 = vmatpush2.msra.mxu0 0.0
      %909 = vmatprep.subr.mxu0 0.0
      %910 = vmatpush2.msra.mxu0 0.0
      %911 = vmatprep.subr.mxu0 0.0
      %912 = vmatpush2.msra.mxu0 0.0
      %913 = vmatprep.subr.mxu0 0.0
      %914 = vmatpush2.msra.mxu0 0.0
      %915 = vmatprep.subr.mxu0 0.0
      %916 = vmatpush2.msra.mxu0 0.0
      %917 = vmatprep.subr.mxu0 0.0
      %918 = vmatpush2.msra.mxu0 0.0
      %919 = vmatprep.subr.mxu0 0.0
      %920 = vmatpush2.msra.mxu0 0.0
      %921 = vmatprep.subr.mxu0 0.0
      %922 = vmatpush2.msra.mxu0 0.0
      %923 = vmatprep.subr.mxu0 0.0
      %924 = vmatpush2.msra.mxu0 0.0
      %925 = vmatprep.subr.mxu0 0.0
      %926 = vmatpush2.msra.mxu0 0.0
      %927 = vmatprep.subr.mxu0 0.0
      %928 = vmatpush2.msra.mxu0 0.0
      %929 = vmatprep.subr.mxu0 0.0
      %930 = vmatpush2.msra.mxu0 0.0
      %931 = vmatprep.subr.mxu0 0.0
      %932 = vmatpush2.msra.mxu0 0.0
      %933 = vmatprep.subr.mxu0 0.0
      %934 = vmatpush2.msra.mxu0 0.0
      %935 = vmatprep.mubr.f32.mxu0 0.0
      %936 = vmatmul.mubr.f32.gmra.mxu0 %v869
      %v937 = vpop.f32.mrf.mxu0
      %v938 = vadd.f32 0.0, %v937
      %v939 = vpop.f32.mrf.mxu0
      %940 = vdwg.mxu0
      %v942 = vsel %vm549, %v863, 0
      %944 = vmatprep.subr.mxu0 0.0
      %945 = vmatpush1.msra.mxu0 0.0
      %946 = vmatprep.subr.mxu0 0.0
      %947 = vmatpush1.msra.mxu0 0.0
      %948 = vmatprep.subr.mxu0 0.0
      %949 = vmatpush1.msra.mxu0 0.0
      %950 = vmatprep.subr.mxu0 0.0
      %951 = vmatpush1.msra.mxu0 0.0
      %952 = vmatprep.subr.mxu0 0.0
      %953 = vmatpush1.msra.mxu0 0.0
      %954 = vmatprep.subr.mxu0 0.0
      %955 = vmatpush1.msra.mxu0 0.0
      %956 = vmatprep.subr.mxu0 0.0
      %957 = vmatpush1.msra.mxu0 0.0
      %958 = vmatprep.subr.mxu0 0.0
      %959 = vmatpush1.msra.mxu0 0.0
      %960 = vmatprep.subr.mxu0 0.0
      %961 = vmatpush1.msra.mxu0 0.0
      %962 = vmatprep.subr.mxu0 0.0
      %963 = vmatpush1.msra.mxu0 0.0
      %964 = vmatprep.subr.mxu0 0.0
      %965 = vmatpush1.msra.mxu0 0.0
      %966 = vmatprep.subr.mxu0 0.0
      %967 = vmatpush1.msra.mxu0 0.0
      %968 = vmatprep.subr.mxu0 0.0
      %969 = vmatpush1.msra.mxu0 0.0
      %970 = vmatprep.subr.mxu0 0.0
      %971 = vmatpush1.msra.mxu0 0.0
      %972 = vmatprep.subr.mxu0 0.0
      %973 = vmatpush1.msra.mxu0 %v473
      %974 = vmatprep.subr.mxu0 0.0
      %975 = vmatpush1.msra.mxu0 %v472
      %976 = vmatprep.subr.mxu0 0.0
      %977 = vmatpush2.msra.mxu0 0.0
      %978 = vmatprep.subr.mxu0 0.0
      %979 = vmatpush2.msra.mxu0 0.0
      %980 = vmatprep.subr.mxu0 0.0
      %981 = vmatpush2.msra.mxu0 0.0
      %982 = vmatprep.subr.mxu0 0.0
      %983 = vmatpush2.msra.mxu0 0.0
      %984 = vmatprep.subr.mxu0 0.0
      %985 = vmatpush2.msra.mxu0 0.0
      %986 = vmatprep.subr.mxu0 0.0
      %987 = vmatpush2.msra.mxu0 0.0
      %988 = vmatprep.subr.mxu0 0.0
      %989 = vmatpush2.msra.mxu0 0.0
      %990 = vmatprep.subr.mxu0 0.0
      %991 = vmatpush2.msra.mxu0 0.0
      %992 = vmatprep.subr.mxu0 0.0
      %993 = vmatpush2.msra.mxu0 0.0
      %994 = vmatprep.subr.mxu0 0.0
      %995 = vmatpush2.msra.mxu0 0.0
      %996 = vmatprep.subr.mxu0 0.0
      %997 = vmatpush2.msra.mxu0 0.0
      %998 = vmatprep.subr.mxu0 0.0
      %999 = vmatpush2.msra.mxu0 0.0
      %1000 = vmatprep.subr.mxu0 0.0
      %1001 = vmatpush2.msra.mxu0 0.0
      %1002 = vmatprep.subr.mxu0 0.0
      %1003 = vmatpush2.msra.mxu0 0.0
      %1004 = vmatprep.subr.mxu0 0.0
      %1005 = vmatpush2.msra.mxu0 0.0
      %1006 = vmatprep.subr.mxu0 0.0
      %1007 = vmatpush2.msra.mxu0 0.0
      %1008 = vmatprep.mubr.f32.mxu0 0.0
      %1009 = vmatmul.mubr.f32.gmra.mxu0 %v942
      %v1010 = vpop.f32.mrf.mxu0
      %v1011 = vadd.f32 %v938, %v1010
      %v1012 = vpop.f32.mrf.mxu0
      %1013 = vdwg.mxu0
      %s1014 = scalar_lea.vmem %s3, 16
      %v1015 = vld [vmem:[%s1014] sm:$0xff]
      %v1017 = vsel %vm792, %v1015, 0
      %1019 = vmatprep.subr.mxu0 0.0
      %1020 = vmatpush1.msra.mxu0 0.0
      %1021 = vmatprep.subr.mxu0 0.0
      %1022 = vmatpush1.msra.mxu0 0.0
      %1023 = vmatprep.subr.mxu0 0.0
      %1024 = vmatpush1.msra.mxu0 0.0
      %1025 = vmatprep.subr.mxu0 0.0
      %1026 = vmatpush1.msra.mxu0 0.0
      %1027 = vmatprep.subr.mxu0 0.0
      %1028 = vmatpush1.msra.mxu0 0.0
      %1029 = vmatprep.subr.mxu0 0.0
      %1030 = vmatpush1.msra.mxu0 0.0
      %1031 = vmatprep.subr.mxu0 0.0
      %1032 = vmatpush1.msra.mxu0 0.0
      %1033 = vmatprep.subr.mxu0 0.0
      %1034 = vmatpush1.msra.mxu0 0.0
      %1035 = vmatprep.subr.mxu0 0.0
      %1036 = vmatpush1.msra.mxu0 0.0
      %1037 = vmatprep.subr.mxu0 0.0
      %1038 = vmatpush1.msra.mxu0 0.0
      %1039 = vmatprep.subr.mxu0 0.0
      %1040 = vmatpush1.msra.mxu0 0.0
      %1041 = vmatprep.subr.mxu0 0.0
      %1042 = vmatpush1.msra.mxu0 0.0
      %1043 = vmatprep.subr.mxu0 0.0
      %1044 = vmatpush1.msra.mxu0 0.0
      %1045 = vmatprep.subr.mxu0 0.0
      %1046 = vmatpush1.msra.mxu0 0.0
      %1047 = vmatprep.subr.mxu0 0.0
      %1048 = vmatpush1.msra.mxu0 0.0
      %1049 = vmatprep.subr.mxu0 0.0
      %1050 = vmatpush1.msra.mxu0 %v790
      %1051 = vmatprep.subr.mxu0 0.0
      %1052 = vmatpush2.msra.mxu0 0.0
      %1053 = vmatprep.subr.mxu0 0.0
      %1054 = vmatpush2.msra.mxu0 0.0
      %1055 = vmatprep.subr.mxu0 0.0
      %1056 = vmatpush2.msra.mxu0 0.0
      %1057 = vmatprep.subr.mxu0 0.0
      %1058 = vmatpush2.msra.mxu0 0.0
      %1059 = vmatprep.subr.mxu0 0.0
      %1060 = vmatpush2.msra.mxu0 0.0
      %1061 = vmatprep.subr.mxu0 0.0
      %1062 = vmatpush2.msra.mxu0 0.0
      %1063 = vmatprep.subr.mxu0 0.0
      %1064 = vmatpush2.msra.mxu0 0.0
      %1065 = vmatprep.subr.mxu0 0.0
      %1066 = vmatpush2.msra.mxu0 0.0
      %1067 = vmatprep.subr.mxu0 0.0
      %1068 = vmatpush2.msra.mxu0 0.0
      %1069 = vmatprep.subr.mxu0 0.0
      %1070 = vmatpush2.msra.mxu0 0.0
      %1071 = vmatprep.subr.mxu0 0.0
      %1072 = vmatpush2.msra.mxu0 0.0
      %1073 = vmatprep.subr.mxu0 0.0
      %1074 = vmatpush2.msra.mxu0 0.0
      %1075 = vmatprep.subr.mxu0 0.0
      %1076 = vmatpush2.msra.mxu0 0.0
      %1077 = vmatprep.subr.mxu0 0.0
      %1078 = vmatpush2.msra.mxu0 0.0
      %1079 = vmatprep.subr.mxu0 0.0
      %1080 = vmatpush2.msra.mxu0 0.0
      %1081 = vmatprep.subr.mxu0 0.0
      %1082 = vmatpush2.msra.mxu0 0.0
      %1083 = vmatprep.mubr.f32.mxu0 0.0
      %1084 = vmatmul.mubr.f32.gmra.mxu0 %v1017
      %v1085 = vpop.f32.mrf.mxu0
      %v1086 = vadd.f32 0.0, %v1085
      %v1087 = vpop.f32.mrf.mxu0
      %1088 = vdwg.mxu0
      %v1090 = vsel %vm549, %v1086, 0
      %1092 = vmatprep.subr.mxu0 0.0
      %1093 = vmatpush1.msra.mxu0 0.0
      %1094 = vmatprep.subr.mxu0 0.0
      %1095 = vmatpush1.msra.mxu0 0.0
      %1096 = vmatprep.subr.mxu0 0.0
      %1097 = vmatpush1.msra.mxu0 0.0
      %1098 = vmatprep.subr.mxu0 0.0
      %1099 = vmatpush1.msra.mxu0 0.0
      %1100 = vmatprep.subr.mxu0 0.0
      %1101 = vmatpush1.msra.mxu0 0.0
      %1102 = vmatprep.subr.mxu0 0.0
      %1103 = vmatpush1.msra.mxu0 0.0
      %1104 = vmatprep.subr.mxu0 0.0
      %1105 = vmatpush1.msra.mxu0 0.0
      %1106 = vmatprep.subr.mxu0 0.0
      %1107 = vmatpush1.msra.mxu0 0.0
      %1108 = vmatprep.subr.mxu0 0.0
      %1109 = vmatpush1.msra.mxu0 0.0
      %1110 = vmatprep.subr.mxu0 0.0
      %1111 = vmatpush1.msra.mxu0 0.0
      %1112 = vmatprep.subr.mxu0 0.0
      %1113 = vmatpush1.msra.mxu0 0.0
      %1114 = vmatprep.subr.mxu0 0.0
      %1115 = vmatpush1.msra.mxu0 0.0
      %1116 = vmatprep.subr.mxu0 0.0
      %1117 = vmatpush1.msra.mxu0 0.0
      %1118 = vmatprep.subr.mxu0 0.0
      %1119 = vmatpush1.msra.mxu0 0.0
      %1120 = vmatprep.subr.mxu0 0.0
      %1121 = vmatpush1.msra.mxu0 %v704
      %1122 = vmatprep.subr.mxu0 0.0
      %1123 = vmatpush1.msra.mxu0 %v703
      %1124 = vmatprep.subr.mxu0 0.0
      %1125 = vmatpush2.msra.mxu0 0.0
      %1126 = vmatprep.subr.mxu0 0.0
      %1127 = vmatpush2.msra.mxu0 0.0
      %1128 = vmatprep.subr.mxu0 0.0
      %1129 = vmatpush2.msra.mxu0 0.0
      %1130 = vmatprep.subr.mxu0 0.0
      %1131 = vmatpush2.msra.mxu0 0.0
      %1132 = vmatprep.subr.mxu0 0.0
      %1133 = vmatpush2.msra.mxu0 0.0
      %1134 = vmatprep.subr.mxu0 0.0
      %1135 = vmatpush2.msra.mxu0 0.0
      %1136 = vmatprep.subr.mxu0 0.0
      %1137 = vmatpush2.msra.mxu0 0.0
      %1138 = vmatprep.subr.mxu0 0.0
      %1139 = vmatpush2.msra.mxu0 0.0
      %1140 = vmatprep.subr.mxu0 0.0
      %1141 = vmatpush2.msra.mxu0 0.0
      %1142 = vmatprep.subr.mxu0 0.0
      %1143 = vmatpush2.msra.mxu0 0.0
      %1144 = vmatprep.subr.mxu0 0.0
      %1145 = vmatpush2.msra.mxu0 0.0
      %1146 = vmatprep.subr.mxu0 0.0
      %1147 = vmatpush2.msra.mxu0 0.0
      %1148 = vmatprep.subr.mxu0 0.0
      %1149 = vmatpush2.msra.mxu0 0.0
      %1150 = vmatprep.subr.mxu0 0.0
      %1151 = vmatpush2.msra.mxu0 0.0
      %1152 = vmatprep.subr.mxu0 0.0
      %1153 = vmatpush2.msra.mxu0 0.0
      %1154 = vmatprep.subr.mxu0 0.0
      %1155 = vmatpush2.msra.mxu0 0.0
      %1156 = vmatprep.mubr.f32.mxu0 0.0
      %1157 = vmatmul.mubr.f32.gmra.mxu0 %v1090
      %v1158 = vpop.f32.mrf.mxu0
      %v1159 = vadd.f32 0.0, %v1158
      %v1160 = vpop.f32.mrf.mxu0
      %1161 = vdwg.mxu0
      %v1162 = vadd.f32 %v1011, %v1159
      %v1163 = vld [vmem:[%s4] sm:$0xff]
      %1165 = vset.pattern.permute.xlu0 0
      %1166 = vperm.xlu0 %1165, %v1163
      %v1167 = vpop.permute.xlu0 %1166
      %v1169 = vadd.f32 %v1162, %v1167
      %v1170 = vsub.f32 0.0, %v1169
      %v1171 = vmul.f32 %v1170, 1.442695
      %v1172 = vpow.pop %v1171
      %v1173 = vadd.f32 %v1172, 1.0
      %v1174 = vrcp.pop %v1173
      %v1175 = vmul.u32 %v387, 2
      %vm1176 = vcmp.eq.s32.totalorder %v384, %v1175
      %vm1177 = vcmp.eq.s32.totalorder %v385, %v1175
      %v1178 = vsel %vm1176, 1, 0
      %v1179 = vsel %vm1177, 1, 0
      %v1180 = vcvt.s32.f32 %v1178
      %v1181 = vcvt.s32.f32 %v1179
      %v1183 = vsel %vm549, %v1174, 0
      %1185 = vmatprep.subr.mxu0 0.0
      %1186 = vmatpush1.msra.mxu0 0.0
      %1187 = vmatprep.subr.mxu0 0.0
      %1188 = vmatpush1.msra.mxu0 0.0
      %1189 = vmatprep.subr.mxu0 0.0
      %1190 = vmatpush1.msra.mxu0 0.0
      %1191 = vmatprep.subr.mxu0 0.0
      %1192 = vmatpush1.msra.mxu0 0.0
      %1193 = vmatprep.subr.mxu0 0.0
      %1194 = vmatpush1.msra.mxu0 0.0
      %1195 = vmatprep.subr.mxu0 0.0
      %1196 = vmatpush1.msra.mxu0 0.0
      %1197 = vmatprep.subr.mxu0 0.0
      %1198 = vmatpush1.msra.mxu0 0.0
      %1199 = vmatprep.subr.mxu0 0.0
      %1200 = vmatpush1.msra.mxu0 0.0
      %1201 = vmatprep.subr.mxu0 0.0
      %1202 = vmatpush1.msra.mxu0 0.0
      %1203 = vmatprep.subr.mxu0 0.0
      %1204 = vmatpush1.msra.mxu0 0.0
      %1205 = vmatprep.subr.mxu0 0.0
      %1206 = vmatpush1.msra.mxu0 0.0
      %1207 = vmatprep.subr.mxu0 0.0
      %1208 = vmatpush1.msra.mxu0 0.0
      %1209 = vmatprep.subr.mxu0 0.0
      %1210 = vmatpush1.msra.mxu0 0.0
      %1211 = vmatprep.subr.mxu0 0.0
      %1212 = vmatpush1.msra.mxu0 0.0
      %1213 = vmatprep.subr.mxu0 0.0
      %1214 = vmatpush1.msra.mxu0 %v1181
      %1215 = vmatprep.subr.mxu0 0.0
      %1216 = vmatpush1.msra.mxu0 %v1180
      %1217 = vmatprep.subr.mxu0 0.0
      %1218 = vmatpush2.msra.mxu0 0.0
      %1219 = vmatprep.subr.mxu0 0.0
      %1220 = vmatpush2.msra.mxu0 0.0
      %1221 = vmatprep.subr.mxu0 0.0
      %1222 = vmatpush2.msra.mxu0 0.0
      %1223 = vmatprep.subr.mxu0 0.0
      %1224 = vmatpush2.msra.mxu0 0.0
      %1225 = vmatprep.subr.mxu0 0.0
      %1226 = vmatpush2.msra.mxu0 0.0
      %1227 = vmatprep.subr.mxu0 0.0
      %1228 = vmatpush2.msra.mxu0 0.0
      %1229 = vmatprep.subr.mxu0 0.0
      %1230 = vmatpush2.msra.mxu0 0.0
      %1231 = vmatprep.subr.mxu0 0.0
      %1232 = vmatpush2.msra.mxu0 0.0
      %1233 = vmatprep.subr.mxu0 0.0
      %1234 = vmatpush2.msra.mxu0 0.0
      %1235 = vmatprep.subr.mxu0 0.0
      %1236 = vmatpush2.msra.mxu0 0.0
      %1237 = vmatprep.subr.mxu0 0.0
      %1238 = vmatpush2.msra.mxu0 0.0
      %1239 = vmatprep.subr.mxu0 0.0
      %1240 = vmatpush2.msra.mxu0 0.0
      %1241 = vmatprep.subr.mxu0 0.0
      %1242 = vmatpush2.msra.mxu0 0.0
      %1243 = vmatprep.subr.mxu0 0.0
      %1244 = vmatpush2.msra.mxu0 0.0
      %1245 = vmatprep.subr.mxu0 0.0
      %1246 = vmatpush2.msra.mxu0 0.0
      %1247 = vmatprep.subr.mxu0 0.0
      %1248 = vmatpush2.msra.mxu0 0.0
      %1249 = vmatprep.mubr.f32.mxu0 0.0
      %1250 = vmatmul.mubr.f32.gmra.mxu0 %v1183
      %v1251 = vpop.f32.mrf.mxu0
      %v1252 = vadd.f32 0.0, %v1251
      %v1253 = vpop.f32.mrf.mxu0
      %1254 = vdwg.mxu0
      %v1255 = vadd.s32 %v1175, 1
      %vm1256 = vcmp.eq.s32.totalorder %v384, %v1255
      %vm1257 = vcmp.eq.s32.totalorder %v385, %v1255
      %v1258 = vsel %vm1256, 1, 0
      %v1259 = vsel %vm1257, 1, 0
      %v1260 = vcvt.s32.f32 %v1258
      %v1261 = vcvt.s32.f32 %v1259
      %1262 = vmatprep.subr.mxu0 0.0
      %1263 = vmatpush1.msra.mxu0 0.0
      %1264 = vmatprep.subr.mxu0 0.0
      %1265 = vmatpush1.msra.mxu0 0.0
      %1266 = vmatprep.subr.mxu0 0.0
      %1267 = vmatpush1.msra.mxu0 0.0
      %1268 = vmatprep.subr.mxu0 0.0
      %1269 = vmatpush1.msra.mxu0 0.0
      %1270 = vmatprep.subr.mxu0 0.0
      %1271 = vmatpush1.msra.mxu0 0.0
      %1272 = vmatprep.subr.mxu0 0.0
      %1273 = vmatpush1.msra.mxu0 0.0
      %1274 = vmatprep.subr.mxu0 0.0
      %1275 = vmatpush1.msra.mxu0 0.0
      %1276 = vmatprep.subr.mxu0 0.0
      %1277 = vmatpush1.msra.mxu0 0.0
      %1278 = vmatprep.subr.mxu0 0.0
      %1279 = vmatpush1.msra.mxu0 0.0
      %1280 = vmatprep.subr.mxu0 0.0
      %1281 = vmatpush1.msra.mxu0 0.0
      %1282 = vmatprep.subr.mxu0 0.0
      %1283 = vmatpush1.msra.mxu0 0.0
      %1284 = vmatprep.subr.mxu0 0.0
      %1285 = vmatpush1.msra.mxu0 0.0
      %1286 = vmatprep.subr.mxu0 0.0
      %1287 = vmatpush1.msra.mxu0 0.0
      %1288 = vmatprep.subr.mxu0 0.0
      %1289 = vmatpush1.msra.mxu0 0.0
      %1290 = vmatprep.subr.mxu0 0.0
      %1291 = vmatpush1.msra.mxu0 %v1261
      %1292 = vmatprep.subr.mxu0 0.0
      %1293 = vmatpush1.msra.mxu0 %v1260
      %1294 = vmatprep.subr.mxu0 0.0
      %1295 = vmatpush2.msra.mxu0 0.0
      %1296 = vmatprep.subr.mxu0 0.0
      %1297 = vmatpush2.msra.mxu0 0.0
      %1298 = vmatprep.subr.mxu0 0.0
      %1299 = vmatpush2.msra.mxu0 0.0
      %1300 = vmatprep.subr.mxu0 0.0
      %1301 = vmatpush2.msra.mxu0 0.0
      %1302 = vmatprep.subr.mxu0 0.0
      %1303 = vmatpush2.msra.mxu0 0.0
      %1304 = vmatprep.subr.mxu0 0.0
      %1305 = vmatpush2.msra.mxu0 0.0
      %1306 = vmatprep.subr.mxu0 0.0
      %1307 = vmatpush2.msra.mxu0 0.0
      %1308 = vmatprep.subr.mxu0 0.0
      %1309 = vmatpush2.msra.mxu0 0.0
      %1310 = vmatprep.subr.mxu0 0.0
      %1311 = vmatpush2.msra.mxu0 0.0
      %1312 = vmatprep.subr.mxu0 0.0
      %1313 = vmatpush2.msra.mxu0 0.0
      %1314 = vmatprep.subr.mxu0 0.0
      %1315 = vmatpush2.msra.mxu0 0.0
      %1316 = vmatprep.subr.mxu0 0.0
      %1317 = vmatpush2.msra.mxu0 0.0
      %1318 = vmatprep.subr.mxu0 0.0
      %1319 = vmatpush2.msra.mxu0 0.0
      %1320 = vmatprep.subr.mxu0 0.0
      %1321 = vmatpush2.msra.mxu0 0.0
      %1322 = vmatprep.subr.mxu0 0.0
      %1323 = vmatpush2.msra.mxu0 0.0
      %1324 = vmatprep.subr.mxu0 0.0
      %1325 = vmatpush2.msra.mxu0 0.0
      %1326 = vmatprep.mubr.f32.mxu0 0.0
      %1327 = vmatmul.mubr.f32.gmra.mxu0 %v1183
      %v1328 = vpop.f32.mrf.mxu0
      %v1329 = vadd.f32 0.0, %v1328
      %v1330 = vpop.f32.mrf.mxu0
      %1331 = vdwg.mxu0
      %v1332 = vmax.f32 %v1252, %v1329
      %v1333 = vld [vmem:[%s5] sm:$0xff]
      %v1334 = vld [vmem:[%s5 + $0x8] sm:$0xff]
      %v1336 = vsel %vm792, %v1333, 0
      %v1339 = vsel %vm792, %v1334, 0
      %1341 = vmatprep.subr.mxu0 0.0
      %1342 = vmatpush1.msra.mxu0 0.0
      %1343 = vmatprep.subr.mxu0 0.0
      %1344 = vmatpush1.msra.mxu0 0.0
      %1345 = vmatprep.subr.mxu0 0.0
      %1346 = vmatpush1.msra.mxu0 0.0
      %1347 = vmatprep.subr.mxu0 0.0
      %1348 = vmatpush1.msra.mxu0 0.0
      %1349 = vmatprep.subr.mxu0 0.0
      %1350 = vmatpush1.msra.mxu0 0.0
      %1351 = vmatprep.subr.mxu0 0.0
      %1352 = vmatpush1.msra.mxu0 0.0
      %1353 = vmatprep.subr.mxu0 0.0
      %1354 = vmatpush1.msra.mxu0 0.0
      %1355 = vmatprep.subr.mxu0 0.0
      %1356 = vmatpush1.msra.mxu0 0.0
      %1357 = vmatprep.subr.mxu0 0.0
      %1358 = vmatpush1.msra.mxu0 0.0
      %1359 = vmatprep.subr.mxu0 0.0
      %1360 = vmatpush1.msra.mxu0 0.0
      %1361 = vmatprep.subr.mxu0 0.0
      %1362 = vmatpush1.msra.mxu0 0.0
      %1363 = vmatprep.subr.mxu0 0.0
      %1364 = vmatpush1.msra.mxu0 0.0
      %1365 = vmatprep.subr.mxu0 0.0
      %1366 = vmatpush1.msra.mxu0 0.0
      %1367 = vmatprep.subr.mxu0 0.0
      %1368 = vmatpush1.msra.mxu0 0.0
      %1369 = vmatprep.subr.mxu0 0.0
      %1370 = vmatpush1.msra.mxu0 0.0
      %1371 = vmatprep.subr.mxu0 0.0
      %1372 = vmatpush1.msra.mxu0 %v1332
      %1373 = vmatprep.subr.mxu0 0.0
      %1374 = vmatpush2.msra.mxu0 0.0
      %1375 = vmatprep.subr.mxu0 0.0
      %1376 = vmatpush2.msra.mxu0 0.0
      %1377 = vmatprep.subr.mxu0 0.0
      %1378 = vmatpush2.msra.mxu0 0.0
      %1379 = vmatprep.subr.mxu0 0.0
      %1380 = vmatpush2.msra.mxu0 0.0
      %1381 = vmatprep.subr.mxu0 0.0
      %1382 = vmatpush2.msra.mxu0 0.0
      %1383 = vmatprep.subr.mxu0 0.0
      %1384 = vmatpush2.msra.mxu0 0.0
      %1385 = vmatprep.subr.mxu0 0.0
      %1386 = vmatpush2.msra.mxu0 0.0
      %1387 = vmatprep.subr.mxu0 0.0
      %1388 = vmatpush2.msra.mxu0 0.0
      %1389 = vmatprep.subr.mxu0 0.0
      %1390 = vmatpush2.msra.mxu0 0.0
      %1391 = vmatprep.subr.mxu0 0.0
      %1392 = vmatpush2.msra.mxu0 0.0
      %1393 = vmatprep.subr.mxu0 0.0
      %1394 = vmatpush2.msra.mxu0 0.0
      %1395 = vmatprep.subr.mxu0 0.0
      %1396 = vmatpush2.msra.mxu0 0.0
      %1397 = vmatprep.subr.mxu0 0.0
      %1398 = vmatpush2.msra.mxu0 0.0
      %1399 = vmatprep.subr.mxu0 0.0
      %1400 = vmatpush2.msra.mxu0 0.0
      %1401 = vmatprep.subr.mxu0 0.0
      %1402 = vmatpush2.msra.mxu0 0.0
      %1403 = vmatprep.subr.mxu0 0.0
      %1404 = vmatpush2.msra.mxu0 0.0
      %1405 = vmatprep.mubr.f32.mxu0 0.0
      %1406 = vmatmul.mubr.f32.gmra.mxu0 %v1336
      %v1407 = vpop.f32.mrf.mxu0
      %v1408 = vadd.f32 0.0, %v1407
      %v1409 = vpop.f32.mrf.mxu0
      %1410 = vmatprep.mubr.f32.mxu0 0.0
      %1411 = vmatmul.mubr.f32.gmra.mxu0 %v1339
      %v1412 = vpop.f32.mrf.mxu0
      %v1413 = vadd.f32 0.0, %v1412
      %v1414 = vpop.f32.mrf.mxu0
      %1415 = vdwg.mxu0
      %s1416 = scalar_lea.vmem %s5, 16
      %v1417 = vld [vmem:[%s1416] sm:$0xff]
      %v1418 = vld [vmem:[%s1416 + $0x8] sm:$0xff]
      %v1420 = vsel %vm792, %v1417, 0
      %v1423 = vsel %vm792, %v1418, 0
      %1425 = vmatprep.subr.mxu0 0.0
      %1426 = vmatpush1.msra.mxu0 0.0
      %1427 = vmatprep.subr.mxu0 0.0
      %1428 = vmatpush1.msra.mxu0 0.0
      %1429 = vmatprep.subr.mxu0 0.0
      %1430 = vmatpush1.msra.mxu0 0.0
      %1431 = vmatprep.subr.mxu0 0.0
      %1432 = vmatpush1.msra.mxu0 0.0
      %1433 = vmatprep.subr.mxu0 0.0
      %1434 = vmatpush1.msra.mxu0 0.0
      %1435 = vmatprep.subr.mxu0 0.0
      %1436 = vmatpush1.msra.mxu0 0.0
      %1437 = vmatprep.subr.mxu0 0.0
      %1438 = vmatpush1.msra.mxu0 0.0
      %1439 = vmatprep.subr.mxu0 0.0
      %1440 = vmatpush1.msra.mxu0 0.0
      %1441 = vmatprep.subr.mxu0 0.0
      %1442 = vmatpush1.msra.mxu0 0.0
      %1443 = vmatprep.subr.mxu0 0.0
      %1444 = vmatpush1.msra.mxu0 0.0
      %1445 = vmatprep.subr.mxu0 0.0
      %1446 = vmatpush1.msra.mxu0 0.0
      %1447 = vmatprep.subr.mxu0 0.0
      %1448 = vmatpush1.msra.mxu0 0.0
      %1449 = vmatprep.subr.mxu0 0.0
      %1450 = vmatpush1.msra.mxu0 0.0
      %1451 = vmatprep.subr.mxu0 0.0
      %1452 = vmatpush1.msra.mxu0 0.0
      %1453 = vmatprep.subr.mxu0 0.0
      %1454 = vmatpush1.msra.mxu0 0.0
      %1455 = vmatprep.subr.mxu0 0.0
      %1456 = vmatpush1.msra.mxu0 %v1332
      %1457 = vmatprep.subr.mxu0 0.0
      %1458 = vmatpush2.msra.mxu0 0.0
      %1459 = vmatprep.subr.mxu0 0.0
      %1460 = vmatpush2.msra.mxu0 0.0
      %1461 = vmatprep.subr.mxu0 0.0
      %1462 = vmatpush2.msra.mxu0 0.0
      %1463 = vmatprep.subr.mxu0 0.0
      %1464 = vmatpush2.msra.mxu0 0.0
      %1465 = vmatprep.subr.mxu0 0.0
      %1466 = vmatpush2.msra.mxu0 0.0
      %1467 = vmatprep.subr.mxu0 0.0
      %1468 = vmatpush2.msra.mxu0 0.0
      %1469 = vmatprep.subr.mxu0 0.0
      %1470 = vmatpush2.msra.mxu0 0.0
      %1471 = vmatprep.subr.mxu0 0.0
      %1472 = vmatpush2.msra.mxu0 0.0
      %1473 = vmatprep.subr.mxu0 0.0
      %1474 = vmatpush2.msra.mxu0 0.0
      %1475 = vmatprep.subr.mxu0 0.0
      %1476 = vmatpush2.msra.mxu0 0.0
      %1477 = vmatprep.subr.mxu0 0.0
      %1478 = vmatpush2.msra.mxu0 0.0
      %1479 = vmatprep.subr.mxu0 0.0
      %1480 = vmatpush2.msra.mxu0 0.0
      %1481 = vmatprep.subr.mxu0 0.0
      %1482 = vmatpush2.msra.mxu0 0.0
      %1483 = vmatprep.subr.mxu0 0.0
      %1484 = vmatpush2.msra.mxu0 0.0
      %1485 = vmatprep.subr.mxu0 0.0
      %1486 = vmatpush2.msra.mxu0 0.0
      %1487 = vmatprep.subr.mxu0 0.0
      %1488 = vmatpush2.msra.mxu0 0.0
      %1489 = vmatprep.mubr.f32.mxu0 0.0
      %1490 = vmatmul.mubr.f32.gmra.mxu0 %v1420
      %v1491 = vpop.f32.mrf.mxu0
      %v1492 = vadd.f32 0.0, %v1491
      %v1493 = vpop.f32.mrf.mxu0
      %1494 = vmatprep.mubr.f32.mxu0 0.0
      %1495 = vmatmul.mubr.f32.gmra.mxu0 %v1423
      %v1496 = vpop.f32.mrf.mxu0
      %v1497 = vadd.f32 0.0, %v1496
      %v1498 = vpop.f32.mrf.mxu0
      %1499 = vdwg.mxu0
      %v1501 = vsel %vm792, %v1408, 0
      %v1504 = vsel %vm792, %v1413, 0
      %1506 = vmatprep.subr.mxu0 0.0
      %1507 = vmatpush1.msra.mxu0 0.0
      %1508 = vmatprep.subr.mxu0 0.0
      %1509 = vmatpush1.msra.mxu0 0.0
      %1510 = vmatprep.subr.mxu0 0.0
      %1511 = vmatpush1.msra.mxu0 0.0
      %1512 = vmatprep.subr.mxu0 0.0
      %1513 = vmatpush1.msra.mxu0 0.0
      %1514 = vmatprep.subr.mxu0 0.0
      %1515 = vmatpush1.msra.mxu0 0.0
      %1516 = vmatprep.subr.mxu0 0.0
      %1517 = vmatpush1.msra.mxu0 0.0
      %1518 = vmatprep.subr.mxu0 0.0
      %1519 = vmatpush1.msra.mxu0 0.0
      %1520 = vmatprep.subr.mxu0 0.0
      %1521 = vmatpush1.msra.mxu0 0.0
      %1522 = vmatprep.subr.mxu0 0.0
      %1523 = vmatpush1.msra.mxu0 0.0
      %1524 = vmatprep.subr.mxu0 0.0
      %1525 = vmatpush1.msra.mxu0 0.0
      %1526 = vmatprep.subr.mxu0 0.0
      %1527 = vmatpush1.msra.mxu0 0.0
      %1528 = vmatprep.subr.mxu0 0.0
      %1529 = vmatpush1.msra.mxu0 0.0
      %1530 = vmatprep.subr.mxu0 0.0
      %1531 = vmatpush1.msra.mxu0 0.0
      %1532 = vmatprep.subr.mxu0 0.0
      %1533 = vmatpush1.msra.mxu0 0.0
      %1534 = vmatprep.subr.mxu0 0.0
      %1535 = vmatpush1.msra.mxu0 0.0
      %1536 = vmatprep.subr.mxu0 0.0
      %1537 = vmatpush1.msra.mxu0 %v472
      %1538 = vmatprep.subr.mxu0 0.0
      %1539 = vmatpush2.msra.mxu0 0.0
      %1540 = vmatprep.subr.mxu0 0.0
      %1541 = vmatpush2.msra.mxu0 0.0
      %1542 = vmatprep.subr.mxu0 0.0
      %1543 = vmatpush2.msra.mxu0 0.0
      %1544 = vmatprep.subr.mxu0 0.0
      %1545 = vmatpush2.msra.mxu0 0.0
      %1546 = vmatprep.subr.mxu0 0.0
      %1547 = vmatpush2.msra.mxu0 0.0
      %1548 = vmatprep.subr.mxu0 0.0
      %1549 = vmatpush2.msra.mxu0 0.0
      %1550 = vmatprep.subr.mxu0 0.0
      %1551 = vmatpush2.msra.mxu0 0.0
      %1552 = vmatprep.subr.mxu0 0.0
      %1553 = vmatpush2.msra.mxu0 0.0
      %1554 = vmatprep.subr.mxu0 0.0
      %1555 = vmatpush2.msra.mxu0 0.0
      %1556 = vmatprep.subr.mxu0 0.0
      %1557 = vmatpush2.msra.mxu0 0.0
      %1558 = vmatprep.subr.mxu0 0.0
      %1559 = vmatpush2.msra.mxu0 0.0
      %1560 = vmatprep.subr.mxu0 0.0
      %1561 = vmatpush2.msra.mxu0 0.0
      %1562 = vmatprep.subr.mxu0 0.0
      %1563 = vmatpush2.msra.mxu0 0.0
      %1564 = vmatprep.subr.mxu0 0.0
      %1565 = vmatpush2.msra.mxu0 0.0
      %1566 = vmatprep.subr.mxu0 0.0
      %1567 = vmatpush2.msra.mxu0 0.0
      %1568 = vmatprep.subr.mxu0 0.0
      %1569 = vmatpush2.msra.mxu0 0.0
      %1570 = vmatprep.mubr.f32.mxu0 0.0
      %1571 = vmatmul.mubr.f32.gmra.mxu0 %v1501
      %v1572 = vpop.f32.mrf.mxu0
      %v1573 = vadd.f32 %v1492, %v1572
      %v1574 = vpop.f32.mrf.mxu0
      %1575 = vmatprep.mubr.f32.mxu0 0.0
      %1576 = vmatmul.mubr.f32.gmra.mxu0 %v1504
      %v1577 = vpop.f32.mrf.mxu0
      %v1578 = vadd.f32 %v1497, %v1577
      %v1579 = vpop.f32.mrf.mxu0
      %1580 = vdwg.mxu0
      %s1581 = scalar_lea.vmem %s5, 32
      %v1582 = vld [vmem:[%s1581] sm:$0xff]
      %v1583 = vld [vmem:[%s1581 + $0x8] sm:$0xff]
      %v1585 = vsel %vm792, %v1582, 0
      %v1588 = vsel %vm792, %v1583, 0
      %1590 = vmatprep.subr.mxu0 0.0
      %1591 = vmatpush1.msra.mxu0 0.0
      %1592 = vmatprep.subr.mxu0 0.0
      %1593 = vmatpush1.msra.mxu0 0.0
      %1594 = vmatprep.subr.mxu0 0.0
      %1595 = vmatpush1.msra.mxu0 0.0
      %1596 = vmatprep.subr.mxu0 0.0
      %1597 = vmatpush1.msra.mxu0 0.0
      %1598 = vmatprep.subr.mxu0 0.0
      %1599 = vmatpush1.msra.mxu0 0.0
      %1600 = vmatprep.subr.mxu0 0.0
      %1601 = vmatpush1.msra.mxu0 0.0
      %1602 = vmatprep.subr.mxu0 0.0
      %1603 = vmatpush1.msra.mxu0 0.0
      %1604 = vmatprep.subr.mxu0 0.0
      %1605 = vmatpush1.msra.mxu0 0.0
      %1606 = vmatprep.subr.mxu0 0.0
      %1607 = vmatpush1.msra.mxu0 0.0
      %1608 = vmatprep.subr.mxu0 0.0
      %1609 = vmatpush1.msra.mxu0 0.0
      %1610 = vmatprep.subr.mxu0 0.0
      %1611 = vmatpush1.msra.mxu0 0.0
      %1612 = vmatprep.subr.mxu0 0.0
      %1613 = vmatpush1.msra.mxu0 0.0
      %1614 = vmatprep.subr.mxu0 0.0
      %1615 = vmatpush1.msra.mxu0 0.0
      %1616 = vmatprep.subr.mxu0 0.0
      %1617 = vmatpush1.msra.mxu0 0.0
      %1618 = vmatprep.subr.mxu0 0.0
      %1619 = vmatpush1.msra.mxu0 0.0
      %1620 = vmatprep.subr.mxu0 0.0
      %1621 = vmatpush1.msra.mxu0 %v1332
      %1622 = vmatprep.subr.mxu0 0.0
      %1623 = vmatpush2.msra.mxu0 0.0
      %1624 = vmatprep.subr.mxu0 0.0
      %1625 = vmatpush2.msra.mxu0 0.0
      %1626 = vmatprep.subr.mxu0 0.0
      %1627 = vmatpush2.msra.mxu0 0.0
      %1628 = vmatprep.subr.mxu0 0.0
      %1629 = vmatpush2.msra.mxu0 0.0
      %1630 = vmatprep.subr.mxu0 0.0
      %1631 = vmatpush2.msra.mxu0 0.0
      %1632 = vmatprep.subr.mxu0 0.0
      %1633 = vmatpush2.msra.mxu0 0.0
      %1634 = vmatprep.subr.mxu0 0.0
      %1635 = vmatpush2.msra.mxu0 0.0
      %1636 = vmatprep.subr.mxu0 0.0
      %1637 = vmatpush2.msra.mxu0 0.0
      %1638 = vmatprep.subr.mxu0 0.0
      %1639 = vmatpush2.msra.mxu0 0.0
      %1640 = vmatprep.subr.mxu0 0.0
      %1641 = vmatpush2.msra.mxu0 0.0
      %1642 = vmatprep.subr.mxu0 0.0
      %1643 = vmatpush2.msra.mxu0 0.0
      %1644 = vmatprep.subr.mxu0 0.0
      %1645 = vmatpush2.msra.mxu0 0.0
      %1646 = vmatprep.subr.mxu0 0.0
      %1647 = vmatpush2.msra.mxu0 0.0
      %1648 = vmatprep.subr.mxu0 0.0
      %1649 = vmatpush2.msra.mxu0 0.0
      %1650 = vmatprep.subr.mxu0 0.0
      %1651 = vmatpush2.msra.mxu0 0.0
      %1652 = vmatprep.subr.mxu0 0.0
      %1653 = vmatpush2.msra.mxu0 0.0
      %1654 = vmatprep.mubr.f32.mxu0 0.0
      %1655 = vmatmul.mubr.f32.gmra.mxu0 %v1585
      %v1656 = vpop.f32.mrf.mxu0
      %v1657 = vadd.f32 0.0, %v1656
      %v1658 = vpop.f32.mrf.mxu0
      %1659 = vmatprep.mubr.f32.mxu0 0.0
      %1660 = vmatmul.mubr.f32.gmra.mxu0 %v1588
      %v1661 = vpop.f32.mrf.mxu0
      %v1662 = vadd.f32 0.0, %v1661
      %v1663 = vpop.f32.mrf.mxu0
      %1664 = vdwg.mxu0
      %v1666 = vsel %vm792, %v1657, 0
      %v1669 = vsel %vm792, %v1662, 0
      %1671 = vmatprep.subr.mxu0 0.0
      %1672 = vmatpush1.msra.mxu0 0.0
      %1673 = vmatprep.subr.mxu0 0.0
      %1674 = vmatpush1.msra.mxu0 0.0
      %1675 = vmatprep.subr.mxu0 0.0
      %1676 = vmatpush1.msra.mxu0 0.0
      %1677 = vmatprep.subr.mxu0 0.0
      %1678 = vmatpush1.msra.mxu0 0.0
      %1679 = vmatprep.subr.mxu0 0.0
      %1680 = vmatpush1.msra.mxu0 0.0
      %1681 = vmatprep.subr.mxu0 0.0
      %1682 = vmatpush1.msra.mxu0 0.0
      %1683 = vmatprep.subr.mxu0 0.0
      %1684 = vmatpush1.msra.mxu0 0.0
      %1685 = vmatprep.subr.mxu0 0.0
      %1686 = vmatpush1.msra.mxu0 0.0
      %1687 = vmatprep.subr.mxu0 0.0
      %1688 = vmatpush1.msra.mxu0 0.0
      %1689 = vmatprep.subr.mxu0 0.0
      %1690 = vmatpush1.msra.mxu0 0.0
      %1691 = vmatprep.subr.mxu0 0.0
      %1692 = vmatpush1.msra.mxu0 0.0
      %1693 = vmatprep.subr.mxu0 0.0
      %1694 = vmatpush1.msra.mxu0 0.0
      %1695 = vmatprep.subr.mxu0 0.0
      %1696 = vmatpush1.msra.mxu0 0.0
      %1697 = vmatprep.subr.mxu0 0.0
      %1698 = vmatpush1.msra.mxu0 0.0
      %1699 = vmatprep.subr.mxu0 0.0
      %1700 = vmatpush1.msra.mxu0 0.0
      %1701 = vmatprep.subr.mxu0 0.0
      %1702 = vmatpush1.msra.mxu0 %v703
      %1703 = vmatprep.subr.mxu0 0.0
      %1704 = vmatpush2.msra.mxu0 0.0
      %1705 = vmatprep.subr.mxu0 0.0
      %1706 = vmatpush2.msra.mxu0 0.0
      %1707 = vmatprep.subr.mxu0 0.0
      %1708 = vmatpush2.msra.mxu0 0.0
      %1709 = vmatprep.subr.mxu0 0.0
      %1710 = vmatpush2.msra.mxu0 0.0
      %1711 = vmatprep.subr.mxu0 0.0
      %1712 = vmatpush2.msra.mxu0 0.0
      %1713 = vmatprep.subr.mxu0 0.0
      %1714 = vmatpush2.msra.mxu0 0.0
      %1715 = vmatprep.subr.mxu0 0.0
      %1716 = vmatpush2.msra.mxu0 0.0
      %1717 = vmatprep.subr.mxu0 0.0
      %1718 = vmatpush2.msra.mxu0 0.0
      %1719 = vmatprep.subr.mxu0 0.0
      %1720 = vmatpush2.msra.mxu0 0.0
      %1721 = vmatprep.subr.mxu0 0.0
      %1722 = vmatpush2.msra.mxu0 0.0
      %1723 = vmatprep.subr.mxu0 0.0
      %1724 = vmatpush2.msra.mxu0 0.0
      %1725 = vmatprep.subr.mxu0 0.0
      %1726 = vmatpush2.msra.mxu0 0.0
      %1727 = vmatprep.subr.mxu0 0.0
      %1728 = vmatpush2.msra.mxu0 0.0
      %1729 = vmatprep.subr.mxu0 0.0
      %1730 = vmatpush2.msra.mxu0 0.0
      %1731 = vmatprep.subr.mxu0 0.0
      %1732 = vmatpush2.msra.mxu0 0.0
      %1733 = vmatprep.subr.mxu0 0.0
      %1734 = vmatpush2.msra.mxu0 0.0
      %1735 = vmatprep.mubr.f32.mxu0 0.0
      %1736 = vmatmul.mubr.f32.gmra.mxu0 %v1666
      %v1737 = vpop.f32.mrf.mxu0
      %v1738 = vadd.f32 0.0, %v1737
      %v1739 = vpop.f32.mrf.mxu0
      %1740 = vmatprep.mubr.f32.mxu0 0.0
      %1741 = vmatmul.mubr.f32.gmra.mxu0 %v1669
      %v1742 = vpop.f32.mrf.mxu0
      %v1743 = vadd.f32 0.0, %v1742
      %v1744 = vpop.f32.mrf.mxu0
      %1745 = vdwg.mxu0
      %v1746 = vadd.f32 %v1573, %v1738
      %v1747 = vadd.f32 %v1578, %v1743
      %v1748 = vld [vmem:[%s6] sm:$0xff]
      %v1749 = vld [vmem:[%s6 + $0x8] sm:$0xff]
      %1751 = vset.pattern.permute.xlu0 0
      %1752 = vperm.xlu0 %1751, %v1748
      %v1753 = vpop.permute.xlu0 %1752
      %1756 = vset.pattern.permute.xlu0 0
      %1757 = vperm.xlu0 %1756, %v1749
      %v1758 = vpop.permute.xlu0 %1757
      %v1760 = vadd.f32 %v1746, %v1753
      %v1761 = vadd.f32 %v1747, %v1758
      %v1762 = vsub.f32 0.0, %v1760
      %v1763 = vsub.f32 0.0, %v1761
      %v1764 = vmul.f32 %v1762, 1.442695
      %v1765 = vpow.pop %v1764
      %v1766 = vmul.f32 %v1763, 1.442695
      %v1767 = vpow.pop %v1766
      %v1768 = vadd.f32 %v1765, 1.0
      %v1769 = vadd.f32 %v1767, 1.0
      %v1770 = vrcp.pop %v1768
      %v1771 = vrcp.pop %v1769
      %v1772 = vld [vmem:[%s7] sm:$0xff]
      %v1773 = vld [vmem:[%s7 + $0x8] sm:$0xff]
      %v1775 = vsel %vm549, %v1772, 0
      %v1778 = vsel %vm549, %v1773, 0
      %1780 = vmatprep.subr.mxu0 0.0
      %1781 = vmatpush1.msra.mxu0 0.0
      %1782 = vmatprep.subr.mxu0 0.0
      %1783 = vmatpush1.msra.mxu0 0.0
      %1784 = vmatprep.subr.mxu0 0.0
      %1785 = vmatpush1.msra.mxu0 0.0
      %1786 = vmatprep.subr.mxu0 0.0
      %1787 = vmatpush1.msra.mxu0 0.0
      %1788 = vmatprep.subr.mxu0 0.0
      %1789 = vmatpush1.msra.mxu0 0.0
      %1790 = vmatprep.subr.mxu0 0.0
      %1791 = vmatpush1.msra.mxu0 0.0
      %1792 = vmatprep.subr.mxu0 0.0
      %1793 = vmatpush1.msra.mxu0 0.0
      %1794 = vmatprep.subr.mxu0 0.0
      %1795 = vmatpush1.msra.mxu0 0.0
      %1796 = vmatprep.subr.mxu0 0.0
      %1797 = vmatpush1.msra.mxu0 0.0
      %1798 = vmatprep.subr.mxu0 0.0
      %1799 = vmatpush1.msra.mxu0 0.0
      %1800 = vmatprep.subr.mxu0 0.0
      %1801 = vmatpush1.msra.mxu0 0.0
      %1802 = vmatprep.subr.mxu0 0.0
      %1803 = vmatpush1.msra.mxu0 0.0
      %1804 = vmatprep.subr.mxu0 0.0
      %1805 = vmatpush1.msra.mxu0 0.0
      %1806 = vmatprep.subr.mxu0 0.0
      %1807 = vmatpush1.msra.mxu0 0.0
      %1808 = vmatprep.subr.mxu0 0.0
      %1809 = vmatpush1.msra.mxu0 %v1771
      %1810 = vmatprep.subr.mxu0 0.0
      %1811 = vmatpush1.msra.mxu0 %v1770
      %1812 = vmatprep.subr.mxu0 0.0
      %1813 = vmatpush2.msra.mxu0 0.0
      %1814 = vmatprep.subr.mxu0 0.0
      %1815 = vmatpush2.msra.mxu0 0.0
      %1816 = vmatprep.subr.mxu0 0.0
      %1817 = vmatpush2.msra.mxu0 0.0
      %1818 = vmatprep.subr.mxu0 0.0
      %1819 = vmatpush2.msra.mxu0 0.0
      %1820 = vmatprep.subr.mxu0 0.0
      %1821 = vmatpush2.msra.mxu0 0.0
      %1822 = vmatprep.subr.mxu0 0.0
      %1823 = vmatpush2.msra.mxu0 0.0
      %1824 = vmatprep.subr.mxu0 0.0
      %1825 = vmatpush2.msra.mxu0 0.0
      %1826 = vmatprep.subr.mxu0 0.0
      %1827 = vmatpush2.msra.mxu0 0.0
      %1828 = vmatprep.subr.mxu0 0.0
      %1829 = vmatpush2.msra.mxu0 0.0
      %1830 = vmatprep.subr.mxu0 0.0
      %1831 = vmatpush2.msra.mxu0 0.0
      %1832 = vmatprep.subr.mxu0 0.0
      %1833 = vmatpush2.msra.mxu0 0.0
      %1834 = vmatprep.subr.mxu0 0.0
      %1835 = vmatpush2.msra.mxu0 0.0
      %1836 = vmatprep.subr.mxu0 0.0
      %1837 = vmatpush2.msra.mxu0 0.0
      %1838 = vmatprep.subr.mxu0 0.0
      %1839 = vmatpush2.msra.mxu0 0.0
      %1840 = vmatprep.subr.mxu0 0.0
      %1841 = vmatpush2.msra.mxu0 0.0
      %1842 = vmatprep.subr.mxu0 0.0
      %1843 = vmatpush2.msra.mxu0 0.0
      %1844 = vmatprep.mubr.f32.mxu0 0.0
      %1845 = vmatmul.mubr.f32.gmra.mxu0 %v1775
      %v1846 = vpop.f32.mrf.mxu0
      %v1847 = vadd.f32 0.0, %v1846
      %v1848 = vpop.f32.mrf.mxu0
      %1849 = vmatprep.mubr.f32.mxu0 0.0
      %1850 = vmatmul.mubr.f32.gmra.mxu0 %v1778
      %v1851 = vpop.f32.mrf.mxu0
      %v1852 = vadd.f32 0.0, %v1851
      %v1853 = vpop.f32.mrf.mxu0
      %1854 = vdwg.mxu0
      %s1855 = scalar_lea.vmem %s7, 16
      %v1856 = vld [vmem:[%s1855] sm:$0xff]
      %v1857 = vld [vmem:[%s1855 + $0x8] sm:$0xff]
      %v1859 = vsel %vm549, %v1856, 0
      %v1862 = vsel %vm549, %v1857, 0
      %1864 = vmatprep.subr.mxu0 0.0
      %1865 = vmatpush1.msra.mxu0 0.0
      %1866 = vmatprep.subr.mxu0 0.0
      %1867 = vmatpush1.msra.mxu0 0.0
      %1868 = vmatprep.subr.mxu0 0.0
      %1869 = vmatpush1.msra.mxu0 0.0
      %1870 = vmatprep.subr.mxu0 0.0
      %1871 = vmatpush1.msra.mxu0 0.0
      %1872 = vmatprep.subr.mxu0 0.0
      %1873 = vmatpush1.msra.mxu0 0.0
      %1874 = vmatprep.subr.mxu0 0.0
      %1875 = vmatpush1.msra.mxu0 0.0
      %1876 = vmatprep.subr.mxu0 0.0
      %1877 = vmatpush1.msra.mxu0 0.0
      %1878 = vmatprep.subr.mxu0 0.0
      %1879 = vmatpush1.msra.mxu0 0.0
      %1880 = vmatprep.subr.mxu0 0.0
      %1881 = vmatpush1.msra.mxu0 0.0
      %1882 = vmatprep.subr.mxu0 0.0
      %1883 = vmatpush1.msra.mxu0 0.0
      %1884 = vmatprep.subr.mxu0 0.0
      %1885 = vmatpush1.msra.mxu0 0.0
      %1886 = vmatprep.subr.mxu0 0.0
      %1887 = vmatpush1.msra.mxu0 0.0
      %1888 = vmatprep.subr.mxu0 0.0
      %1889 = vmatpush1.msra.mxu0 0.0
      %1890 = vmatprep.subr.mxu0 0.0
      %1891 = vmatpush1.msra.mxu0 0.0
      %1892 = vmatprep.subr.mxu0 0.0
      %1893 = vmatpush1.msra.mxu0 %v1771
      %1894 = vmatprep.subr.mxu0 0.0
      %1895 = vmatpush1.msra.mxu0 %v1770
      %1896 = vmatprep.subr.mxu0 0.0
      %1897 = vmatpush2.msra.mxu0 0.0
      %1898 = vmatprep.subr.mxu0 0.0
      %1899 = vmatpush2.msra.mxu0 0.0
      %1900 = vmatprep.subr.mxu0 0.0
      %1901 = vmatpush2.msra.mxu0 0.0
      %1902 = vmatprep.subr.mxu0 0.0
      %1903 = vmatpush2.msra.mxu0 0.0
      %1904 = vmatprep.subr.mxu0 0.0
      %1905 = vmatpush2.msra.mxu0 0.0
      %1906 = vmatprep.subr.mxu0 0.0
      %1907 = vmatpush2.msra.mxu0 0.0
      %1908 = vmatprep.subr.mxu0 0.0
      %1909 = vmatpush2.msra.mxu0 0.0
      %1910 = vmatprep.subr.mxu0 0.0
      %1911 = vmatpush2.msra.mxu0 0.0
      %1912 = vmatprep.subr.mxu0 0.0
      %1913 = vmatpush2.msra.mxu0 0.0
      %1914 = vmatprep.subr.mxu0 0.0
      %1915 = vmatpush2.msra.mxu0 0.0
      %1916 = vmatprep.subr.mxu0 0.0
      %1917 = vmatpush2.msra.mxu0 0.0
      %1918 = vmatprep.subr.mxu0 0.0
      %1919 = vmatpush2.msra.mxu0 0.0
      %1920 = vmatprep.subr.mxu0 0.0
      %1921 = vmatpush2.msra.mxu0 0.0
      %1922 = vmatprep.subr.mxu0 0.0
      %1923 = vmatpush2.msra.mxu0 0.0
      %1924 = vmatprep.subr.mxu0 0.0
      %1925 = vmatpush2.msra.mxu0 0.0
      %1926 = vmatprep.subr.mxu0 0.0
      %1927 = vmatpush2.msra.mxu0 0.0
      %1928 = vmatprep.mubr.f32.mxu0 0.0
      %1929 = vmatmul.mubr.f32.gmra.mxu0 %v1859
      %v1930 = vpop.f32.mrf.mxu0
      %v1931 = vadd.f32 0.0, %v1930
      %v1932 = vpop.f32.mrf.mxu0
      %1933 = vmatprep.mubr.f32.mxu0 0.0
      %1934 = vmatmul.mubr.f32.gmra.mxu0 %v1862
      %v1935 = vpop.f32.mrf.mxu0
      %v1936 = vadd.f32 0.0, %v1935
      %v1937 = vpop.f32.mrf.mxu0
      %1938 = vdwg.mxu0
      %v1940 = vsel %vm792, %v1847, 0
      %v1943 = vsel %vm792, %v1852, 0
      %1945 = vmatprep.subr.mxu0 0.0
      %1946 = vmatpush1.msra.mxu0 0.0
      %1947 = vmatprep.subr.mxu0 0.0
      %1948 = vmatpush1.msra.mxu0 0.0
      %1949 = vmatprep.subr.mxu0 0.0
      %1950 = vmatpush1.msra.mxu0 0.0
      %1951 = vmatprep.subr.mxu0 0.0
      %1952 = vmatpush1.msra.mxu0 0.0
      %1953 = vmatprep.subr.mxu0 0.0
      %1954 = vmatpush1.msra.mxu0 0.0
      %1955 = vmatprep.subr.mxu0 0.0
      %1956 = vmatpush1.msra.mxu0 0.0
      %1957 = vmatprep.subr.mxu0 0.0
      %1958 = vmatpush1.msra.mxu0 0.0
      %1959 = vmatprep.subr.mxu0 0.0
      %1960 = vmatpush1.msra.mxu0 0.0
      %1961 = vmatprep.subr.mxu0 0.0
      %1962 = vmatpush1.msra.mxu0 0.0
      %1963 = vmatprep.subr.mxu0 0.0
      %1964 = vmatpush1.msra.mxu0 0.0
      %1965 = vmatprep.subr.mxu0 0.0
      %1966 = vmatpush1.msra.mxu0 0.0
      %1967 = vmatprep.subr.mxu0 0.0
      %1968 = vmatpush1.msra.mxu0 0.0
      %1969 = vmatprep.subr.mxu0 0.0
      %1970 = vmatpush1.msra.mxu0 0.0
      %1971 = vmatprep.subr.mxu0 0.0
      %1972 = vmatpush1.msra.mxu0 0.0
      %1973 = vmatprep.subr.mxu0 0.0
      %1974 = vmatpush1.msra.mxu0 0.0
      %1975 = vmatprep.subr.mxu0 0.0
      %1976 = vmatpush1.msra.mxu0 %v472
      %1977 = vmatprep.subr.mxu0 0.0
      %1978 = vmatpush2.msra.mxu0 0.0
      %1979 = vmatprep.subr.mxu0 0.0
      %1980 = vmatpush2.msra.mxu0 0.0
      %1981 = vmatprep.subr.mxu0 0.0
      %1982 = vmatpush2.msra.mxu0 0.0
      %1983 = vmatprep.subr.mxu0 0.0
      %1984 = vmatpush2.msra.mxu0 0.0
      %1985 = vmatprep.subr.mxu0 0.0
      %1986 = vmatpush2.msra.mxu0 0.0
      %1987 = vmatprep.subr.mxu0 0.0
      %1988 = vmatpush2.msra.mxu0 0.0
      %1989 = vmatprep.subr.mxu0 0.0
      %1990 = vmatpush2.msra.mxu0 0.0
      %1991 = vmatprep.subr.mxu0 0.0
      %1992 = vmatpush2.msra.mxu0 0.0
      %1993 = vmatprep.subr.mxu0 0.0
      %1994 = vmatpush2.msra.mxu0 0.0
      %1995 = vmatprep.subr.mxu0 0.0
      %1996 = vmatpush2.msra.mxu0 0.0
      %1997 = vmatprep.subr.mxu0 0.0
      %1998 = vmatpush2.msra.mxu0 0.0
      %1999 = vmatprep.subr.mxu0 0.0
      %2000 = vmatpush2.msra.mxu0 0.0
      %2001 = vmatprep.subr.mxu0 0.0
      %2002 = vmatpush2.msra.mxu0 0.0
      %2003 = vmatprep.subr.mxu0 0.0
      %2004 = vmatpush2.msra.mxu0 0.0
      %2005 = vmatprep.subr.mxu0 0.0
      %2006 = vmatpush2.msra.mxu0 0.0
      %2007 = vmatprep.subr.mxu0 0.0
      %2008 = vmatpush2.msra.mxu0 0.0
      %2009 = vmatprep.mubr.f32.mxu0 0.0
      %2010 = vmatmul.mubr.f32.gmra.mxu0 %v1940
      %v2011 = vpop.f32.mrf.mxu0
      %v2012 = vadd.f32 %v1931, %v2011
      %v2013 = vpop.f32.mrf.mxu0
      %2014 = vmatprep.mubr.f32.mxu0 0.0
      %2015 = vmatmul.mubr.f32.gmra.mxu0 %v1943
      %v2016 = vpop.f32.mrf.mxu0
      %v2017 = vadd.f32 %v1936, %v2016
      %v2018 = vpop.f32.mrf.mxu0
      %2019 = vdwg.mxu0
      %s2020 = scalar_lea.vmem %s7, 32
      %v2021 = vld [vmem:[%s2020] sm:$0xff]
      %v2022 = vld [vmem:[%s2020 + $0x8] sm:$0xff]
      %v2024 = vsel %vm549, %v2021, 0
      %v2027 = vsel %vm549, %v2022, 0
      %2029 = vmatprep.subr.mxu0 0.0
      %2030 = vmatpush1.msra.mxu0 0.0
      %2031 = vmatprep.subr.mxu0 0.0
      %2032 = vmatpush1.msra.mxu0 0.0
      %2033 = vmatprep.subr.mxu0 0.0
      %2034 = vmatpush1.msra.mxu0 0.0
      %2035 = vmatprep.subr.mxu0 0.0
      %2036 = vmatpush1.msra.mxu0 0.0
      %2037 = vmatprep.subr.mxu0 0.0
      %2038 = vmatpush1.msra.mxu0 0.0
      %2039 = vmatprep.subr.mxu0 0.0
      %2040 = vmatpush1.msra.mxu0 0.0
      %2041 = vmatprep.subr.mxu0 0.0
      %2042 = vmatpush1.msra.mxu0 0.0
      %2043 = vmatprep.subr.mxu0 0.0
      %2044 = vmatpush1.msra.mxu0 0.0
      %2045 = vmatprep.subr.mxu0 0.0
      %2046 = vmatpush1.msra.mxu0 0.0
      %2047 = vmatprep.subr.mxu0 0.0
      %2048 = vmatpush1.msra.mxu0 0.0
      %2049 = vmatprep.subr.mxu0 0.0
      %2050 = vmatpush1.msra.mxu0 0.0
      %2051 = vmatprep.subr.mxu0 0.0
      %2052 = vmatpush1.msra.mxu0 0.0
      %2053 = vmatprep.subr.mxu0 0.0
      %2054 = vmatpush1.msra.mxu0 0.0
      %2055 = vmatprep.subr.mxu0 0.0
      %2056 = vmatpush1.msra.mxu0 0.0
      %2057 = vmatprep.subr.mxu0 0.0
      %2058 = vmatpush1.msra.mxu0 %v1771
      %2059 = vmatprep.subr.mxu0 0.0
      %2060 = vmatpush1.msra.mxu0 %v1770
      %2061 = vmatprep.subr.mxu0 0.0
      %2062 = vmatpush2.msra.mxu0 0.0
      %2063 = vmatprep.subr.mxu0 0.0
      %2064 = vmatpush2.msra.mxu0 0.0
      %2065 = vmatprep.subr.mxu0 0.0
      %2066 = vmatpush2.msra.mxu0 0.0
      %2067 = vmatprep.subr.mxu0 0.0
      %2068 = vmatpush2.msra.mxu0 0.0
      %2069 = vmatprep.subr.mxu0 0.0
      %2070 = vmatpush2.msra.mxu0 0.0
      %2071 = vmatprep.subr.mxu0 0.0
      %2072 = vmatpush2.msra.mxu0 0.0
      %2073 = vmatprep.subr.mxu0 0.0
      %2074 = vmatpush2.msra.mxu0 0.0
      %2075 = vmatprep.subr.mxu0 0.0
      %2076 = vmatpush2.msra.mxu0 0.0
      %2077 = vmatprep.subr.mxu0 0.0
      %2078 = vmatpush2.msra.mxu0 0.0
      %2079 = vmatprep.subr.mxu0 0.0
      %2080 = vmatpush2.msra.mxu0 0.0
      %2081 = vmatprep.subr.mxu0 0.0
      %2082 = vmatpush2.msra.mxu0 0.0
      %2083 = vmatprep.subr.mxu0 0.0
      %2084 = vmatpush2.msra.mxu0 0.0
      %2085 = vmatprep.subr.mxu0 0.0
      %2086 = vmatpush2.msra.mxu0 0.0
      %2087 = vmatprep.subr.mxu0 0.0
      %2088 = vmatpush2.msra.mxu0 0.0
      %2089 = vmatprep.subr.mxu0 0.0
      %2090 = vmatpush2.msra.mxu0 0.0
      %2091 = vmatprep.subr.mxu0 0.0
      %2092 = vmatpush2.msra.mxu0 0.0
      %2093 = vmatprep.mubr.f32.mxu0 0.0
      %2094 = vmatmul.mubr.f32.gmra.mxu0 %v2024
      %v2095 = vpop.f32.mrf.mxu0
      %v2096 = vadd.f32 0.0, %v2095
      %v2097 = vpop.f32.mrf.mxu0
      %2098 = vmatprep.mubr.f32.mxu0 0.0
      %2099 = vmatmul.mubr.f32.gmra.mxu0 %v2027
      %v2100 = vpop.f32.mrf.mxu0
      %v2101 = vadd.f32 0.0, %v2100
      %v2102 = vpop.f32.mrf.mxu0
      %2103 = vdwg.mxu0
      %v2105 = vsel %vm792, %v2096, 0
      %v2108 = vsel %vm792, %v2101, 0
      %2110 = vmatprep.subr.mxu0 0.0
      %2111 = vmatpush1.msra.mxu0 0.0
      %2112 = vmatprep.subr.mxu0 0.0
      %2113 = vmatpush1.msra.mxu0 0.0
      %2114 = vmatprep.subr.mxu0 0.0
      %2115 = vmatpush1.msra.mxu0 0.0
      %2116 = vmatprep.subr.mxu0 0.0
      %2117 = vmatpush1.msra.mxu0 0.0
      %2118 = vmatprep.subr.mxu0 0.0
      %2119 = vmatpush1.msra.mxu0 0.0
      %2120 = vmatprep.subr.mxu0 0.0
      %2121 = vmatpush1.msra.mxu0 0.0
      %2122 = vmatprep.subr.mxu0 0.0
      %2123 = vmatpush1.msra.mxu0 0.0
      %2124 = vmatprep.subr.mxu0 0.0
      %2125 = vmatpush1.msra.mxu0 0.0
      %2126 = vmatprep.subr.mxu0 0.0
      %2127 = vmatpush1.msra.mxu0 0.0
      %2128 = vmatprep.subr.mxu0 0.0
      %2129 = vmatpush1.msra.mxu0 0.0
      %2130 = vmatprep.subr.mxu0 0.0
      %2131 = vmatpush1.msra.mxu0 0.0
      %2132 = vmatprep.subr.mxu0 0.0
      %2133 = vmatpush1.msra.mxu0 0.0
      %2134 = vmatprep.subr.mxu0 0.0
      %2135 = vmatpush1.msra.mxu0 0.0
      %2136 = vmatprep.subr.mxu0 0.0
      %2137 = vmatpush1.msra.mxu0 0.0
      %2138 = vmatprep.subr.mxu0 0.0
      %2139 = vmatpush1.msra.mxu0 0.0
      %2140 = vmatprep.subr.mxu0 0.0
      %2141 = vmatpush1.msra.mxu0 %v703
      %2142 = vmatprep.subr.mxu0 0.0
      %2143 = vmatpush2.msra.mxu0 0.0
      %2144 = vmatprep.subr.mxu0 0.0
      %2145 = vmatpush2.msra.mxu0 0.0
      %2146 = vmatprep.subr.mxu0 0.0
      %2147 = vmatpush2.msra.mxu0 0.0
      %2148 = vmatprep.subr.mxu0 0.0
      %2149 = vmatpush2.msra.mxu0 0.0
      %2150 = vmatprep.subr.mxu0 0.0
      %2151 = vmatpush2.msra.mxu0 0.0
      %2152 = vmatprep.subr.mxu0 0.0
      %2153 = vmatpush2.msra.mxu0 0.0
      %2154 = vmatprep.subr.mxu0 0.0
      %2155 = vmatpush2.msra.mxu0 0.0
      %2156 = vmatprep.subr.mxu0 0.0
      %2157 = vmatpush2.msra.mxu0 0.0
      %2158 = vmatprep.subr.mxu0 0.0
      %2159 = vmatpush2.msra.mxu0 0.0
      %2160 = vmatprep.subr.mxu0 0.0
      %2161 = vmatpush2.msra.mxu0 0.0
      %2162 = vmatprep.subr.mxu0 0.0
      %2163 = vmatpush2.msra.mxu0 0.0
      %2164 = vmatprep.subr.mxu0 0.0
      %2165 = vmatpush2.msra.mxu0 0.0
      %2166 = vmatprep.subr.mxu0 0.0
      %2167 = vmatpush2.msra.mxu0 0.0
      %2168 = vmatprep.subr.mxu0 0.0
      %2169 = vmatpush2.msra.mxu0 0.0
      %2170 = vmatprep.subr.mxu0 0.0
      %2171 = vmatpush2.msra.mxu0 0.0
      %2172 = vmatprep.subr.mxu0 0.0
      %2173 = vmatpush2.msra.mxu0 0.0
      %2174 = vmatprep.mubr.f32.mxu0 0.0
      %2175 = vmatmul.mubr.f32.gmra.mxu0 %v2105
      %v2176 = vpop.f32.mrf.mxu0
      %v2177 = vadd.f32 0.0, %v2176
      %v2178 = vpop.f32.mrf.mxu0
      %2179 = vmatprep.mubr.f32.mxu0 0.0
      %2180 = vmatmul.mubr.f32.gmra.mxu0 %v2108
      %v2181 = vpop.f32.mrf.mxu0
      %v2182 = vadd.f32 0.0, %v2181
      %v2183 = vpop.f32.mrf.mxu0
      %2184 = vdwg.mxu0
      %v2185 = vadd.f32 %v2012, %v2177
      %v2186 = vadd.f32 %v2017, %v2182
      %v2187 = vld [vmem:[%s8] sm:$0xff]
      %v2188 = vld [vmem:[%s8 + $0x8] sm:$0xff]
      %2190 = vset.pattern.permute.xlu0 0
      %2191 = vperm.xlu0 %2190, %v2187
      %v2192 = vpop.permute.xlu0 %2191
      %2195 = vset.pattern.permute.xlu0 0
      %2196 = vperm.xlu0 %2195, %v2188
      %v2197 = vpop.permute.xlu0 %2196
      %v2199 = vadd.f32 %v2185, %v2192
      %v2200 = vadd.f32 %v2186, %v2197
      %v2201 = vsub.f32 0.0, %v2199
      %v2202 = vsub.f32 0.0, %v2200
      %v2203 = vmul.f32 %v2201, 1.442695
      %v2204 = vpow.pop %v2203
      %v2205 = vmul.f32 %v2202, 1.442695
      %v2206 = vpow.pop %v2205
      %v2207 = vadd.f32 %v2204, 1.0
      %v2208 = vadd.f32 %v2206, 1.0
      %v2209 = vrcp.pop %v2207
      %v2210 = vrcp.pop %v2208
      %v2212 = vsel %vm792, %v2209, 0
      %v2215 = vsel %vm792, %v2210, 0
      %2217 = vmatprep.subr.mxu0 0.0
      %2218 = vmatpush1.msra.mxu0 0.0
      %2219 = vmatprep.subr.mxu0 0.0
      %2220 = vmatpush1.msra.mxu0 0.0
      %2221 = vmatprep.subr.mxu0 0.0
      %2222 = vmatpush1.msra.mxu0 0.0
      %2223 = vmatprep.subr.mxu0 0.0
      %2224 = vmatpush1.msra.mxu0 0.0
      %2225 = vmatprep.subr.mxu0 0.0
      %2226 = vmatpush1.msra.mxu0 0.0
      %2227 = vmatprep.subr.mxu0 0.0
      %2228 = vmatpush1.msra.mxu0 0.0
      %2229 = vmatprep.subr.mxu0 0.0
      %2230 = vmatpush1.msra.mxu0 0.0
      %2231 = vmatprep.subr.mxu0 0.0
      %2232 = vmatpush1.msra.mxu0 0.0
      %2233 = vmatprep.subr.mxu0 0.0
      %2234 = vmatpush1.msra.mxu0 0.0
      %2235 = vmatprep.subr.mxu0 0.0
      %2236 = vmatpush1.msra.mxu0 0.0
      %2237 = vmatprep.subr.mxu0 0.0
      %2238 = vmatpush1.msra.mxu0 0.0
      %2239 = vmatprep.subr.mxu0 0.0
      %2240 = vmatpush1.msra.mxu0 0.0
      %2241 = vmatprep.subr.mxu0 0.0
      %2242 = vmatpush1.msra.mxu0 0.0
      %2243 = vmatprep.subr.mxu0 0.0
      %2244 = vmatpush1.msra.mxu0 0.0
      %2245 = vmatprep.subr.mxu0 0.0
      %2246 = vmatpush1.msra.mxu0 0.0
      %2247 = vmatprep.subr.mxu0 0.0
      %2248 = vmatpush1.msra.mxu0 %v1180
      %2249 = vmatprep.subr.mxu0 0.0
      %2250 = vmatpush2.msra.mxu0 0.0
      %2251 = vmatprep.subr.mxu0 0.0
      %2252 = vmatpush2.msra.mxu0 0.0
      %2253 = vmatprep.subr.mxu0 0.0
      %2254 = vmatpush2.msra.mxu0 0.0
      %2255 = vmatprep.subr.mxu0 0.0
      %2256 = vmatpush2.msra.mxu0 0.0
      %2257 = vmatprep.subr.mxu0 0.0
      %2258 = vmatpush2.msra.mxu0 0.0
      %2259 = vmatprep.subr.mxu0 0.0
      %2260 = vmatpush2.msra.mxu0 0.0
      %2261 = vmatprep.subr.mxu0 0.0
      %2262 = vmatpush2.msra.mxu0 0.0
      %2263 = vmatprep.subr.mxu0 0.0
      %2264 = vmatpush2.msra.mxu0 0.0
      %2265 = vmatprep.subr.mxu0 0.0
      %2266 = vmatpush2.msra.mxu0 0.0
      %2267 = vmatprep.subr.mxu0 0.0
      %2268 = vmatpush2.msra.mxu0 0.0
      %2269 = vmatprep.subr.mxu0 0.0
      %2270 = vmatpush2.msra.mxu0 0.0
      %2271 = vmatprep.subr.mxu0 0.0
      %2272 = vmatpush2.msra.mxu0 0.0
      %2273 = vmatprep.subr.mxu0 0.0
      %2274 = vmatpush2.msra.mxu0 0.0
      %2275 = vmatprep.subr.mxu0 0.0
      %2276 = vmatpush2.msra.mxu0 0.0
      %2277 = vmatprep.subr.mxu0 0.0
      %2278 = vmatpush2.msra.mxu0 0.0
      %2279 = vmatprep.subr.mxu0 0.0
      %2280 = vmatpush2.msra.mxu0 0.0
      %2281 = vmatprep.mubr.f32.mxu0 0.0
      %2282 = vmatmul.mubr.f32.gmra.mxu0 %v2212
      %v2283 = vpop.f32.mrf.mxu0
      %v2284 = vadd.f32 0.0, %v2283
      %v2285 = vpop.f32.mrf.mxu0
      %2286 = vmatprep.mubr.f32.mxu0 0.0
      %2287 = vmatmul.mubr.f32.gmra.mxu0 %v2215
      %v2288 = vpop.f32.mrf.mxu0
      %v2289 = vadd.f32 0.0, %v2288
      %v2290 = vpop.f32.mrf.mxu0
      %2291 = vdwg.mxu0
      %2292 = vmatprep.subr.mxu0 0.0
      %2293 = vmatpush1.msra.mxu0 0.0
      %2294 = vmatprep.subr.mxu0 0.0
      %2295 = vmatpush1.msra.mxu0 0.0
      %2296 = vmatprep.subr.mxu0 0.0
      %2297 = vmatpush1.msra.mxu0 0.0
      %2298 = vmatprep.subr.mxu0 0.0
      %2299 = vmatpush1.msra.mxu0 0.0
      %2300 = vmatprep.subr.mxu0 0.0
      %2301 = vmatpush1.msra.mxu0 0.0
      %2302 = vmatprep.subr.mxu0 0.0
      %2303 = vmatpush1.msra.mxu0 0.0
      %2304 = vmatprep.subr.mxu0 0.0
      %2305 = vmatpush1.msra.mxu0 0.0
      %2306 = vmatprep.subr.mxu0 0.0
      %2307 = vmatpush1.msra.mxu0 0.0
      %2308 = vmatprep.subr.mxu0 0.0
      %2309 = vmatpush1.msra.mxu0 0.0
      %2310 = vmatprep.subr.mxu0 0.0
      %2311 = vmatpush1.msra.mxu0 0.0
      %2312 = vmatprep.subr.mxu0 0.0
      %2313 = vmatpush1.msra.mxu0 0.0
      %2314 = vmatprep.subr.mxu0 0.0
      %2315 = vmatpush1.msra.mxu0 0.0
      %2316 = vmatprep.subr.mxu0 0.0
      %2317 = vmatpush1.msra.mxu0 0.0
      %2318 = vmatprep.subr.mxu0 0.0
      %2319 = vmatpush1.msra.mxu0 0.0
      %2320 = vmatprep.subr.mxu0 0.0
      %2321 = vmatpush1.msra.mxu0 0.0
      %2322 = vmatprep.subr.mxu0 0.0
      %2323 = vmatpush1.msra.mxu0 %v1260
      %2324 = vmatprep.subr.mxu0 0.0
      %2325 = vmatpush2.msra.mxu0 0.0
      %2326 = vmatprep.subr.mxu0 0.0
      %2327 = vmatpush2.msra.mxu0 0.0
      %2328 = vmatprep.subr.mxu0 0.0
      %2329 = vmatpush2.msra.mxu0 0.0
      %2330 = vmatprep.subr.mxu0 0.0
      %2331 = vmatpush2.msra.mxu0 0.0
      %2332 = vmatprep.subr.mxu0 0.0
      %2333 = vmatpush2.msra.mxu0 0.0
      %2334 = vmatprep.subr.mxu0 0.0
      %2335 = vmatpush2.msra.mxu0 0.0
      %2336 = vmatprep.subr.mxu0 0.0
      %2337 = vmatpush2.msra.mxu0 0.0
      %2338 = vmatprep.subr.mxu0 0.0
      %2339 = vmatpush2.msra.mxu0 0.0
      %2340 = vmatprep.subr.mxu0 0.0
      %2341 = vmatpush2.msra.mxu0 0.0
      %2342 = vmatprep.subr.mxu0 0.0
      %2343 = vmatpush2.msra.mxu0 0.0
      %2344 = vmatprep.subr.mxu0 0.0
      %2345 = vmatpush2.msra.mxu0 0.0
      %2346 = vmatprep.subr.mxu0 0.0
      %2347 = vmatpush2.msra.mxu0 0.0
      %2348 = vmatprep.subr.mxu0 0.0
      %2349 = vmatpush2.msra.mxu0 0.0
      %2350 = vmatprep.subr.mxu0 0.0
      %2351 = vmatpush2.msra.mxu0 0.0
      %2352 = vmatprep.subr.mxu0 0.0
      %2353 = vmatpush2.msra.mxu0 0.0
      %2354 = vmatprep.subr.mxu0 0.0
      %2355 = vmatpush2.msra.mxu0 0.0
      %2356 = vmatprep.mubr.f32.mxu0 0.0
      %2357 = vmatmul.mubr.f32.gmra.mxu0 %v2212
      %v2358 = vpop.f32.mrf.mxu0
      %v2359 = vadd.f32 0.0, %v2358
      %v2360 = vpop.f32.mrf.mxu0
      %2361 = vmatprep.mubr.f32.mxu0 0.0
      %2362 = vmatmul.mubr.f32.gmra.mxu0 %v2215
      %v2363 = vpop.f32.mrf.mxu0
      %v2364 = vadd.f32 0.0, %v2363
      %v2365 = vpop.f32.mrf.mxu0
      %2366 = vdwg.mxu0
      %v2367 = vmax.f32 %v2284, %v2359
      %v2368 = vmax.f32 %v2289, %v2364
      %v2369 = vld [vmem:[%s9] sm:$0xff]
      %v2371 = vsel %vm549, %v2369, 0
      %2373 = vmatprep.subr.mxu0 0.0
      %2374 = vmatpush1.msra.mxu0 0.0
      %2375 = vmatprep.subr.mxu0 0.0
      %2376 = vmatpush1.msra.mxu0 0.0
      %2377 = vmatprep.subr.mxu0 0.0
      %2378 = vmatpush1.msra.mxu0 0.0
      %2379 = vmatprep.subr.mxu0 0.0
      %2380 = vmatpush1.msra.mxu0 0.0
      %2381 = vmatprep.subr.mxu0 0.0
      %2382 = vmatpush1.msra.mxu0 0.0
      %2383 = vmatprep.subr.mxu0 0.0
      %2384 = vmatpush1.msra.mxu0 0.0
      %2385 = vmatprep.subr.mxu0 0.0
      %2386 = vmatpush1.msra.mxu0 0.0
      %2387 = vmatprep.subr.mxu0 0.0
      %2388 = vmatpush1.msra.mxu0 0.0
      %2389 = vmatprep.subr.mxu0 0.0
      %2390 = vmatpush1.msra.mxu0 0.0
      %2391 = vmatprep.subr.mxu0 0.0
      %2392 = vmatpush1.msra.mxu0 0.0
      %2393 = vmatprep.subr.mxu0 0.0
      %2394 = vmatpush1.msra.mxu0 0.0
      %2395 = vmatprep.subr.mxu0 0.0
      %2396 = vmatpush1.msra.mxu0 0.0
      %2397 = vmatprep.subr.mxu0 0.0
      %2398 = vmatpush1.msra.mxu0 0.0
      %2399 = vmatprep.subr.mxu0 0.0
      %2400 = vmatpush1.msra.mxu0 0.0
      %2401 = vmatprep.subr.mxu0 0.0
      %2402 = vmatpush1.msra.mxu0 %v2368
      %2403 = vmatprep.subr.mxu0 0.0
      %2404 = vmatpush1.msra.mxu0 %v2367
      %2405 = vmatprep.subr.mxu0 0.0
      %2406 = vmatpush2.msra.mxu0 0.0
      %2407 = vmatprep.subr.mxu0 0.0
      %2408 = vmatpush2.msra.mxu0 0.0
      %2409 = vmatprep.subr.mxu0 0.0
      %2410 = vmatpush2.msra.mxu0 0.0
      %2411 = vmatprep.subr.mxu0 0.0
      %2412 = vmatpush2.msra.mxu0 0.0
      %2413 = vmatprep.subr.mxu0 0.0
      %2414 = vmatpush2.msra.mxu0 0.0
      %2415 = vmatprep.subr.mxu0 0.0
      %2416 = vmatpush2.msra.mxu0 0.0
      %2417 = vmatprep.subr.mxu0 0.0
      %2418 = vmatpush2.msra.mxu0 0.0
      %2419 = vmatprep.subr.mxu0 0.0
      %2420 = vmatpush2.msra.mxu0 0.0
      %2421 = vmatprep.subr.mxu0 0.0
      %2422 = vmatpush2.msra.mxu0 0.0
      %2423 = vmatprep.subr.mxu0 0.0
      %2424 = vmatpush2.msra.mxu0 0.0
      %2425 = vmatprep.subr.mxu0 0.0
      %2426 = vmatpush2.msra.mxu0 0.0
      %2427 = vmatprep.subr.mxu0 0.0
      %2428 = vmatpush2.msra.mxu0 0.0
      %2429 = vmatprep.subr.mxu0 0.0
      %2430 = vmatpush2.msra.mxu0 0.0
      %2431 = vmatprep.subr.mxu0 0.0
      %2432 = vmatpush2.msra.mxu0 0.0
      %2433 = vmatprep.subr.mxu0 0.0
      %2434 = vmatpush2.msra.mxu0 0.0
      %2435 = vmatprep.subr.mxu0 0.0
      %2436 = vmatpush2.msra.mxu0 0.0
      %2437 = vmatprep.mubr.f32.mxu0 0.0
      %2438 = vmatmul.mubr.f32.gmra.mxu0 %v2371
      %v2439 = vpop.f32.mrf.mxu0
      %v2440 = vadd.f32 0.0, %v2439
      %v2441 = vpop.f32.mrf.mxu0
      %2442 = vdwg.mxu0
      %s2443 = scalar_lea.vmem %s9, 8
      %v2444 = vld [vmem:[%s2443] sm:$0xff]
      %v2446 = vsel %vm549, %v2444, 0
      %2448 = vmatprep.subr.mxu0 0.0
      %2449 = vmatpush1.msra.mxu0 0.0
      %2450 = vmatprep.subr.mxu0 0.0
      %2451 = vmatpush1.msra.mxu0 0.0
      %2452 = vmatprep.subr.mxu0 0.0
      %2453 = vmatpush1.msra.mxu0 0.0
      %2454 = vmatprep.subr.mxu0 0.0
      %2455 = vmatpush1.msra.mxu0 0.0
      %2456 = vmatprep.subr.mxu0 0.0
      %2457 = vmatpush1.msra.mxu0 0.0
      %2458 = vmatprep.subr.mxu0 0.0
      %2459 = vmatpush1.msra.mxu0 0.0
      %2460 = vmatprep.subr.mxu0 0.0
      %2461 = vmatpush1.msra.mxu0 0.0
      %2462 = vmatprep.subr.mxu0 0.0
      %2463 = vmatpush1.msra.mxu0 0.0
      %2464 = vmatprep.subr.mxu0 0.0
      %2465 = vmatpush1.msra.mxu0 0.0
      %2466 = vmatprep.subr.mxu0 0.0
      %2467 = vmatpush1.msra.mxu0 0.0
      %2468 = vmatprep.subr.mxu0 0.0
      %2469 = vmatpush1.msra.mxu0 0.0
      %2470 = vmatprep.subr.mxu0 0.0
      %2471 = vmatpush1.msra.mxu0 0.0
      %2472 = vmatprep.subr.mxu0 0.0
      %2473 = vmatpush1.msra.mxu0 0.0
      %2474 = vmatprep.subr.mxu0 0.0
      %2475 = vmatpush1.msra.mxu0 0.0
      %2476 = vmatprep.subr.mxu0 0.0
      %2477 = vmatpush1.msra.mxu0 %v2368
      %2478 = vmatprep.subr.mxu0 0.0
      %2479 = vmatpush1.msra.mxu0 %v2367
      %2480 = vmatprep.subr.mxu0 0.0
      %2481 = vmatpush2.msra.mxu0 0.0
      %2482 = vmatprep.subr.mxu0 0.0
      %2483 = vmatpush2.msra.mxu0 0.0
      %2484 = vmatprep.subr.mxu0 0.0
      %2485 = vmatpush2.msra.mxu0 0.0
      %2486 = vmatprep.subr.mxu0 0.0
      %2487 = vmatpush2.msra.mxu0 0.0
      %2488 = vmatprep.subr.mxu0 0.0
      %2489 = vmatpush2.msra.mxu0 0.0
      %2490 = vmatprep.subr.mxu0 0.0
      %2491 = vmatpush2.msra.mxu0 0.0
      %2492 = vmatprep.subr.mxu0 0.0
      %2493 = vmatpush2.msra.mxu0 0.0
      %2494 = vmatprep.subr.mxu0 0.0
      %2495 = vmatpush2.msra.mxu0 0.0
      %2496 = vmatprep.subr.mxu0 0.0
      %2497 = vmatpush2.msra.mxu0 0.0
      %2498 = vmatprep.subr.mxu0 0.0
      %2499 = vmatpush2.msra.mxu0 0.0
      %2500 = vmatprep.subr.mxu0 0.0
      %2501 = vmatpush2.msra.mxu0 0.0
      %2502 = vmatprep.subr.mxu0 0.0
      %2503 = vmatpush2.msra.mxu0 0.0
      %2504 = vmatprep.subr.mxu0 0.0
      %2505 = vmatpush2.msra.mxu0 0.0
      %2506 = vmatprep.subr.mxu0 0.0
      %2507 = vmatpush2.msra.mxu0 0.0
      %2508 = vmatprep.subr.mxu0 0.0
      %2509 = vmatpush2.msra.mxu0 0.0
      %2510 = vmatprep.subr.mxu0 0.0
      %2511 = vmatpush2.msra.mxu0 0.0
      %2512 = vmatprep.mubr.f32.mxu0 0.0
      %2513 = vmatmul.mubr.f32.gmra.mxu0 %v2446
      %v2514 = vpop.f32.mrf.mxu0
      %v2515 = vadd.f32 0.0, %v2514
      %v2516 = vpop.f32.mrf.mxu0
      %2517 = vdwg.mxu0
      %v2519 = vsel %vm389, %v2440, 0
      %v2522 = vsel %vm393, %v472, 0
      %2524 = vmatprep.subr.mxu0 0.0
      %2525 = vmatpush1.msra.mxu0 0.0
      %2526 = vmatprep.subr.mxu0 0.0
      %2527 = vmatpush1.msra.mxu0 0.0
      %2528 = vmatprep.subr.mxu0 0.0
      %2529 = vmatpush1.msra.mxu0 0.0
      %2530 = vmatprep.subr.mxu0 0.0
      %2531 = vmatpush1.msra.mxu0 0.0
      %2532 = vmatprep.subr.mxu0 0.0
      %2533 = vmatpush1.msra.mxu0 0.0
      %2534 = vmatprep.subr.mxu0 0.0
      %2535 = vmatpush1.msra.mxu0 0.0
      %2536 = vmatprep.subr.mxu0 0.0
      %2537 = vmatpush1.msra.mxu0 0.0
      %2538 = vmatprep.subr.mxu0 0.0
      %2539 = vmatpush1.msra.mxu0 0.0
      %2540 = vmatprep.subr.mxu0 0.0
      %2541 = vmatpush1.msra.mxu0 0.0
      %2542 = vmatprep.subr.mxu0 0.0
      %2543 = vmatpush1.msra.mxu0 0.0
      %2544 = vmatprep.subr.mxu0 0.0
      %2545 = vmatpush1.msra.mxu0 0.0
      %2546 = vmatprep.subr.mxu0 0.0
      %2547 = vmatpush1.msra.mxu0 0.0
      %2548 = vmatprep.subr.mxu0 0.0
      %2549 = vmatpush1.msra.mxu0 0.0
      %2550 = vmatprep.subr.mxu0 0.0
      %2551 = vmatpush1.msra.mxu0 0.0
      %2552 = vmatprep.subr.mxu0 0.0
      %2553 = vmatpush1.msra.mxu0 0.0
      %2554 = vmatprep.subr.mxu0 0.0
      %2555 = vmatpush1.msra.mxu0 %v2522
      %2556 = vmatprep.subr.mxu0 0.0
      %2557 = vmatpush2.msra.mxu0 0.0
      %2558 = vmatprep.subr.mxu0 0.0
      %2559 = vmatpush2.msra.mxu0 0.0
      %2560 = vmatprep.subr.mxu0 0.0
      %2561 = vmatpush2.msra.mxu0 0.0
      %2562 = vmatprep.subr.mxu0 0.0
      %2563 = vmatpush2.msra.mxu0 0.0
      %2564 = vmatprep.subr.mxu0 0.0
      %2565 = vmatpush2.msra.mxu0 0.0
      %2566 = vmatprep.subr.mxu0 0.0
      %2567 = vmatpush2.msra.mxu0 0.0
      %2568 = vmatprep.subr.mxu0 0.0
      %2569 = vmatpush2.msra.mxu0 0.0
      %2570 = vmatprep.subr.mxu0 0.0
      %2571 = vmatpush2.msra.mxu0 0.0
      %2572 = vmatprep.subr.mxu0 0.0
      %2573 = vmatpush2.msra.mxu0 0.0
      %2574 = vmatprep.subr.mxu0 0.0
      %2575 = vmatpush2.msra.mxu0 0.0
      %2576 = vmatprep.subr.mxu0 0.0
      %2577 = vmatpush2.msra.mxu0 0.0
      %2578 = vmatprep.subr.mxu0 0.0
      %2579 = vmatpush2.msra.mxu0 0.0
      %2580 = vmatprep.subr.mxu0 0.0
      %2581 = vmatpush2.msra.mxu0 0.0
      %2582 = vmatprep.subr.mxu0 0.0
      %2583 = vmatpush2.msra.mxu0 0.0
      %2584 = vmatprep.subr.mxu0 0.0
      %2585 = vmatpush2.msra.mxu0 0.0
      %2586 = vmatprep.subr.mxu0 0.0
      %2587 = vmatpush2.msra.mxu0 0.0
      %2588 = vmatprep.mubr.f32.mxu0 0.0
      %2589 = vmatmul.mubr.f32.gmra.mxu0 %v2519
      %v2590 = vpop.f32.mrf.mxu0
      %v2591 = vadd.f32 %v2515, %v2590
      %v2592 = vpop.f32.mrf.mxu0
      %2593 = vdwg.mxu0
      %s2594 = scalar_lea.vmem %s9, 16
      %v2595 = vld [vmem:[%s2594] sm:$0xff]
      %v2597 = vsel %vm549, %v2595, 0
      %2599 = vmatprep.subr.mxu0 0.0
      %2600 = vmatpush1.msra.mxu0 0.0
      %2601 = vmatprep.subr.mxu0 0.0
      %2602 = vmatpush1.msra.mxu0 0.0
      %2603 = vmatprep.subr.mxu0 0.0
      %2604 = vmatpush1.msra.mxu0 0.0
      %2605 = vmatprep.subr.mxu0 0.0
      %2606 = vmatpush1.msra.mxu0 0.0
      %2607 = vmatprep.subr.mxu0 0.0
      %2608 = vmatpush1.msra.mxu0 0.0
      %2609 = vmatprep.subr.mxu0 0.0
      %2610 = vmatpush1.msra.mxu0 0.0
      %2611 = vmatprep.subr.mxu0 0.0
      %2612 = vmatpush1.msra.mxu0 0.0
      %2613 = vmatprep.subr.mxu0 0.0
      %2614 = vmatpush1.msra.mxu0 0.0
      %2615 = vmatprep.subr.mxu0 0.0
      %2616 = vmatpush1.msra.mxu0 0.0
      %2617 = vmatprep.subr.mxu0 0.0
      %2618 = vmatpush1.msra.mxu0 0.0
      %2619 = vmatprep.subr.mxu0 0.0
      %2620 = vmatpush1.msra.mxu0 0.0
      %2621 = vmatprep.subr.mxu0 0.0
      %2622 = vmatpush1.msra.mxu0 0.0
      %2623 = vmatprep.subr.mxu0 0.0
      %2624 = vmatpush1.msra.mxu0 0.0
      %2625 = vmatprep.subr.mxu0 0.0
      %2626 = vmatpush1.msra.mxu0 0.0
      %2627 = vmatprep.subr.mxu0 0.0
      %2628 = vmatpush1.msra.mxu0 %v2368
      %2629 = vmatprep.subr.mxu0 0.0
      %2630 = vmatpush1.msra.mxu0 %v2367
      %2631 = vmatprep.subr.mxu0 0.0
      %2632 = vmatpush2.msra.mxu0 0.0
      %2633 = vmatprep.subr.mxu0 0.0
      %2634 = vmatpush2.msra.mxu0 0.0
      %2635 = vmatprep.subr.mxu0 0.0
      %2636 = vmatpush2.msra.mxu0 0.0
      %2637 = vmatprep.subr.mxu0 0.0
      %2638 = vmatpush2.msra.mxu0 0.0
      %2639 = vmatprep.subr.mxu0 0.0
      %2640 = vmatpush2.msra.mxu0 0.0
      %2641 = vmatprep.subr.mxu0 0.0
      %2642 = vmatpush2.msra.mxu0 0.0
      %2643 = vmatprep.subr.mxu0 0.0
      %2644 = vmatpush2.msra.mxu0 0.0
      %2645 = vmatprep.subr.mxu0 0.0
      %2646 = vmatpush2.msra.mxu0 0.0
      %2647 = vmatprep.subr.mxu0 0.0
      %2648 = vmatpush2.msra.mxu0 0.0
      %2649 = vmatprep.subr.mxu0 0.0
      %2650 = vmatpush2.msra.mxu0 0.0
      %2651 = vmatprep.subr.mxu0 0.0
      %2652 = vmatpush2.msra.mxu0 0.0
      %2653 = vmatprep.subr.mxu0 0.0
      %2654 = vmatpush2.msra.mxu0 0.0
      %2655 = vmatprep.subr.mxu0 0.0
      %2656 = vmatpush2.msra.mxu0 0.0
      %2657 = vmatprep.subr.mxu0 0.0
      %2658 = vmatpush2.msra.mxu0 0.0
      %2659 = vmatprep.subr.mxu0 0.0
      %2660 = vmatpush2.msra.mxu0 0.0
      %2661 = vmatprep.subr.mxu0 0.0
      %2662 = vmatpush2.msra.mxu0 0.0
      %2663 = vmatprep.mubr.f32.mxu0 0.0
      %2664 = vmatmul.mubr.f32.gmra.mxu0 %v2597
      %v2665 = vpop.f32.mrf.mxu0
      %v2666 = vadd.f32 0.0, %v2665
      %v2667 = vpop.f32.mrf.mxu0
      %2668 = vdwg.mxu0
      %v2670 = vsel %vm389, %v2666, 0
      %v2673 = vsel %vm393, %v703, 0
      %2675 = vmatprep.subr.mxu0 0.0
      %2676 = vmatpush1.msra.mxu0 0.0
      %2677 = vmatprep.subr.mxu0 0.0
      %2678 = vmatpush1.msra.mxu0 0.0
      %2679 = vmatprep.subr.mxu0 0.0
      %2680 = vmatpush1.msra.mxu0 0.0
      %2681 = vmatprep.subr.mxu0 0.0
      %2682 = vmatpush1.msra.mxu0 0.0
      %2683 = vmatprep.subr.mxu0 0.0
      %2684 = vmatpush1.msra.mxu0 0.0
      %2685 = vmatprep.subr.mxu0 0.0
      %2686 = vmatpush1.msra.mxu0 0.0
      %2687 = vmatprep.subr.mxu0 0.0
      %2688 = vmatpush1.msra.mxu0 0.0
      %2689 = vmatprep.subr.mxu0 0.0
      %2690 = vmatpush1.msra.mxu0 0.0
      %2691 = vmatprep.subr.mxu0 0.0
      %2692 = vmatpush1.msra.mxu0 0.0
      %2693 = vmatprep.subr.mxu0 0.0
      %2694 = vmatpush1.msra.mxu0 0.0
      %2695 = vmatprep.subr.mxu0 0.0
      %2696 = vmatpush1.msra.mxu0 0.0
      %2697 = vmatprep.subr.mxu0 0.0
      %2698 = vmatpush1.msra.mxu0 0.0
      %2699 = vmatprep.subr.mxu0 0.0
      %2700 = vmatpush1.msra.mxu0 0.0
      %2701 = vmatprep.subr.mxu0 0.0
      %2702 = vmatpush1.msra.mxu0 0.0
      %2703 = vmatprep.subr.mxu0 0.0
      %2704 = vmatpush1.msra.mxu0 0.0
      %2705 = vmatprep.subr.mxu0 0.0
      %2706 = vmatpush1.msra.mxu0 %v2673
      %2707 = vmatprep.subr.mxu0 0.0
      %2708 = vmatpush2.msra.mxu0 0.0
      %2709 = vmatprep.subr.mxu0 0.0
      %2710 = vmatpush2.msra.mxu0 0.0
      %2711 = vmatprep.subr.mxu0 0.0
      %2712 = vmatpush2.msra.mxu0 0.0
      %2713 = vmatprep.subr.mxu0 0.0
      %2714 = vmatpush2.msra.mxu0 0.0
      %2715 = vmatprep.subr.mxu0 0.0
      %2716 = vmatpush2.msra.mxu0 0.0
      %2717 = vmatprep.subr.mxu0 0.0
      %2718 = vmatpush2.msra.mxu0 0.0
      %2719 = vmatprep.subr.mxu0 0.0
      %2720 = vmatpush2.msra.mxu0 0.0
      %2721 = vmatprep.subr.mxu0 0.0
      %2722 = vmatpush2.msra.mxu0 0.0
      %2723 = vmatprep.subr.mxu0 0.0
      %2724 = vmatpush2.msra.mxu0 0.0
      %2725 = vmatprep.subr.mxu0 0.0
      %2726 = vmatpush2.msra.mxu0 0.0
      %2727 = vmatprep.subr.mxu0 0.0
      %2728 = vmatpush2.msra.mxu0 0.0
      %2729 = vmatprep.subr.mxu0 0.0
      %2730 = vmatpush2.msra.mxu0 0.0
      %2731 = vmatprep.subr.mxu0 0.0
      %2732 = vmatpush2.msra.mxu0 0.0
      %2733 = vmatprep.subr.mxu0 0.0
      %2734 = vmatpush2.msra.mxu0 0.0
      %2735 = vmatprep.subr.mxu0 0.0
      %2736 = vmatpush2.msra.mxu0 0.0
      %2737 = vmatprep.subr.mxu0 0.0
      %2738 = vmatpush2.msra.mxu0 0.0
      %2739 = vmatprep.mubr.f32.mxu0 0.0
      %2740 = vmatmul.mubr.f32.gmra.mxu0 %v2670
      %v2741 = vpop.f32.mrf.mxu0
      %v2742 = vadd.f32 0.0, %v2741
      %v2743 = vpop.f32.mrf.mxu0
      %2744 = vdwg.mxu0
      %v2745 = vadd.f32 %v2591, %v2742
      %v2746 = vld [vmem:[%s10] sm:$0xff]
      %2748 = vset.pattern.permute.xlu0 0
      %2749 = vperm.xlu0 %2748, %v2746
      %v2750 = vpop.permute.xlu0 %2749
      %v2752 = vadd.f32 %v2745, %v2750
      %v2753 = vsub.f32 0.0, %v2752
      %v2754 = vmul.f32 %v2753, 1.442695
      %v2755 = vpow.pop %v2754
      %v2756 = vadd.f32 %v2755, 1.0
      %v2757 = vrcp.pop %v2756
      %2758 = vst.msk [vmem:[%s381] sm:$0xff] %vm389, %v2757
      %p2759 = scmp.lt.s32.totalorder %s22, 1
      %s2760 = scalar_select %p2759, %s22, 1
      %s2761 = smul.addr %s2760, 8
      %s2762 = scalar_lea.vmem %s11, %s2761
      // Predicated region
      $region65: #{tpu_custom_call.1} parent=63 // pred_check
        %p2763 = pneg %p276
      $region66: #{tpu_custom_call.1} parent=63 // pred_check_branch
        %2765 = sbr.rel (%p2763) target = $region68
      $region67: #{tpu_custom_call.1} parent=63 // pred_region
        _
      $region68: #{tpu_custom_call.1} parent=63 // pred_fallthru
        _
    $region64: #{tpu_custom_call.1} parent=5 // pred_fallthru
      _
    %p2766 = scmp.le.s32.totalorder 2, %s17
    // Predicated region
    $region69: #{tpu_custom_call.1} parent=5 // pred_check
      %p2767 = pneg %p2766
    $region70: #{tpu_custom_call.1} parent=5 // pred_check_branch
      %2769 = sbr.rel (%p2767) target = $region72
    $region71: #{tpu_custom_call.1} parent=5 // pred_region
      %s2770 = ssub.s32 %s17, 2
      // Predicated region
      $region73: #{tpu_custom_call.1} parent=71 // pred_check
        %p2771 = pneg %p282
      $region74: #{tpu_custom_call.1} parent=71 // pred_check_branch
        %2773 = sbr.rel (%p2771) target = $region76
      $region75: #{tpu_custom_call.1} parent=71 // pred_region
        %p2774 = scmp.lt.s32.totalorder %s23, 1
        %s2775 = scalar_select %p2774, %s23, 1
        %s2776 = smul.addr %s2775, 8
        %s2777 = scalar_lea.vmem %s11, %s2776
      $region76: #{tpu_custom_call.1} parent=71 // pred_fallthru
        _
    $region72: #{tpu_custom_call.1} parent=5 // pred_fallthru
      _
  $region6: #{tpu_custom_call.1} parent=0 // loop_footer
    %s21 = sadd.s32 1, %s17
  $region7: #{tpu_custom_call.1} parent=0 // loop_footer_branch
    %16 = sbr.rel target = $region3
  $region8: #{tpu_custom_call.1} parent=0 // loop_exit
    _

</llo_original>
